<compile_context>
chip_gen: v7x
topology: tpu7x:2x2x1
jax: 0.10.0
libtpu: 0.0.40
codegen_flags: <defaults>
</compile_context>

<pallas_src>
import math

import numpy as np

import jax
import jax.numpy as jnp
from jax.experimental import pallas as pl
from jax.experimental.pallas import tpu as pltpu

# ----------------------------------------------------------------------------
# Model constants (same synthetic YOLOv5-style net as the reference version)
# ----------------------------------------------------------------------------
NA = 3            # anchors per scale
NC = 2            # classes
NO = NC + 5       # outputs per anchor
STRIDE = 8.0      # decode stride
ANCHORS = jnp.asarray([[10.0, 13.0], [16.0, 30.0], [33.0, 23.0]], dtype=jnp.float32)

IMG = 32          # input spatial size used throughout (32 -> 16 -> 8 -> 4)


def _init_conv(key, kh, kw, cin, cout):
    k1, k2 = jax.random.split(key)
    fan_in = kh * kw * cin
    w = jax.random.normal(k1, (kh, kw, cin, cout), jnp.float32) / math.sqrt(fan_in)
    b = 0.01 * jax.random.normal(k2, (cout,), jnp.float32)
    return w, b


def init_params(key):
    keys = jax.random.split(key, 6)
    return {
        "conv1": _init_conv(keys[0], 3, 3, 3, 8),      # P1: 3->8,  k3 s2
        "conv2": _init_conv(keys[1], 3, 3, 8, 16),     # P2: 8->16, k3 s2
        "c3_cv1": _init_conv(keys[2], 1, 1, 16, 16),   # bottleneck 1x1
        "c3_cv2": _init_conv(keys[3], 3, 3, 16, 16),   # bottleneck 3x3
        "conv3": _init_conv(keys[4], 3, 3, 16, 32),    # P3: 16->32, k3 s2
        "detect": _init_conv(keys[5], 1, 1, 32, NA * NO),  # detect head 1x1
    }

# TODO(synk): checkpoint loading (attempt_download / attempt_load of yolov5s.pt)
# and torch.from_numpy plumbing have no Pallas equivalent; weights are synthetic.


# ----------------------------------------------------------------------------
# Weight preprocessing: fold each conv into coarse-row banded MXU matrices.
# Layout of every feature map inside the kernel:
#   rows  = 4 coarse H rows (Hc = 4 at every depth)
#   lanes = (y_fine * W + x) * C + c        with F = H / 4 fine rows per coarse
# A k x k / stride-s conv then becomes   out_row[yc] = sum_d in_row[yc+d] @ B[d]
# with d in {-1,0[,1]}; zero-padding in H is a zero coarse row, padding in W is
# baked into the band.  This is done ONCE on the host (like torch's BN fusing).
# ----------------------------------------------------------------------------
def prepare_params(params):
    def band(w, stride, f_in, w_in, f_out, w_out, co_pad=None):
        w = np.asarray(jax.device_get(w), np.float32)
        kh, kw, ci, co = w.shape
        if co_pad is not None and co_pad > co:
            w = np.concatenate(
                [w, np.zeros((kh, kw, ci, co_pad - co), np.float32)], axis=-1)
            co = co_pad
        pad = kh // 2
        d_all = [(stride * yf + dy - pad) // f_in
                 for yf in range(f_out) for dy in range(kh)]
        d_min, d_max = min(d_all), max(d_all)
        nd = d_max - d_min + 1
        k_dim = f_in * w_in * ci
        n_dim = f_out * w_out * co
        bands = np.zeros((nd, k_dim, n_dim), np.float32)
        for yf_o in range(f_out):
            for dy in range(kh):
                yg = stride * yf_o + dy - pad
                d = yg // f_in                       # coarse-row tap (floor div)
                yf_i = yg - d * f_in                 # fine row inside that tap
                for xo in range(w_out):
                    for dx in range(kw):
                        xi = stride * xo + dx - pad
                        if 0 <= xi < w_in:           # W zero-pad baked in
                            r0 = (yf_i * w_in + xi) * ci
                            c0 = (yf_o * w_out + xo) * co
                            bands[d - d_min, r0:r0 + ci, c0:c0 + co] = w[dy, dx]
        return jnp.asarray(bands, jnp.bfloat16)

    def bias_row(bias, reps, co_pad=None):
        bias = np.asarray(jax.device_get(bias), np.float32)
        if co_pad is not None and co_pad > bias.shape[0]:
            bias = np.concatenate([bias, np.zeros(co_pad - bias.shape[0], np.float32)])
        return jnp.asarray(np.tile(bias, reps)[None, :], jnp.float32)

    # Detect-decode constants, one value per output lane (lane = x*32 + a*NO + o)
    dsq = np.zeros((1, 128), np.float32)     # coeff of sigmoid^2  (wh path)
    dlin = np.zeros((1, 128), np.float32)    # coeff of sigmoid    (xy / obj / cls)
    doff = np.zeros((4, 128), np.float32)    # additive term (grid), rows = grid y
    anc = np.asarray(jax.device_get(ANCHORS), np.float32)
    for lane in range(128):
        gx, rem = divmod(lane, 32)
        if rem >= NA * NO:                   # padded channels -> all-zero decode
            continue
        a, o = divmod(rem, NO)
        if o == 0:                           # x = p*2*stride + (gx - 0.5)*stride
            dlin[0, lane] = 2.0 * STRIDE
            doff[:, lane] = (gx - 0.5) * STRIDE
        elif o == 1:                         # y = p*2*stride + (gy - 0.5)*stride
            dlin[0, lane] = 2.0 * STRIDE
            doff[:, lane] = (np.arange(4, dtype=np.float32) - 0.5) * STRIDE
        elif o == 2:                         # w = (p*2)^2 * anchor_w
            dsq[0, lane] = 4.0 * anc[a, 0]
        elif o == 3:                         # h = (p*2)^2 * anchor_h
            dsq[0, lane] = 4.0 * anc[a, 1]
        else:                                # obj / cls: plain sigmoid
            dlin[0, lane] = 1.0

    return dict(
        # (stride, F_in, W_in, F_out, W_out) per layer; F_in = stride * F_out
        w1=band(params["conv1"][0], 2, 8, 32, 4, 16),   # (2, 768, 512)
        b1=bias_row(params["conv1"][1], 4 * 16),        # (1, 512)
        w2=band(params["conv2"][0], 2, 4, 16, 2, 8),    # (2, 512, 256)
        b2=bias_row(params["conv2"][1], 2 * 8),         # (1, 256)
        w3=band(params["c3_cv1"][0], 1, 2, 8, 2, 8),    # (1, 256, 256)
        b3=bias_row(params["c3_cv1"][1], 2 * 8),
        w4=band(params["c3_cv2"][0], 1, 2, 8, 2, 8),    # (3, 256, 256)
        b4=bias_row(params["c3_cv2"][1], 2 * 8),
        w5=band(params["conv3"][0], 2, 2, 8, 1, 4),     # (2, 256, 128)
        b5=bias_row(params["conv3"][1], 1 * 4),         # (1, 128)
        w6=band(params["detect"][0], 1, 1, 4, 1, 4, co_pad=32),  # (1, 128, 128)
        b6=bias_row(params["detect"][1], 1 * 4, co_pad=32),      # (1, 128)
        dsq=jnp.asarray(dsq), dlin=jnp.asarray(dlin), doff=jnp.asarray(doff),
    )


# ----------------------------------------------------------------------------
# The fused kernel: whole forward pass for one image per grid step.
# ----------------------------------------------------------------------------
def _yolo_fused_kernel(
    x0_ref,                                    # (5, 768)  padded image, f32
    w1_ref, b1_ref, w2_ref, b2_ref, w3_ref, b3_ref,
    w4_ref, b4_ref, w5_ref, b5_ref, w6_ref, b6_ref,
    dsq_ref, dlin_ref, doff_ref,
    out_ref,                                   # (4, 128)  decoded predictions
    p1_ref, p3_ref, p4_ref,                    # staging scratch (f32, zero-padded)
):
    bf16 = jnp.bfloat16

    def mm(lhs, w_ref, i):
        # MXU matmul: bf16 operands, f32 accumulation.
        return jnp.dot(lhs.astype(bf16), w_ref[i],
                       preferred_element_type=jnp.float32)

    def silu(v):
        return v * jax.nn.sigmoid(v)

    # ---- conv1: 3x3 stride-2 (image -> P1): two coarse-row banded matmuls
    acc = mm(x0_ref[pl.ds(0, 4), :], w1_ref, 0)
    acc += mm(x0_ref[pl.ds(1, 4), :], w1_ref, 1)
    a1 = silu(acc + b1_ref[...])                       # (4, 512)

    p1_ref[...] = jnp.zeros_like(p1_ref)               # zero coarse-row padding
    p1_ref[pl.ds(1, 4), :] = a1

    # ---- conv2: 3x3 stride-2 (P1 -> P2)
    acc = mm(p1_ref[pl.ds(0, 4), :], w2_ref, 0)
    acc += mm(p1_ref[pl.ds(1, 4), :], w2_ref, 1)
    a2 = silu(acc + b2_ref[...])                       # (4, 256), kept for residual

    # ---- C3 bottleneck cv1: 1x1
    a3 = silu(mm(a2, w3_ref, 0) + b3_ref[...])         # (4, 256)

    p3_ref[...] = jnp.zeros_like(p3_ref)
    p3_ref[pl.ds(1, 4), :] = a3

    # ---- C3 bottleneck cv2: 3x3 stride-1, residual add fused in-kernel
    acc = mm(p3_ref[pl.ds(0, 4), :], w4_ref, 0)
    acc += mm(p3_ref[pl.ds(1, 4), :], w4_ref, 1)
    acc += mm(p3_ref[pl.ds(2, 4), :], w4_ref, 2)
    a4 = a2 + silu(acc + b4_ref[...])                  # (4, 256)

    p4_ref[...] = jnp.zeros_like(p4_ref)
    p4_ref[pl.ds(1, 4), :] = a4

    # ---- conv3: 3x3 stride-2 (-> detect resolution)
    acc = mm(p4_ref[pl.ds(0, 4), :], w5_ref, 0)
    acc += mm(p4_ref[pl.ds(1, 4), :], w5_ref, 1)
    a5 = silu(acc + b5_ref[...])                       # (4, 128)

    # ---- Detect head: 1x1 conv + sigmoid + grid/anchor decode, all fused
    p = jax.nn.sigmoid(mm(a5, w6_ref, 0) + b6_ref[...])     # (4, 128)
    out_ref[...] = p * p * dsq_ref[...] + p * dlin_ref[...] + doff_ref[...]


# ----------------------------------------------------------------------------
# Forward wrapper (jittable): layout prep -> one pallas_call -> output reorder
# ----------------------------------------------------------------------------
def yolov5_forward(im_nchw, prep):
    """im: (b, 3, 32, 32) float32 -> decoded predictions (b, na*ny*nx, NO)."""
    b = im_nchw.shape[0]
    # NCHW -> NHWC -> (b, Hc=4, F*W*C = 8*32*3 = 768), plus one zero coarse row
    x = jnp.transpose(im_nchw, (0, 2, 3, 1)).reshape(b, 4, 8 * IMG * 3)
    x = jnp.pad(x, ((0, 0), (1, 0), (0, 0)))           # (b, 5, 768)

    full3 = lambda shape: pl.BlockSpec(shape, lambda n: (0, 0, 0))
    full2 = lambda shape: pl.BlockSpec(shape, lambda n: (0, 0))

    raw = pl.pallas_call(
        _yolo_fused_kernel,
        out_shape=jax.ShapeDtypeStruct((b, 4, 128), jnp.float32),
        grid=(b,),
        in_specs=[
            pl.BlockSpec((None, 5, 768), lambda n: (n, 0, 0)),   # image (per step)
            full3((2, 768, 512)), full2((1, 512)),               # conv1
            full3((2, 512, 256)), full2((1, 256)),               # conv2
            full3((1, 256, 256)), full2((1, 256)),               # c3_cv1
            full3((3, 256, 256)), full2((1, 256)),               # c3_cv2
            full3((2, 256, 128)), full2((1, 128)),               # conv3
            full3((1, 128, 128)), full2((1, 128)),               # detect
            full2((1, 128)), full2((1, 128)), full2((4, 128)),   # decode consts
        ],
        out_specs=pl.BlockSpec((None, 4, 128), lambda n: (n, 0, 0)),
        scratch_shapes=[
            pltpu.VMEM((5, 512), jnp.float32),   # P1, coarse-row zero-padded
            pltpu.VMEM((6, 256), jnp.float32),   # c3_cv1 out, padded both sides
            pltpu.VMEM((5, 256), jnp.float32),   # residual out, top-padded
        ],
        compiler_params=pltpu.CompilerParams(
            dimension_semantics=("parallel",),            # batch across TCs (v7x)
            vmem_limit_bytes=32 * 1024 * 1024,            # budget ~6 MB used
        ),
    )(
        x,
        prep["w1"], prep["b1"], prep["w2"], prep["b2"],
        prep["w3"], prep["b3"], prep["w4"], prep["b4"],
        prep["w5"], prep["b5"], prep["w6"], prep["b6"],
        prep["dsq"], prep["dlin"], prep["doff"],
    )

    # kernel output: rows = grid y, lanes = x*32 + (a*NO + o); reorder exactly
    # like the reference Detect head -> (b, na*ny*nx, NO)
    ny = nx = 4
    p = raw.reshape(b, ny, nx, 32)[..., : NA * NO]
    p = p.reshape(b, ny, nx, NA, NO)
    p = jnp.transpose(p, (0, 3, 1, 2, 4))
    return p.reshape(b, NA * ny * nx, NO)


if __name__ == "__main__":
    key = jax.random.PRNGKey(0)
    k_params, k_im = jax.random.split(key)
    params = init_params(k_params)
    prep = prepare_params(params)          # one-time weight folding (host side)

    # small input consistent with the module: b=2, ch=3, 32x32 image (NCHW)
    im = jax.random.normal(k_im, (2, 3, IMG, IMG), jnp.float32)

    preds = jax.jit(yolov5_forward)(im, prep)
    preds = jax.block_until_ready(preds)

    assert preds.shape == (2, NA * 4 * 4, NO), preds.shape
    assert bool(jnp.all(jnp.isfinite(preds)))
    print("KERNEL_OK")
</pallas_src>

<mosaic_0001>
module attributes {stable_mosaic.version = 11 : i64} {
  func.func @_yolo_fused_kernel(%arg0: i32, %arg1: memref<1x5x768xf32, #tpu.memory_space<vmem>>, %arg2: memref<2x768x512xbf16, #tpu.memory_space<vmem>>, %arg3: memref<1x512xf32, #tpu.memory_space<vmem>>, %arg4: memref<2x512x256xbf16, #tpu.memory_space<vmem>>, %arg5: memref<1x256xf32, #tpu.memory_space<vmem>>, %arg6: memref<1x256x256xbf16, #tpu.memory_space<vmem>>, %arg7: memref<1x256xf32, #tpu.memory_space<vmem>>, %arg8: memref<3x256x256xbf16, #tpu.memory_space<vmem>>, %arg9: memref<1x256xf32, #tpu.memory_space<vmem>>, %arg10: memref<2x256x128xbf16, #tpu.memory_space<vmem>>, %arg11: memref<1x128xf32, #tpu.memory_space<vmem>>, %arg12: memref<1x128x128xbf16, #tpu.memory_space<vmem>>, %arg13: memref<1x128xf32, #tpu.memory_space<vmem>>, %arg14: memref<1x128xf32, #tpu.memory_space<vmem>>, %arg15: memref<1x128xf32, #tpu.memory_space<vmem>>, %arg16: memref<4x128xf32, #tpu.memory_space<vmem>>, %arg17: memref<1x4x128xf32, #tpu.memory_space<vmem>>, %arg18: memref<5x512xf32, #tpu.memory_space<vmem>>, %arg19: memref<6x256xf32, #tpu.memory_space<vmem>>, %arg20: memref<5x256xf32, #tpu.memory_space<vmem>>) attributes {dimension_semantics = [#tpu.dimension_semantics<parallel>], iteration_bounds = array<i64: 2>, scalar_prefetch = 0 : i64, scratch_operands = 3 : i64, tpu.core_type = #tpu.core_type<tc>, window_params = [{transform_indices = @transform_0, window_bounds = array<i64: 1, 5, 768>}, {pipeline_mode = #tpu.pipeline_mode<synchronous>, transform_indices = @transform_1, window_bounds = array<i64: 2, 768, 512>}, {pipeline_mode = #tpu.pipeline_mode<synchronous>, transform_indices = @transform_2, window_bounds = array<i64: 1, 512>}, {pipeline_mode = #tpu.pipeline_mode<synchronous>, transform_indices = @transform_3, window_bounds = array<i64: 2, 512, 256>}, {pipeline_mode = #tpu.pipeline_mode<synchronous>, transform_indices = @transform_4, window_bounds = array<i64: 1, 256>}, {pipeline_mode = #tpu.pipeline_mode<synchronous>, transform_indices = @transform_5, window_bounds = array<i64: 1, 256, 256>}, {pipeline_mode = #tpu.pipeline_mode<synchronous>, transform_indices = @transform_6, window_bounds = array<i64: 1, 256>}, {pipeline_mode = #tpu.pipeline_mode<synchronous>, transform_indices = @transform_7, window_bounds = array<i64: 3, 256, 256>}, {pipeline_mode = #tpu.pipeline_mode<synchronous>, transform_indices = @transform_8, window_bounds = array<i64: 1, 256>}, {pipeline_mode = #tpu.pipeline_mode<synchronous>, transform_indices = @transform_9, window_bounds = array<i64: 2, 256, 128>}, {pipeline_mode = #tpu.pipeline_mode<synchronous>, transform_indices = @transform_10, window_bounds = array<i64: 1, 128>}, {pipeline_mode = #tpu.pipeline_mode<synchronous>, transform_indices = @transform_11, window_bounds = array<i64: 1, 128, 128>}, {pipeline_mode = #tpu.pipeline_mode<synchronous>, transform_indices = @transform_12, window_bounds = array<i64: 1, 128>}, {pipeline_mode = #tpu.pipeline_mode<synchronous>, transform_indices = @transform_13, window_bounds = array<i64: 1, 128>}, {pipeline_mode = #tpu.pipeline_mode<synchronous>, transform_indices = @transform_14, window_bounds = array<i64: 1, 128>}, {pipeline_mode = #tpu.pipeline_mode<synchronous>, transform_indices = @transform_15, window_bounds = array<i64: 4, 128>}, {transform_indices = @transform_16, window_bounds = array<i64: 1, 4, 128>}]} {
    %c0 = arith.constant 0 : index
    %c0_0 = arith.constant 0 : index
    %c0_1 = arith.constant 0 : index
    %0 = vector.load %arg1[%c0, %c0_0, %c0_1] : memref<1x5x768xf32, #tpu.memory_space<vmem>>, vector<1x4x768xf32>
    %1 = vector.shape_cast %0 : vector<1x4x768xf32> to vector<4x768xf32>
    %2 = arith.truncf %1 : vector<4x768xf32> to vector<4x768xbf16>
    %c0_2 = arith.constant 0 : index
    %c0_3 = arith.constant 0 : index
    %c0_4 = arith.constant 0 : index
    %3 = vector.load %arg2[%c0_2, %c0_3, %c0_4] : memref<2x768x512xbf16, #tpu.memory_space<vmem>>, vector<1x768x512xbf16>
    %4 = vector.shape_cast %3 : vector<1x768x512xbf16> to vector<768x512xbf16>
    %cst = arith.constant dense<0.000000e+00> : vector<4x512xf32>
    %5 = tpu.matmul %2, %4, %cst {dimension_numbers = #tpu.dot_dimension_numbers<[1], [0], [0], [1], [0, 0, 1, 1], [], []>} : vector<4x768xbf16>, vector<768x512xbf16>, vector<4x512xf32> -> vector<4x512xf32>
    %c0_5 = arith.constant 0 : index
    %c1 = arith.constant 1 : index
    %c0_6 = arith.constant 0 : index
    %6 = vector.load %arg1[%c0_5, %c1, %c0_6] : memref<1x5x768xf32, #tpu.memory_space<vmem>>, vector<1x4x768xf32>
    %7 = vector.shape_cast %6 : vector<1x4x768xf32> to vector<4x768xf32>
    %8 = arith.truncf %7 : vector<4x768xf32> to vector<4x768xbf16>
    %c1_7 = arith.constant 1 : index
    %c0_8 = arith.constant 0 : index
    %c0_9 = arith.constant 0 : index
    %9 = vector.load %arg2[%c1_7, %c0_8, %c0_9] : memref<2x768x512xbf16, #tpu.memory_space<vmem>>, vector<1x768x512xbf16>
    %10 = vector.shape_cast %9 : vector<1x768x512xbf16> to vector<768x512xbf16>
    %cst_10 = arith.constant dense<0.000000e+00> : vector<4x512xf32>
    %11 = tpu.matmul %8, %10, %cst_10 {dimension_numbers = #tpu.dot_dimension_numbers<[1], [0], [0], [1], [0, 0, 1, 1], [], []>} : vector<4x768xbf16>, vector<768x512xbf16>, vector<4x512xf32> -> vector<4x512xf32>
    %12 = arith.addf %5, %11 : vector<4x512xf32>
    %c0_11 = arith.constant 0 : index
    %c0_12 = arith.constant 0 : index
    %13 = vector.load %arg3[%c0_11, %c0_12] : memref<1x512xf32, #tpu.memory_space<vmem>>, vector<1x512xf32>
    %14 = vector.broadcast %13 : vector<1x512xf32> to vector<4x512xf32>
    %15 = arith.addf %12, %14 : vector<4x512xf32>
    %16 = arith.negf %15 : vector<4x512xf32>
    %17 = math.exp %16 : vector<4x512xf32>
    %cst_13 = arith.constant 1.000000e+00 : f32
    %18 = vector.broadcast %cst_13 : f32 to vector<4x512xf32>
    %19 = arith.addf %18, %17 : vector<4x512xf32>
    %20 = arith.divf %18, %19 : vector<4x512xf32>
    %21 = arith.mulf %15, %20 : vector<4x512xf32>
    %cst_14 = arith.constant 0.000000e+00 : f32
    %22 = vector.broadcast %cst_14 : f32 to vector<5x512xf32>
    %c0_15 = arith.constant 0 : index
    %c0_16 = arith.constant 0 : index
    %23 = vector.load %arg18[%c0_15, %c0_16] : memref<5x512xf32, #tpu.memory_space<vmem>>, vector<5x512xf32>
    tpu.vector_store %arg18[%c0_15, %c0_16], %22 {strides = array<i32>} : memref<5x512xf32, #tpu.memory_space<vmem>>, vector<5x512xf32>,
    %c1_17 = arith.constant 1 : index
    %c0_18 = arith.constant 0 : index
    %24 = vector.load %arg18[%c1_17, %c0_18] : memref<5x512xf32, #tpu.memory_space<vmem>>, vector<4x512xf32>
    tpu.vector_store %arg18[%c1_17, %c0_18], %21 {strides = array<i32>} : memref<5x512xf32, #tpu.memory_space<vmem>>, vector<4x512xf32>,
    %c0_19 = arith.constant 0 : index
    %c0_20 = arith.constant 0 : index
    %25 = vector.load %arg18[%c0_19, %c0_20] : memref<5x512xf32, #tpu.memory_space<vmem>>, vector<4x512xf32>
    %26 = arith.truncf %25 : vector<4x512xf32> to vector<4x512xbf16>
    %c0_21 = arith.constant 0 : index
    %c0_22 = arith.constant 0 : index
    %c0_23 = arith.constant 0 : index
    %27 = vector.load %arg4[%c0_21, %c0_22, %c0_23] : memref<2x512x256xbf16, #tpu.memory_space<vmem>>, vector<1x512x256xbf16>
    %28 = vector.shape_cast %27 : vector<1x512x256xbf16> to vector<512x256xbf16>
    %cst_24 = arith.constant dense<0.000000e+00> : vector<4x256xf32>
    %29 = tpu.matmul %26, %28, %cst_24 {dimension_numbers = #tpu.dot_dimension_numbers<[1], [0], [0], [1], [0, 0, 1, 1], [], []>} : vector<4x512xbf16>, vector<512x256xbf16>, vector<4x256xf32> -> vector<4x256xf32>
    %c1_25 = arith.constant 1 : index
    %c0_26 = arith.constant 0 : index
    %30 = vector.load %arg18[%c1_25, %c0_26] : memref<5x512xf32, #tpu.memory_space<vmem>>, vector<4x512xf32>
    %31 = arith.truncf %30 : vector<4x512xf32> to vector<4x512xbf16>
    %c1_27 = arith.constant 1 : index
    %c0_28 = arith.constant 0 : index
    %c0_29 = arith.constant 0 : index
    %32 = vector.load %arg4[%c1_27, %c0_28, %c0_29] : memref<2x512x256xbf16, #tpu.memory_space<vmem>>, vector<1x512x256xbf16>
    %33 = vector.shape_cast %32 : vector<1x512x256xbf16> to vector<512x256xbf16>
    %cst_30 = arith.constant dense<0.000000e+00> : vector<4x256xf32>
    %34 = tpu.matmul %31, %33, %cst_30 {dimension_numbers = #tpu.dot_dimension_numbers<[1], [0], [0], [1], [0, 0, 1, 1], [], []>} : vector<4x512xbf16>, vector<512x256xbf16>, vector<4x256xf32> -> vector<4x256xf32>
    %35 = arith.addf %29, %34 : vector<4x256xf32>
    %c0_31 = arith.constant 0 : index
    %c0_32 = arith.constant 0 : index
    %36 = vector.load %arg5[%c0_31, %c0_32] : memref<1x256xf32, #tpu.memory_space<vmem>>, vector<1x256xf32>
    %37 = vector.broadcast %36 : vector<1x256xf32> to vector<4x256xf32>
    %38 = arith.addf %35, %37 : vector<4x256xf32>
    %39 = arith.negf %38 : vector<4x256xf32>
    %40 = math.exp %39 : vector<4x256xf32>
    %cst_33 = arith.constant 1.000000e+00 : f32
    %41 = vector.broadcast %cst_33 : f32 to vector<4x256xf32>
    %42 = arith.addf %41, %40 : vector<4x256xf32>
    %43 = arith.divf %41, %42 : vector<4x256xf32>
    %44 = arith.mulf %38, %43 : vector<4x256xf32>
    %45 = arith.truncf %44 : vector<4x256xf32> to vector<4x256xbf16>
    %c0_34 = arith.constant 0 : index
    %c0_35 = arith.constant 0 : index
    %c0_36 = arith.constant 0 : index
    %46 = vector.load %arg6[%c0_34, %c0_35, %c0_36] : memref<1x256x256xbf16, #tpu.memory_space<vmem>>, vector<1x256x256xbf16>
    %47 = vector.shape_cast %46 : vector<1x256x256xbf16> to vector<256x256xbf16>
    %cst_37 = arith.constant dense<0.000000e+00> : vector<4x256xf32>
    %48 = tpu.matmul %45, %47, %cst_37 {dimension_numbers = #tpu.dot_dimension_numbers<[1], [0], [0], [1], [0, 0, 1, 1], [], []>} : vector<4x256xbf16>, vector<256x256xbf16>, vector<4x256xf32> -> vector<4x256xf32>
    %c0_38 = arith.constant 0 : index
    %c0_39 = arith.constant 0 : index
    %49 = vector.load %arg7[%c0_38, %c0_39] : memref<1x256xf32, #tpu.memory_space<vmem>>, vector<1x256xf32>
    %50 = vector.broadcast %49 : vector<1x256xf32> to vector<4x256xf32>
    %51 = arith.addf %48, %50 : vector<4x256xf32>
    %52 = arith.negf %51 : vector<4x256xf32>
    %53 = math.exp %52 : vector<4x256xf32>
    %cst_40 = arith.constant 1.000000e+00 : f32
    %54 = vector.broadcast %cst_40 : f32 to vector<4x256xf32>
    %55 = arith.addf %54, %53 : vector<4x256xf32>
    %56 = arith.divf %54, %55 : vector<4x256xf32>
    %57 = arith.mulf %51, %56 : vector<4x256xf32>
    %cst_41 = arith.constant 0.000000e+00 : f32
    %58 = vector.broadcast %cst_41 : f32 to vector<6x256xf32>
    %c0_42 = arith.constant 0 : index
    %c0_43 = arith.constant 0 : index
    %59 = vector.load %arg19[%c0_42, %c0_43] : memref<6x256xf32, #tpu.memory_space<vmem>>, vector<6x256xf32>
    tpu.vector_store %arg19[%c0_42, %c0_43], %58 {strides = array<i32>} : memref<6x256xf32, #tpu.memory_space<vmem>>, vector<6x256xf32>,
    %c1_44 = arith.constant 1 : index
    %c0_45 = arith.constant 0 : index
    %60 = vector.load %arg19[%c1_44, %c0_45] : memref<6x256xf32, #tpu.memory_space<vmem>>, vector<4x256xf32>
    tpu.vector_store %arg19[%c1_44, %c0_45], %57 {strides = array<i32>} : memref<6x256xf32, #tpu.memory_space<vmem>>, vector<4x256xf32>,
    %c0_46 = arith.constant 0 : index
    %c0_47 = arith.constant 0 : index
    %61 = vector.load %arg19[%c0_46, %c0_47] : memref<6x256xf32, #tpu.memory_space<vmem>>, vector<4x256xf32>
    %62 = arith.truncf %61 : vector<4x256xf32> to vector<4x256xbf16>
    %c0_48 = arith.constant 0 : index
    %c0_49 = arith.constant 0 : index
    %c0_50 = arith.constant 0 : index
    %63 = vector.load %arg8[%c0_48, %c0_49, %c0_50] : memref<3x256x256xbf16, #tpu.memory_space<vmem>>, vector<1x256x256xbf16>
    %64 = vector.shape_cast %63 : vector<1x256x256xbf16> to vector<256x256xbf16>
    %cst_51 = arith.constant dense<0.000000e+00> : vector<4x256xf32>
    %65 = tpu.matmul %62, %64, %cst_51 {dimension_numbers = #tpu.dot_dimension_numbers<[1], [0], [0], [1], [0, 0, 1, 1], [], []>} : vector<4x256xbf16>, vector<256x256xbf16>, vector<4x256xf32> -> vector<4x256xf32>
    %c1_52 = arith.constant 1 : index
    %c0_53 = arith.constant 0 : index
    %66 = vector.load %arg19[%c1_52, %c0_53] : memref<6x256xf32, #tpu.memory_space<vmem>>, vector<4x256xf32>
    %67 = arith.truncf %66 : vector<4x256xf32> to vector<4x256xbf16>
    %c1_54 = arith.constant 1 : index
    %c0_55 = arith.constant 0 : index
    %c0_56 = arith.constant 0 : index
    %68 = vector.load %arg8[%c1_54, %c0_55, %c0_56] : memref<3x256x256xbf16, #tpu.memory_space<vmem>>, vector<1x256x256xbf16>
    %69 = vector.shape_cast %68 : vector<1x256x256xbf16> to vector<256x256xbf16>
    %cst_57 = arith.constant dense<0.000000e+00> : vector<4x256xf32>
    %70 = tpu.matmul %67, %69, %cst_57 {dimension_numbers = #tpu.dot_dimension_numbers<[1], [0], [0], [1], [0, 0, 1, 1], [], []>} : vector<4x256xbf16>, vector<256x256xbf16>, vector<4x256xf32> -> vector<4x256xf32>
    %71 = arith.addf %65, %70 : vector<4x256xf32>
    %c2 = arith.constant 2 : index
    %c0_58 = arith.constant 0 : index
    %72 = vector.load %arg19[%c2, %c0_58] : memref<6x256xf32, #tpu.memory_space<vmem>>, vector<4x256xf32>
    %73 = arith.truncf %72 : vector<4x256xf32> to vector<4x256xbf16>
    %c2_59 = arith.constant 2 : index
    %c0_60 = arith.constant 0 : index
    %c0_61 = arith.constant 0 : index
    %74 = vector.load %arg8[%c2_59, %c0_60, %c0_61] : memref<3x256x256xbf16, #tpu.memory_space<vmem>>, vector<1x256x256xbf16>
    %75 = vector.shape_cast %74 : vector<1x256x256xbf16> to vector<256x256xbf16>
    %cst_62 = arith.constant dense<0.000000e+00> : vector<4x256xf32>
    %76 = tpu.matmul %73, %75, %cst_62 {dimension_numbers = #tpu.dot_dimension_numbers<[1], [0], [0], [1], [0, 0, 1, 1], [], []>} : vector<4x256xbf16>, vector<256x256xbf16>, vector<4x256xf32> -> vector<4x256xf32>
    %77 = arith.addf %71, %76 : vector<4x256xf32>
    %c0_63 = arith.constant 0 : index
    %c0_64 = arith.constant 0 : index
    %78 = vector.load %arg9[%c0_63, %c0_64] : memref<1x256xf32, #tpu.memory_space<vmem>>, vector<1x256xf32>
    %79 = vector.broadcast %78 : vector<1x256xf32> to vector<4x256xf32>
    %80 = arith.addf %77, %79 : vector<4x256xf32>
    %81 = arith.negf %80 : vector<4x256xf32>
    %82 = math.exp %81 : vector<4x256xf32>
    %cst_65 = arith.constant 1.000000e+00 : f32
    %83 = vector.broadcast %cst_65 : f32 to vector<4x256xf32>
    %84 = arith.addf %83, %82 : vector<4x256xf32>
    %85 = arith.divf %83, %84 : vector<4x256xf32>
    %86 = arith.mulf %80, %85 : vector<4x256xf32>
    %87 = arith.addf %44, %86 : vector<4x256xf32>
    %cst_66 = arith.constant 0.000000e+00 : f32
    %88 = vector.broadcast %cst_66 : f32 to vector<5x256xf32>
    %c0_67 = arith.constant 0 : index
    %c0_68 = arith.constant 0 : index
    %89 = vector.load %arg20[%c0_67, %c0_68] : memref<5x256xf32, #tpu.memory_space<vmem>>, vector<5x256xf32>
    tpu.vector_store %arg20[%c0_67, %c0_68], %88 {strides = array<i32>} : memref<5x256xf32, #tpu.memory_space<vmem>>, vector<5x256xf32>,
    %c1_69 = arith.constant 1 : index
    %c0_70 = arith.constant 0 : index
    %90 = vector.load %arg20[%c1_69, %c0_70] : memref<5x256xf32, #tpu.memory_space<vmem>>, vector<4x256xf32>
    tpu.vector_store %arg20[%c1_69, %c0_70], %87 {strides = array<i32>} : memref<5x256xf32, #tpu.memory_space<vmem>>, vector<4x256xf32>,
    %c0_71 = arith.constant 0 : index
    %c0_72 = arith.constant 0 : index
    %91 = vector.load %arg20[%c0_71, %c0_72] : memref<5x256xf32, #tpu.memory_space<vmem>>, vector<4x256xf32>
    %92 = arith.truncf %91 : vector<4x256xf32> to vector<4x256xbf16>
    %c0_73 = arith.constant 0 : index
    %c0_74 = arith.constant 0 : index
    %c0_75 = arith.constant 0 : index
    %93 = vector.load %arg10[%c0_73, %c0_74, %c0_75] : memref<2x256x128xbf16, #tpu.memory_space<vmem>>, vector<1x256x128xbf16>
    %94 = vector.shape_cast %93 : vector<1x256x128xbf16> to vector<256x128xbf16>
    %cst_76 = arith.constant dense<0.000000e+00> : vector<4x128xf32>
    %95 = tpu.matmul %92, %94, %cst_76 {dimension_numbers = #tpu.dot_dimension_numbers<[1], [0], [0], [1], [0, 0, 1, 1], [], []>} : vector<4x256xbf16>, vector<256x128xbf16>, vector<4x128xf32> -> vector<4x128xf32>
    %c1_77 = arith.constant 1 : index
    %c0_78 = arith.constant 0 : index
    %96 = vector.load %arg20[%c1_77, %c0_78] : memref<5x256xf32, #tpu.memory_space<vmem>>, vector<4x256xf32>
    %97 = arith.truncf %96 : vector<4x256xf32> to vector<4x256xbf16>
    %c1_79 = arith.constant 1 : index
    %c0_80 = arith.constant 0 : index
    %c0_81 = arith.constant 0 : index
    %98 = vector.load %arg10[%c1_79, %c0_80, %c0_81] : memref<2x256x128xbf16, #tpu.memory_space<vmem>>, vector<1x256x128xbf16>
    %99 = vector.shape_cast %98 : vector<1x256x128xbf16> to vector<256x128xbf16>
    %cst_82 = arith.constant dense<0.000000e+00> : vector<4x128xf32>
    %100 = tpu.matmul %97, %99, %cst_82 {dimension_numbers = #tpu.dot_dimension_numbers<[1], [0], [0], [1], [0, 0, 1, 1], [], []>} : vector<4x256xbf16>, vector<256x128xbf16>, vector<4x128xf32> -> vector<4x128xf32>
    %101 = arith.addf %95, %100 : vector<4x128xf32>
    %c0_83 = arith.constant 0 : index
    %c0_84 = arith.constant 0 : index
    %102 = vector.load %arg11[%c0_83, %c0_84] : memref<1x128xf32, #tpu.memory_space<vmem>>, vector<1x128xf32>
    %103 = vector.broadcast %102 : vector<1x128xf32> to vector<4x128xf32>
    %104 = arith.addf %101, %103 : vector<4x128xf32>
    %105 = arith.negf %104 : vector<4x128xf32>
    %106 = math.exp %105 : vector<4x128xf32>
    %cst_85 = arith.constant 1.000000e+00 : f32
    %107 = vector.broadcast %cst_85 : f32 to vector<4x128xf32>
    %108 = arith.addf %107, %106 : vector<4x128xf32>
    %109 = arith.divf %107, %108 : vector<4x128xf32>
    %110 = arith.mulf %104, %109 : vector<4x128xf32>
    %111 = arith.truncf %110 : vector<4x128xf32> to vector<4x128xbf16>
    %c0_86 = arith.constant 0 : index
    %c0_87 = arith.constant 0 : index
    %c0_88 = arith.constant 0 : index
    %112 = vector.load %arg12[%c0_86, %c0_87, %c0_88] : memref<1x128x128xbf16, #tpu.memory_space<vmem>>, vector<1x128x128xbf16>
    %113 = vector.shape_cast %112 : vector<1x128x128xbf16> to vector<128x128xbf16>
    %cst_89 = arith.constant dense<0.000000e+00> : vector<4x128xf32>
    %114 = tpu.matmul %111, %113, %cst_89 {dimension_numbers = #tpu.dot_dimension_numbers<[1], [0], [0], [1], [0, 0, 1, 1], [], []>} : vector<4x128xbf16>, vector<128x128xbf16>, vector<4x128xf32> -> vector<4x128xf32>
    %c0_90 = arith.constant 0 : index
    %c0_91 = arith.constant 0 : index
    %115 = vector.load %arg13[%c0_90, %c0_91] : memref<1x128xf32, #tpu.memory_space<vmem>>, vector<1x128xf32>
    %116 = vector.broadcast %115 : vector<1x128xf32> to vector<4x128xf32>
    %117 = arith.addf %114, %116 : vector<4x128xf32>
    %118 = arith.negf %117 : vector<4x128xf32>
    %119 = math.exp %118 : vector<4x128xf32>
    %cst_92 = arith.constant 1.000000e+00 : f32
    %120 = vector.broadcast %cst_92 : f32 to vector<4x128xf32>
    %121 = arith.addf %120, %119 : vector<4x128xf32>
    %122 = arith.divf %120, %121 : vector<4x128xf32>
    %123 = arith.mulf %122, %122 : vector<4x128xf32>
    %c0_93 = arith.constant 0 : index
    %c0_94 = arith.constant 0 : index
    %124 = vector.load %arg14[%c0_93, %c0_94] : memref<1x128xf32, #tpu.memory_space<vmem>>, vector<1x128xf32>
    %125 = vector.broadcast %124 : vector<1x128xf32> to vector<4x128xf32>
    %126 = arith.mulf %123, %125 : vector<4x128xf32>
    %c0_95 = arith.constant 0 : index
    %c0_96 = arith.constant 0 : index
    %127 = vector.load %arg15[%c0_95, %c0_96] : memref<1x128xf32, #tpu.memory_space<vmem>>, vector<1x128xf32>
    %128 = vector.broadcast %127 : vector<1x128xf32> to vector<4x128xf32>
    %129 = arith.mulf %122, %128 : vector<4x128xf32>
    %130 = arith.addf %126, %129 : vector<4x128xf32>
    %c0_97 = arith.constant 0 : index
    %c0_98 = arith.constant 0 : index
    %131 = vector.load %arg16[%c0_97, %c0_98] : memref<4x128xf32, #tpu.memory_space<vmem>>, vector<4x128xf32>
    %132 = arith.addf %130, %131 : vector<4x128xf32>
    %c0_99 = arith.constant 0 : index
    %c0_100 = arith.constant 0 : index
    %c0_101 = arith.constant 0 : index
    %133 = vector.load %arg17[%c0_99, %c0_100, %c0_101] : memref<1x4x128xf32, #tpu.memory_space<vmem>>, vector<1x4x128xf32>
    %134 = vector.shape_cast %133 : vector<1x4x128xf32> to vector<4x128xf32>
    %135 = vector.shape_cast %132 : vector<4x128xf32> to vector<1x4x128xf32>
    tpu.vector_store %arg17[%c0_99, %c0_100, %c0_101], %135 {strides = array<i32>} : memref<1x4x128xf32, #tpu.memory_space<vmem>>, vector<1x4x128xf32>,
    return
  }
  func.func @transform_0(%arg0: i32) -> (i32, i32, i32) {
    %c0_i32 = arith.constant 0 : i32
    %c0_i32_0 = arith.constant 0 : i32
    %c0_i32_1 = arith.constant 0 : i32
    return %arg0, %c0_i32, %c0_i32_0 : i32, i32, i32
  }
  func.func @transform_1(%arg0: i32) -> (i32, i32, i32) {
    %c0_i32 = arith.constant 0 : i32
    %c0_i32_0 = arith.constant 0 : i32
    %c0_i32_1 = arith.constant 0 : i32
    %c0_i32_2 = arith.constant 0 : i32
    return %c0_i32, %c0_i32_0, %c0_i32_1 : i32, i32, i32
  }
  func.func @transform_2(%arg0: i32) -> (i32, i32) {
    %c0_i32 = arith.constant 0 : i32
    %c0_i32_0 = arith.constant 0 : i32
    %c0_i32_1 = arith.constant 0 : i32
    return %c0_i32, %c0_i32_0 : i32, i32
  }
  func.func @transform_3(%arg0: i32) -> (i32, i32, i32) {
    %c0_i32 = arith.constant 0 : i32
    %c0_i32_0 = arith.constant 0 : i32
    %c0_i32_1 = arith.constant 0 : i32
    %c0_i32_2 = arith.constant 0 : i32
    return %c0_i32, %c0_i32_0, %c0_i32_1 : i32, i32, i32
  }
  func.func @transform_4(%arg0: i32) -> (i32, i32) {
    %c0_i32 = arith.constant 0 : i32
    %c0_i32_0 = arith.constant 0 : i32
    %c0_i32_1 = arith.constant 0 : i32
    return %c0_i32, %c0_i32_0 : i32, i32
  }
  func.func @transform_5(%arg0: i32) -> (i32, i32, i32) {
    %c0_i32 = arith.constant 0 : i32
    %c0_i32_0 = arith.constant 0 : i32
    %c0_i32_1 = arith.constant 0 : i32
    %c0_i32_2 = arith.constant 0 : i32
    return %c0_i32, %c0_i32_0, %c0_i32_1 : i32, i32, i32
  }
  func.func @transform_6(%arg0: i32) -> (i32, i32) {
    %c0_i32 = arith.constant 0 : i32
    %c0_i32_0 = arith.constant 0 : i32
    %c0_i32_1 = arith.constant 0 : i32
    return %c0_i32, %c0_i32_0 : i32, i32
  }
  func.func @transform_7(%arg0: i32) -> (i32, i32, i32) {
    %c0_i32 = arith.constant 0 : i32
    %c0_i32_0 = arith.constant 0 : i32
    %c0_i32_1 = arith.constant 0 : i32
    %c0_i32_2 = arith.constant 0 : i32
    return %c0_i32, %c0_i32_0, %c0_i32_1 : i32, i32, i32
  }
  func.func @transform_8(%arg0: i32) -> (i32, i32) {
    %c0_i32 = arith.constant 0 : i32
    %c0_i32_0 = arith.constant 0 : i32
    %c0_i32_1 = arith.constant 0 : i32
    return %c0_i32, %c0_i32_0 : i32, i32
  }
  func.func @transform_9(%arg0: i32) -> (i32, i32, i32) {
    %c0_i32 = arith.constant 0 : i32
    %c0_i32_0 = arith.constant 0 : i32
    %c0_i32_1 = arith.constant 0 : i32
    %c0_i32_2 = arith.constant 0 : i32
    return %c0_i32, %c0_i32_0, %c0_i32_1 : i32, i32, i32
  }
  func.func @transform_10(%arg0: i32) -> (i32, i32) {
    %c0_i32 = arith.constant 0 : i32
    %c0_i32_0 = arith.constant 0 : i32
    %c0_i32_1 = arith.constant 0 : i32
    return %c0_i32, %c0_i32_0 : i32, i32
  }
  func.func @transform_11(%arg0: i32) -> (i32, i32, i32) {
    %c0_i32 = arith.constant 0 : i32
    %c0_i32_0 = arith.constant 0 : i32
    %c0_i32_1 = arith.constant 0 : i32
    %c0_i32_2 = arith.constant 0 : i32
    return %c0_i32, %c0_i32_0, %c0_i32_1 : i32, i32, i32
  }
  func.func @transform_12(%arg0: i32) -> (i32, i32) {
    %c0_i32 = arith.constant 0 : i32
    %c0_i32_0 = arith.constant 0 : i32
    %c0_i32_1 = arith.constant 0 : i32
    return %c0_i32, %c0_i32_0 : i32, i32
  }
  func.func @transform_13(%arg0: i32) -> (i32, i32) {
    %c0_i32 = arith.constant 0 : i32
    %c0_i32_0 = arith.constant 0 : i32
    %c0_i32_1 = arith.constant 0 : i32
    return %c0_i32, %c0_i32_0 : i32, i32
  }
  func.func @transform_14(%arg0: i32) -> (i32, i32) {
    %c0_i32 = arith.constant 0 : i32
    %c0_i32_0 = arith.constant 0 : i32
    %c0_i32_1 = arith.constant 0 : i32
    return %c0_i32, %c0_i32_0 : i32, i32
  }
  func.func @transform_15(%arg0: i32) -> (i32, i32) {
    %c0_i32 = arith.constant 0 : i32
    %c0_i32_0 = arith.constant 0 : i32
    %c0_i32_1 = arith.constant 0 : i32
    return %c0_i32, %c0_i32_0 : i32, i32
  }
  func.func @transform_16(%arg0: i32) -> (i32, i32, i32) {
    %c0_i32 = arith.constant 0 : i32
    %c0_i32_0 = arith.constant 0 : i32
    %c0_i32_1 = arith.constant 0 : i32
    return %arg0, %c0_i32, %c0_i32_0 : i32, i32, i32
  }
}

</mosaic_0001>

<llo_original>
// kernel: yolov5_forward.1
$region0: #{yolov5_forward.1}
  #allocation0 [shape = 'u32[]', space=smem, size = 0x4, offset = 0x4, fixed_abs, tag = 'smem constant byte address 0x4 - core index']
  #allocation1 [shape = 'u32[144,128]{1,0:T(1,128)}', space=vmem, size = 0x12000, scoped, tag = 'internal scratch']
  #allocation2 [shape = 'f32[5,512]{1,0:T(8,128)}', space=vmem, size = 0x4000, scoped, tag = 'scratch operand']
  #allocation3 [shape = 'f32[6,256]{1,0:T(8,128)}', space=vmem, size = 0x2000, scoped, tag = 'scratch operand']
  #allocation4 [shape = 'f32[5,256]{1,0:T(8,128)}', space=vmem, size = 0x2000, scoped, tag = 'scratch operand']
  %s0 = inlined_call_operand.vmem [shape: f32[2,5,768], index: 0, kind: input, shape index: {}]
  %s1 = inlined_call_operand.vmem [shape: bf16[2,768,512], index: 1, kind: input, shape index: {}]
  %s2 = inlined_call_operand.vmem [shape: f32[1,512], index: 2, kind: input, shape index: {}]
  %s3 = inlined_call_operand.vmem [shape: bf16[2,512,256], index: 3, kind: input, shape index: {}]
  %s4 = inlined_call_operand.vmem [shape: f32[1,256], index: 4, kind: input, shape index: {}]
  %s5 = inlined_call_operand.vmem [shape: bf16[1,256,256], index: 5, kind: input, shape index: {}]
  %s6 = inlined_call_operand.vmem [shape: f32[1,256], index: 6, kind: input, shape index: {}]
  %s7 = inlined_call_operand.hbm [shape: bf16[3,256,256], index: 7, kind: input, shape index: {}]
  %s8 = inlined_call_operand.vmem [shape: f32[1,256], index: 8, kind: input, shape index: {}]
  %s9 = inlined_call_operand.hbm [shape: bf16[2,256,128], index: 9, kind: input, shape index: {}]
  %s10 = inlined_call_operand.vmem [shape: f32[1,128], index: 10, kind: input, shape index: {}]
  %s11 = inlined_call_operand.vmem [shape: bf16[1,128,128], index: 11, kind: input, shape index: {}]
  %s12 = inlined_call_operand.vmem [shape: f32[1,128], index: 12, kind: input, shape index: {}]
  %s13 = inlined_call_operand.vmem [shape: f32[1,128], index: 13, kind: input, shape index: {}]
  %s14 = inlined_call_operand.vmem [shape: f32[1,128], index: 14, kind: input, shape index: {}]
  %s15 = inlined_call_operand.vmem [shape: f32[4,128], index: 15, kind: input, shape index: {}]
  %s16 = inlined_call_operand.vmem [shape: f32[2,4,128], index: 16, kind: output, shape index: {}]
  %s17 = sld [smem:[#allocation0]]
  $region105: #{yolov5_forward.1} parent=0
    _
  %s19 = ssub.s32 1, %s17
  %s20 = scalar_select 0, %s19, %s17
  $region1: #{yolov5_forward.1} parent=0
    #allocation5 [shape = 'u8[393216]{0}', space=vmem, size = 0x60000, scoped, tag = 'input window, operand 7, single buffered']
    #allocation6 [shape = 's32[2]{0}', space=sflag, size = 0x8, scoped, tag = 'scoped memory for yolov5_forward.1']
    #allocation7 [shape = 'u8[131072]{0}', space=vmem, size = 0x20000, scoped, tag = 'input window, operand 9, single buffered']
    #allocation8 [shape = 's32[1]{0}', space=sflag, size = 0x4, scoped, tag = 'scoped memory for yolov5_forward.1']
    %21 = vsyncpa [#allocation6], 0
    %22 = vsyncpa [#allocation8], 0
    loop: start=0, step=1, limit=4
    $region2: #{yolov5_forward.1} parent=1 // loop_pre_header
      _
    $region3: #{yolov5_forward.1} parent=1 // loop_header
      %s24 = sphi 0, %s28
      %p25 = scmp.ge.s32.totalorder %s24, 4
      %s34 = sphi 0, %s36
      %s37 = sphi 0, %s34
      %s38 = sphi 0, %s37
      %s54 = sphi 0, %s38
      %s58 = sphi 0, %s58
      %s60 = sphi 0, %s58
      %s61 = sphi 0, %s60
      %s75 = sphi 0, %s61
      %s79 = sphi 0, %s79
      %s81 = sphi 0, %s79
      %s82 = sphi 0, %s81
      %s96 = sphi 0, %s82
      %s100 = sphi 0, %s100
      %s102 = sphi 0, %s100
      %s103 = sphi 0, %s102
      %s117 = sphi 0, %s103
      %s121 = sphi 0, %s121
      %s123 = sphi 0, %s121
      %s124 = sphi 0, %s123
      %s138 = sphi 0, %s124
      %s142 = sphi 0, %s142
      %s144 = sphi 0, %s142
      %s145 = sphi 0, %s144
      %s159 = sphi 0, %s145
      %s163 = sphi 0, %s163
      %s165 = sphi 0, %s163
      %s166 = sphi 0, %s165
      %s180 = sphi 0, %s166
      %s184 = sphi 0, %s184
      %s186 = sphi 0, %s184
      %s187 = sphi 0, %s186
      %s201 = sphi 0, %s187
      %s205 = sphi 0, %s205
      %s207 = sphi 0, %s205
      %s208 = sphi 0, %s207
      %s222 = sphi 0, %s208
      %s226 = sphi 0, %s226
      %s228 = sphi 0, %s226
      %s229 = sphi 0, %s228
      %s243 = sphi 0, %s229
      %s247 = sphi 0, %s247
      %s249 = sphi 0, %s247
      %s250 = sphi 0, %s249
      %s264 = sphi 0, %s250
      %s268 = sphi 0, %s268
      %s270 = sphi 0, %s268
      %s271 = sphi 0, %s270
      %s285 = sphi 0, %s271
      %s289 = sphi 0, %s289
      %s291 = sphi 0, %s289
      %s292 = sphi 0, %s291
      %s306 = sphi 0, %s292
      %s310 = sphi 0, %s310
      %s312 = sphi 0, %s310
      %s313 = sphi 0, %s312
      %s327 = sphi 0, %s313
      %s331 = sphi 0, %s331
      %s333 = sphi 0, %s331
      %s334 = sphi 0, %s333
      %s348 = sphi 0, %s334
      %s352 = sphi 0, %s352
      %s354 = sphi 0, %s352
      %s355 = sphi 0, %s354
      %s369 = sphi 0, %s355
      %s375 = sphi 0, %s377
      %s378 = sphi 0, %s375
      %s379 = sphi 0, %s378
      %s395 = sphi 0, %s379
    $region4: #{yolov5_forward.1} parent=1 // loop_header_branch
      %27 = sbr.rel (%p25) target = $region8
    $region5: #{yolov5_forward.1} parent=1 // loop_body
      %s29 = ssub.s32 %s24, 1
      %s30 = ssub.s32 %s24, 2
      %s31 = sadd.s32 %s24, 1
      %s32 = ssub.s32 %s24, %s31
      %p33 = scmp.eq.s32.totalorder %s32, 0
      %s35 = sadd.s32 %s34, 1
      %s36 = scalar_select %p33, %s34, %s35
      %p39 = pneg %p33
      %p40 = scmp.eq.s32.totalorder %s24, 1
      %p41 = por %p39, %p40
      %p42 = scmp.ne.s32.totalorder %s34, %s37
      %p43 = scmp.eq.s32.totalorder %s24, 0
      %p44 = por %p42, %p43
      %p45 = scmp.ne.s32.totalorder %s34, %s37
      %p46 = scmp.eq.s32.totalorder %s29, 1
      %p47 = por %p45, %p46
      %p48 = scmp.ne.s32.totalorder %s37, %s38
      %p49 = scmp.eq.s32.totalorder %s29, 0
      %p50 = por %p48, %p49
      %p51 = scmp.ne.s32.totalorder %s37, %s38
      %p52 = scmp.eq.s32.totalorder %s30, 1
      %p53 = por %p51, %p52
      %p55 = scmp.ne.s32.totalorder %s38, %s54
      %p56 = scmp.eq.s32.totalorder %s30, 0
      %p57 = por %p55, %p56
      %s59 = sadd.s32 %s58, 1
      %p62 = scmp.eq.s32.totalorder %s24, 1
      %p63 = scmp.ne.s32.totalorder %s58, %s60
      %p64 = scmp.eq.s32.totalorder %s24, 0
      %p65 = por %p63, %p64
      %p66 = scmp.ne.s32.totalorder %s58, %s60
      %p67 = scmp.eq.s32.totalorder %s29, 1
      %p68 = por %p66, %p67
      %p69 = scmp.ne.s32.totalorder %s60, %s61
      %p70 = scmp.eq.s32.totalorder %s29, 0
      %p71 = por %p69, %p70
      %p72 = scmp.ne.s32.totalorder %s60, %s61
      %p73 = scmp.eq.s32.totalorder %s30, 1
      %p74 = por %p72, %p73
      %p76 = scmp.ne.s32.totalorder %s61, %s75
      %p77 = scmp.eq.s32.totalorder %s30, 0
      %p78 = por %p76, %p77
      %s80 = sadd.s32 %s79, 1
      %p83 = scmp.eq.s32.totalorder %s24, 1
      %p84 = scmp.ne.s32.totalorder %s79, %s81
      %p85 = scmp.eq.s32.totalorder %s24, 0
      %p86 = por %p84, %p85
      %p87 = scmp.ne.s32.totalorder %s79, %s81
      %p88 = scmp.eq.s32.totalorder %s29, 1
      %p89 = por %p87, %p88
      %p90 = scmp.ne.s32.totalorder %s81, %s82
      %p91 = scmp.eq.s32.totalorder %s29, 0
      %p92 = por %p90, %p91
      %p93 = scmp.ne.s32.totalorder %s81, %s82
      %p94 = scmp.eq.s32.totalorder %s30, 1
      %p95 = por %p93, %p94
      %p97 = scmp.ne.s32.totalorder %s82, %s96
      %p98 = scmp.eq.s32.totalorder %s30, 0
      %p99 = por %p97, %p98
      %s101 = sadd.s32 %s100, 1
      %p104 = scmp.eq.s32.totalorder %s24, 1
      %p105 = scmp.ne.s32.totalorder %s100, %s102
      %p106 = scmp.eq.s32.totalorder %s24, 0
      %p107 = por %p105, %p106
      %p108 = scmp.ne.s32.totalorder %s100, %s102
      %p109 = scmp.eq.s32.totalorder %s29, 1
      %p110 = por %p108, %p109
      %p111 = scmp.ne.s32.totalorder %s102, %s103
      %p112 = scmp.eq.s32.totalorder %s29, 0
      %p113 = por %p111, %p112
      %p114 = scmp.ne.s32.totalorder %s102, %s103
      %p115 = scmp.eq.s32.totalorder %s30, 1
      %p116 = por %p114, %p115
      %p118 = scmp.ne.s32.totalorder %s103, %s117
      %p119 = scmp.eq.s32.totalorder %s30, 0
      %p120 = por %p118, %p119
      %s122 = sadd.s32 %s121, 1
      %p125 = scmp.eq.s32.totalorder %s24, 1
      %p126 = scmp.ne.s32.totalorder %s121, %s123
      %p127 = scmp.eq.s32.totalorder %s24, 0
      %p128 = por %p126, %p127
      %p129 = scmp.ne.s32.totalorder %s121, %s123
      %p130 = scmp.eq.s32.totalorder %s29, 1
      %p131 = por %p129, %p130
      %p132 = scmp.ne.s32.totalorder %s123, %s124
      %p133 = scmp.eq.s32.totalorder %s29, 0
      %p134 = por %p132, %p133
      %p135 = scmp.ne.s32.totalorder %s123, %s124
      %p136 = scmp.eq.s32.totalorder %s30, 1
      %p137 = por %p135, %p136
      %p139 = scmp.ne.s32.totalorder %s124, %s138
      %p140 = scmp.eq.s32.totalorder %s30, 0
      %p141 = por %p139, %p140
      %s143 = sadd.s32 %s142, 1
      %p146 = scmp.eq.s32.totalorder %s24, 1
      %p147 = scmp.ne.s32.totalorder %s142, %s144
      %p148 = scmp.eq.s32.totalorder %s24, 0
      %p149 = por %p147, %p148
      %p150 = scmp.ne.s32.totalorder %s142, %s144
      %p151 = scmp.eq.s32.totalorder %s29, 1
      %p152 = por %p150, %p151
      %p153 = scmp.ne.s32.totalorder %s144, %s145
      %p154 = scmp.eq.s32.totalorder %s29, 0
      %p155 = por %p153, %p154
      %p156 = scmp.ne.s32.totalorder %s144, %s145
      %p157 = scmp.eq.s32.totalorder %s30, 1
      %p158 = por %p156, %p157
      %p160 = scmp.ne.s32.totalorder %s145, %s159
      %p161 = scmp.eq.s32.totalorder %s30, 0
      %p162 = por %p160, %p161
      %s164 = sadd.s32 %s163, 1
      %p167 = scmp.eq.s32.totalorder %s24, 1
      %p168 = scmp.ne.s32.totalorder %s163, %s165
      %p169 = scmp.eq.s32.totalorder %s24, 0
      %p170 = por %p168, %p169
      %p171 = scmp.ne.s32.totalorder %s163, %s165
      %p172 = scmp.eq.s32.totalorder %s29, 1
      %p173 = por %p171, %p172
      %p174 = scmp.ne.s32.totalorder %s165, %s166
      %p175 = scmp.eq.s32.totalorder %s29, 0
      %p176 = por %p174, %p175
      %p177 = scmp.ne.s32.totalorder %s165, %s166
      %p178 = scmp.eq.s32.totalorder %s30, 1
      %p179 = por %p177, %p178
      %p181 = scmp.ne.s32.totalorder %s166, %s180
      %p182 = scmp.eq.s32.totalorder %s30, 0
      %p183 = por %p181, %p182
      %s185 = sadd.s32 %s184, 1
      %p188 = scmp.eq.s32.totalorder %s24, 1
      %p189 = scmp.ne.s32.totalorder %s184, %s186
      %p190 = scmp.eq.s32.totalorder %s24, 0
      %p191 = por %p189, %p190
      %p192 = scmp.ne.s32.totalorder %s184, %s186
      %p193 = scmp.eq.s32.totalorder %s29, 1
      %p194 = por %p192, %p193
      %p195 = scmp.ne.s32.totalorder %s186, %s187
      %p196 = scmp.eq.s32.totalorder %s29, 0
      %p197 = por %p195, %p196
      %p198 = scmp.ne.s32.totalorder %s186, %s187
      %p199 = scmp.eq.s32.totalorder %s30, 1
      %p200 = por %p198, %p199
      %p202 = scmp.ne.s32.totalorder %s187, %s201
      %p203 = scmp.eq.s32.totalorder %s30, 0
      %p204 = por %p202, %p203
      %s206 = sadd.s32 %s205, 1
      %p209 = scmp.eq.s32.totalorder %s24, 1
      %p210 = scmp.ne.s32.totalorder %s205, %s207
      %p211 = scmp.eq.s32.totalorder %s24, 0
      %p212 = por %p210, %p211
      %p213 = scmp.ne.s32.totalorder %s205, %s207
      %p214 = scmp.eq.s32.totalorder %s29, 1
      %p215 = por %p213, %p214
      %p216 = scmp.ne.s32.totalorder %s207, %s208
      %p217 = scmp.eq.s32.totalorder %s29, 0
      %p218 = por %p216, %p217
      %p219 = scmp.ne.s32.totalorder %s207, %s208
      %p220 = scmp.eq.s32.totalorder %s30, 1
      %p221 = por %p219, %p220
      %p223 = scmp.ne.s32.totalorder %s208, %s222
      %p224 = scmp.eq.s32.totalorder %s30, 0
      %p225 = por %p223, %p224
      %s227 = sadd.s32 %s226, 1
      %p230 = scmp.eq.s32.totalorder %s24, 1
      %p231 = scmp.ne.s32.totalorder %s226, %s228
      %p232 = scmp.eq.s32.totalorder %s24, 0
      %p233 = por %p231, %p232
      %p234 = scmp.ne.s32.totalorder %s226, %s228
      %p235 = scmp.eq.s32.totalorder %s29, 1
      %p236 = por %p234, %p235
      %p237 = scmp.ne.s32.totalorder %s228, %s229
      %p238 = scmp.eq.s32.totalorder %s29, 0
      %p239 = por %p237, %p238
      %p240 = scmp.ne.s32.totalorder %s228, %s229
      %p241 = scmp.eq.s32.totalorder %s30, 1
      %p242 = por %p240, %p241
      %p244 = scmp.ne.s32.totalorder %s229, %s243
      %p245 = scmp.eq.s32.totalorder %s30, 0
      %p246 = por %p244, %p245
      %s248 = sadd.s32 %s247, 1
      %p251 = scmp.eq.s32.totalorder %s24, 1
      %p252 = scmp.ne.s32.totalorder %s247, %s249
      %p253 = scmp.eq.s32.totalorder %s24, 0
      %p254 = por %p252, %p253
      %p255 = scmp.ne.s32.totalorder %s247, %s249
      %p256 = scmp.eq.s32.totalorder %s29, 1
      %p257 = por %p255, %p256
      %p258 = scmp.ne.s32.totalorder %s249, %s250
      %p259 = scmp.eq.s32.totalorder %s29, 0
      %p260 = por %p258, %p259
      %p261 = scmp.ne.s32.totalorder %s249, %s250
      %p262 = scmp.eq.s32.totalorder %s30, 1
      %p263 = por %p261, %p262
      %p265 = scmp.ne.s32.totalorder %s250, %s264
      %p266 = scmp.eq.s32.totalorder %s30, 0
      %p267 = por %p265, %p266
      %s269 = sadd.s32 %s268, 1
      %p272 = scmp.eq.s32.totalorder %s24, 1
      %p273 = scmp.ne.s32.totalorder %s268, %s270
      %p274 = scmp.eq.s32.totalorder %s24, 0
      %p275 = por %p273, %p274
      %p276 = scmp.ne.s32.totalorder %s268, %s270
      %p277 = scmp.eq.s32.totalorder %s29, 1
      %p278 = por %p276, %p277
      %p279 = scmp.ne.s32.totalorder %s270, %s271
      %p280 = scmp.eq.s32.totalorder %s29, 0
      %p281 = por %p279, %p280
      %p282 = scmp.ne.s32.totalorder %s270, %s271
      %p283 = scmp.eq.s32.totalorder %s30, 1
      %p284 = por %p282, %p283
      %p286 = scmp.ne.s32.totalorder %s271, %s285
      %p287 = scmp.eq.s32.totalorder %s30, 0
      %p288 = por %p286, %p287
      %s290 = sadd.s32 %s289, 1
      %p293 = scmp.eq.s32.totalorder %s24, 1
      %p294 = scmp.ne.s32.totalorder %s289, %s291
      %p295 = scmp.eq.s32.totalorder %s24, 0
      %p296 = por %p294, %p295
      %p297 = scmp.ne.s32.totalorder %s289, %s291
      %p298 = scmp.eq.s32.totalorder %s29, 1
      %p299 = por %p297, %p298
      %p300 = scmp.ne.s32.totalorder %s291, %s292
      %p301 = scmp.eq.s32.totalorder %s29, 0
      %p302 = por %p300, %p301
      %p303 = scmp.ne.s32.totalorder %s291, %s292
      %p304 = scmp.eq.s32.totalorder %s30, 1
      %p305 = por %p303, %p304
      %p307 = scmp.ne.s32.totalorder %s292, %s306
      %p308 = scmp.eq.s32.totalorder %s30, 0
      %p309 = por %p307, %p308
      %s311 = sadd.s32 %s310, 1
      %p314 = scmp.eq.s32.totalorder %s24, 1
      %p315 = scmp.ne.s32.totalorder %s310, %s312
      %p316 = scmp.eq.s32.totalorder %s24, 0
      %p317 = por %p315, %p316
      %p318 = scmp.ne.s32.totalorder %s310, %s312
      %p319 = scmp.eq.s32.totalorder %s29, 1
      %p320 = por %p318, %p319
      %p321 = scmp.ne.s32.totalorder %s312, %s313
      %p322 = scmp.eq.s32.totalorder %s29, 0
      %p323 = por %p321, %p322
      %p324 = scmp.ne.s32.totalorder %s312, %s313
      %p325 = scmp.eq.s32.totalorder %s30, 1
      %p326 = por %p324, %p325
      %p328 = scmp.ne.s32.totalorder %s313, %s327
      %p329 = scmp.eq.s32.totalorder %s30, 0
      %p330 = por %p328, %p329
      %s332 = sadd.s32 %s331, 1
      %p335 = scmp.eq.s32.totalorder %s24, 1
      %p336 = scmp.ne.s32.totalorder %s331, %s333
      %p337 = scmp.eq.s32.totalorder %s24, 0
      %p338 = por %p336, %p337
      %p339 = scmp.ne.s32.totalorder %s331, %s333
      %p340 = scmp.eq.s32.totalorder %s29, 1
      %p341 = por %p339, %p340
      %p342 = scmp.ne.s32.totalorder %s333, %s334
      %p343 = scmp.eq.s32.totalorder %s29, 0
      %p344 = por %p342, %p343
      %p345 = scmp.ne.s32.totalorder %s333, %s334
      %p346 = scmp.eq.s32.totalorder %s30, 1
      %p347 = por %p345, %p346
      %p349 = scmp.ne.s32.totalorder %s334, %s348
      %p350 = scmp.eq.s32.totalorder %s30, 0
      %p351 = por %p349, %p350
      %s353 = sadd.s32 %s352, 1
      %p356 = scmp.eq.s32.totalorder %s24, 1
      %p357 = scmp.ne.s32.totalorder %s352, %s354
      %p358 = scmp.eq.s32.totalorder %s24, 0
      %p359 = por %p357, %p358
      %p360 = scmp.ne.s32.totalorder %s352, %s354
      %p361 = scmp.eq.s32.totalorder %s29, 1
      %p362 = por %p360, %p361
      %p363 = scmp.ne.s32.totalorder %s354, %s355
      %p364 = scmp.eq.s32.totalorder %s29, 0
      %p365 = por %p363, %p364
      %p366 = scmp.ne.s32.totalorder %s354, %s355
      %p367 = scmp.eq.s32.totalorder %s30, 1
      %p368 = por %p366, %p367
      %p370 = scmp.ne.s32.totalorder %s355, %s369
      %p371 = scmp.eq.s32.totalorder %s30, 0
      %p372 = por %p370, %p371
      %s373 = ssub.s32 %s24, %s31
      %p374 = scmp.eq.s32.totalorder %s373, 0
      %s376 = sadd.s32 %s375, 1
      %s377 = scalar_select %p374, %s375, %s376
      %p380 = pneg %p374
      %p381 = scmp.eq.s32.totalorder %s24, 1
      %p382 = por %p380, %p381
      %p383 = scmp.ne.s32.totalorder %s375, %s378
      %p384 = scmp.eq.s32.totalorder %s24, 0
      %p385 = por %p383, %p384
      %p386 = scmp.ne.s32.totalorder %s375, %s378
      %p387 = scmp.eq.s32.totalorder %s29, 1
      %p388 = por %p386, %p387
      %p389 = scmp.ne.s32.totalorder %s378, %s379
      %p390 = scmp.eq.s32.totalorder %s29, 0
      %p391 = por %p389, %p390
      %p392 = scmp.ne.s32.totalorder %s378, %s379
      %p393 = scmp.eq.s32.totalorder %s30, 1
      %p394 = por %p392, %p393
      %p396 = scmp.ne.s32.totalorder %s379, %s395
      %p397 = scmp.eq.s32.totalorder %s30, 0
      %p398 = por %p396, %p397
      %p399 = scmp.le.s32.totalorder 1, %s24
      %p400 = scmp.lt.s32.totalorder %s24, 3
      %p401 = pnand %p399, %p400
      %p402 = pneg %p401
      // Predicated region
      $region9: #{yolov5_forward.1} parent=5 // pred_check
        _
      $region10: #{yolov5_forward.1} parent=5 // pred_check_branch
        %404 = sbr.rel (%p401) target = $region12
      $region11: #{yolov5_forward.1} parent=5 // pred_region
        %s405 = ssub.s32 %s24, 1
        // Predicated region
        $region13: #{yolov5_forward.1} parent=11 // pred_check
          %p406 = pneg %p71
        $region14: #{yolov5_forward.1} parent=11 // pred_check_branch
          %408 = sbr.rel (%p406) target = $region16
        $region15: #{yolov5_forward.1} parent=11 // pred_region
          _
        $region16: #{yolov5_forward.1} parent=11 // pred_fallthru
          _
        // Predicated region
        $region17: #{yolov5_forward.1} parent=11 // pred_check
          %p409 = pneg %p92
        $region18: #{yolov5_forward.1} parent=11 // pred_check_branch
          %411 = sbr.rel (%p409) target = $region20
        $region19: #{yolov5_forward.1} parent=11 // pred_region
          _
        $region20: #{yolov5_forward.1} parent=11 // pred_fallthru
          _
        // Predicated region
        $region21: #{yolov5_forward.1} parent=11 // pred_check
          %p412 = pneg %p113
        $region22: #{yolov5_forward.1} parent=11 // pred_check_branch
          %414 = sbr.rel (%p412) target = $region24
        $region23: #{yolov5_forward.1} parent=11 // pred_region
          _
        $region24: #{yolov5_forward.1} parent=11 // pred_fallthru
          _
        // Predicated region
        $region25: #{yolov5_forward.1} parent=11 // pred_check
          %p415 = pneg %p134
        $region26: #{yolov5_forward.1} parent=11 // pred_check_branch
          %417 = sbr.rel (%p415) target = $region28
        $region27: #{yolov5_forward.1} parent=11 // pred_region
          _
        $region28: #{yolov5_forward.1} parent=11 // pred_fallthru
          _
        // Predicated region
        $region29: #{yolov5_forward.1} parent=11 // pred_check
          %p418 = pneg %p155
        $region30: #{yolov5_forward.1} parent=11 // pred_check_branch
          %420 = sbr.rel (%p418) target = $region32
        $region31: #{yolov5_forward.1} parent=11 // pred_region
          _
        $region32: #{yolov5_forward.1} parent=11 // pred_fallthru
          _
        // Predicated region
        $region33: #{yolov5_forward.1} parent=11 // pred_check
          %p421 = pneg %p176
        $region34: #{yolov5_forward.1} parent=11 // pred_check_branch
          %423 = sbr.rel (%p421) target = $region36
        $region35: #{yolov5_forward.1} parent=11 // pred_region
          _
        $region36: #{yolov5_forward.1} parent=11 // pred_fallthru
          _
        // Predicated region
        $region37: #{yolov5_forward.1} parent=11 // pred_check
          %p424 = pneg %p197
        $region38: #{yolov5_forward.1} parent=11 // pred_check_branch
          %426 = sbr.rel (%p424) target = $region40
        $region39: #{yolov5_forward.1} parent=11 // pred_region
          %s428 = ssub.s32 12288, 12288
          %429 = vsyncadd [#allocation6], %s428
          %s430 = sshll.u32 [#allocation5], 4
          %s431 = int_to_ptr.vmem [resolvable:$true] %s430
          %436 = dma.hbm_to_vmem [thread:$0]  %s7, 12288, %s431, [#allocation6], 128, 128, 8
        $region40: #{yolov5_forward.1} parent=11 // pred_fallthru
          _
        // Predicated region
        $region41: #{yolov5_forward.1} parent=11 // pred_check
          %p437 = pneg %p218
        $region42: #{yolov5_forward.1} parent=11 // pred_check_branch
          %439 = sbr.rel (%p437) target = $region44
        $region43: #{yolov5_forward.1} parent=11 // pred_region
          _
        $region44: #{yolov5_forward.1} parent=11 // pred_fallthru
          _
        // Predicated region
        $region45: #{yolov5_forward.1} parent=11 // pred_check
          %p440 = pneg %p239
        $region46: #{yolov5_forward.1} parent=11 // pred_check_branch
          %442 = sbr.rel (%p440) target = $region48
        $region47: #{yolov5_forward.1} parent=11 // pred_region
          %s444 = ssub.s32 4096, 4096
          %445 = vsyncadd [#allocation8], %s444
          %s446 = sshll.u32 [#allocation7], 4
          %s447 = int_to_ptr.vmem [resolvable:$true] %s446
          %452 = dma.hbm_to_vmem [thread:$0]  %s9, 4096, %s447, [#allocation8], 64, 64, 4
        $region48: #{yolov5_forward.1} parent=11 // pred_fallthru
          _
        // Predicated region
        $region49: #{yolov5_forward.1} parent=11 // pred_check
          %p453 = pneg %p260
        $region50: #{yolov5_forward.1} parent=11 // pred_check_branch
          %455 = sbr.rel (%p453) target = $region52
        $region51: #{yolov5_forward.1} parent=11 // pred_region
          _
        $region52: #{yolov5_forward.1} parent=11 // pred_fallthru
          _
        // Predicated region
        $region53: #{yolov5_forward.1} parent=11 // pred_check
          %p456 = pneg %p281
        $region54: #{yolov5_forward.1} parent=11 // pred_check_branch
          %458 = sbr.rel (%p456) target = $region56
        $region55: #{yolov5_forward.1} parent=11 // pred_region
          _
        $region56: #{yolov5_forward.1} parent=11 // pred_fallthru
          _
        // Predicated region
        $region57: #{yolov5_forward.1} parent=11 // pred_check
          %p459 = pneg %p302
        $region58: #{yolov5_forward.1} parent=11 // pred_check_branch
          %461 = sbr.rel (%p459) target = $region60
        $region59: #{yolov5_forward.1} parent=11 // pred_region
          _
        $region60: #{yolov5_forward.1} parent=11 // pred_fallthru
          _
        // Predicated region
        $region61: #{yolov5_forward.1} parent=11 // pred_check
          %p462 = pneg %p323
        $region62: #{yolov5_forward.1} parent=11 // pred_check_branch
          %464 = sbr.rel (%p462) target = $region64
        $region63: #{yolov5_forward.1} parent=11 // pred_region
          _
        $region64: #{yolov5_forward.1} parent=11 // pred_fallthru
          _
        // Predicated region
        $region65: #{yolov5_forward.1} parent=11 // pred_check
          %p465 = pneg %p344
        $region66: #{yolov5_forward.1} parent=11 // pred_check_branch
          %467 = sbr.rel (%p465) target = $region68
        $region67: #{yolov5_forward.1} parent=11 // pred_region
          _
        $region68: #{yolov5_forward.1} parent=11 // pred_fallthru
          _
        // Predicated region
        $region69: #{yolov5_forward.1} parent=11 // pred_check
          %p468 = pneg %p365
        $region70: #{yolov5_forward.1} parent=11 // pred_check_branch
          %470 = sbr.rel (%p468) target = $region72
        $region71: #{yolov5_forward.1} parent=11 // pred_region
          _
        $region72: #{yolov5_forward.1} parent=11 // pred_fallthru
          _
      $region12: #{yolov5_forward.1} parent=5 // pred_fallthru
        _
      %p471 = scmp.lt.s32.totalorder %s24, 2
      // Predicated region
      $region73: #{yolov5_forward.1} parent=5 // pred_check
        %p472 = pneg %p471
      $region74: #{yolov5_forward.1} parent=5 // pred_check_branch
        %474 = sbr.rel (%p472) target = $region76
      $region75: #{yolov5_forward.1} parent=5 // pred_region
        // Predicated region
        $region77: #{yolov5_forward.1} parent=75 // pred_check
          %p475 = pneg %p44
        $region78: #{yolov5_forward.1} parent=75 // pred_check_branch
          %477 = sbr.rel (%p475) target = $region80
        $region79: #{yolov5_forward.1} parent=75 // pred_region
          %p478 = scmp.lt.s32.totalorder %s24, 1
          %s479 = scalar_select %p478, %s24, 1
          %s480 = smul.addr %s479, 6
          %s481 = smul.addr %s480, 8
          %s482 = scalar_lea.vmem %s0, %s481
        $region80: #{yolov5_forward.1} parent=75 // pred_fallthru
          _
      $region76: #{yolov5_forward.1} parent=5 // pred_fallthru
        _
      %p483 = scmp.le.s32.totalorder 1, %s24
      %p484 = scmp.lt.s32.totalorder %s24, 3
      %p485 = pnand %p483, %p484
      %p486 = pneg %p485
      // Predicated region
      $region81: #{yolov5_forward.1} parent=5 // pred_check
        _
      $region82: #{yolov5_forward.1} parent=5 // pred_check_branch
        %488 = sbr.rel (%p485) target = $region84
      $region83: #{yolov5_forward.1} parent=5 // pred_region
        %s489 = ssub.s32 %s24, 1
        // Predicated region
        $region85: #{yolov5_forward.1} parent=83 // pred_check
          %p490 = pneg %p197
        $region86: #{yolov5_forward.1} parent=83 // pred_check_branch
          %492 = sbr.rel (%p490) target = $region88
        $region87: #{yolov5_forward.1} parent=83 // pred_region
          %493 = dma.done [#allocation6], 12288
        $region88: #{yolov5_forward.1} parent=83 // pred_fallthru
          _
        // Predicated region
        $region89: #{yolov5_forward.1} parent=83 // pred_check
          %p494 = pneg %p239
        $region90: #{yolov5_forward.1} parent=83 // pred_check_branch
          %496 = sbr.rel (%p494) target = $region92
        $region91: #{yolov5_forward.1} parent=83 // pred_region
          %497 = dma.done [#allocation8], 4096
        $region92: #{yolov5_forward.1} parent=83 // pred_fallthru
          _
        %p498 = scmp.lt.s32.totalorder %s29, 1
        %s499 = scalar_select %p498, %s29, 1
        %s500 = smul.addr %s499, 6
        %s501 = smul.addr %s500, 8
        %s502 = scalar_lea.vmem %s0, %s501
        %p503 = pneg %p50
        %p504 = pneg %p47
        %p505 = pneg %p71
        %p506 = pneg %p68
        %p507 = pneg %p92
        %p508 = pneg %p89
        %p509 = pneg %p113
        %p510 = pneg %p110
        %p511 = pneg %p134
        %p512 = pneg %p131
        %p513 = pneg %p155
        %p514 = pneg %p152
        %p515 = pneg %p176
        %p516 = pneg %p173
        %p517 = pneg %p197
        %p518 = pneg %p194
        %p519 = pneg %p218
        %p520 = pneg %p215
        %p521 = pneg %p239
        %p522 = pneg %p236
        %p523 = pneg %p260
        %p524 = pneg %p257
        %p525 = pneg %p281
        %p526 = pneg %p278
        %p527 = pneg %p302
        %p528 = pneg %p299
        %p529 = pneg %p323
        %p530 = pneg %p320
        %p531 = pneg %p344
        %p532 = pneg %p341
        %p533 = pneg %p365
        %p534 = pneg %p362
        %p535 = pneg %p391
        %p536 = pneg %p388
        %p537 = scmp.lt.s32.totalorder %s29, 1
        %s538 = scalar_select %p537, %s29, 1
        %s539 = smul.addr %s538, 4
        %s540 = scalar_lea.vmem %s16, %s539
        %p541 = scmp.lt.s32.totalorder %s29, 1
        %s542 = scalar_select %p541, %s29, 1
        %s543 = smul.addr %s542, 6
        %s544 = smul.addr %s543, 8
        %s545 = scalar_lea.vmem %s0, %s544
        %p546 = scmp.lt.s32.totalorder %s29, 1
        %s547 = scalar_select %p546, %s29, 1
        %s548 = smul.addr %s547, 4
        %s549 = scalar_lea.vmem %s16, %s548
        %v551 = vld [vmem:[%s545] sm:$0xf]
        %v552 = vld [vmem:[%s545 + $0x8] sm:$0xf]
        %v553 = vld [vmem:[%s545 + $0x10] sm:$0xf]
        %v554 = vld [vmem:[%s545 + $0x18] sm:$0xf]
        %v555 = vld [vmem:[%s545 + $0x20] sm:$0xf]
        %v556 = vld [vmem:[%s545 + $0x28] sm:$0xf]
        %v557 = vpack.c.bf16 %v551, %v551
        %v558 = vpack.c.bf16 %v552, %v552
        %v559 = vpack.c.bf16 %v553, %v553
        %v560 = vpack.c.bf16 %v554, %v554
        %v561 = vpack.c.bf16 %v555, %v555
        %v562 = vpack.c.bf16 %v556, %v556
        %v563 = vld [vmem:[%s1] sm:$0xff]
        %v564 = vld [vmem:[%s1 + $0x8] sm:$0xff]
        %v565 = vld [vmem:[%s1 + $0x10] sm:$0xff]
        %v566 = vld [vmem:[%s1 + $0x18] sm:$0xff]
        %v567 = vld [vmem:[%s1 + $0x20] sm:$0xff]
        %v568 = vld [vmem:[%s1 + $0x28] sm:$0xff]
        %v569 = vld [vmem:[%s1 + $0x30] sm:$0xff]
        %v570 = vld [vmem:[%s1 + $0x38] sm:$0xff]
        %v571 = vld [vmem:[%s1 + $0x40] sm:$0xff]
        %v572 = vld [vmem:[%s1 + $0x48] sm:$0xff]
        %v573 = vld [vmem:[%s1 + $0x50] sm:$0xff]
        %v574 = vld [vmem:[%s1 + $0x58] sm:$0xff]
        %v575 = vld [vmem:[%s1 + $0x60] sm:$0xff]
        %v576 = vld [vmem:[%s1 + $0x68] sm:$0xff]
        %v577 = vld [vmem:[%s1 + $0x70] sm:$0xff]
        %v578 = vld [vmem:[%s1 + $0x78] sm:$0xff]
        %v579 = vld [vmem:[%s1 + $0x80] sm:$0xff]
        %v580 = vld [vmem:[%s1 + $0x88] sm:$0xff]
        %v581 = vld [vmem:[%s1 + $0x90] sm:$0xff]
        %v582 = vld [vmem:[%s1 + $0x98] sm:$0xff]
        %v583 = vld [vmem:[%s1 + $0xa0] sm:$0xff]
        %v584 = vld [vmem:[%s1 + $0xa8] sm:$0xff]
        %v585 = vld [vmem:[%s1 + $0xb0] sm:$0xff]
        %v586 = vld [vmem:[%s1 + $0xb8] sm:$0xff]
        %v587 = vld [vmem:[%s1 + $0xc0] sm:$0xff]
        %v588 = vld [vmem:[%s1 + $0xc8] sm:$0xff]
        %v589 = vld [vmem:[%s1 + $0xd0] sm:$0xff]
        %v590 = vld [vmem:[%s1 + $0xd8] sm:$0xff]
        %v591 = vld [vmem:[%s1 + $0xe0] sm:$0xff]
        %v592 = vld [vmem:[%s1 + $0xe8] sm:$0xff]
        %v593 = vld [vmem:[%s1 + $0xf0] sm:$0xff]
        %v594 = vld [vmem:[%s1 + $0xf8] sm:$0xff]
        %v595 = vld [vmem:[%s1 + $0x100] sm:$0xff]
        %v596 = vld [vmem:[%s1 + $0x108] sm:$0xff]
        %v597 = vld [vmem:[%s1 + $0x110] sm:$0xff]
        %v598 = vld [vmem:[%s1 + $0x118] sm:$0xff]
        %v599 = vld [vmem:[%s1 + $0x120] sm:$0xff]
        %v600 = vld [vmem:[%s1 + $0x128] sm:$0xff]
        %v601 = vld [vmem:[%s1 + $0x130] sm:$0xff]
        %v602 = vld [vmem:[%s1 + $0x138] sm:$0xff]
        %v603 = vld [vmem:[%s1 + $0x140] sm:$0xff]
        %v604 = vld [vmem:[%s1 + $0x148] sm:$0xff]
        %v605 = vld [vmem:[%s1 + $0x150] sm:$0xff]
        %v606 = vld [vmem:[%s1 + $0x158] sm:$0xff]
        %v607 = vld [vmem:[%s1 + $0x160] sm:$0xff]
        %v608 = vld [vmem:[%s1 + $0x168] sm:$0xff]
        %v609 = vld [vmem:[%s1 + $0x170] sm:$0xff]
        %v610 = vld [vmem:[%s1 + $0x178] sm:$0xff]
        %v611 = vld [vmem:[%s1 + $0x180] sm:$0xff]
        %v612 = vld [vmem:[%s1 + $0x188] sm:$0xff]
        %v613 = vld [vmem:[%s1 + $0x190] sm:$0xff]
        %v614 = vld [vmem:[%s1 + $0x198] sm:$0xff]
        %v615 = vld [vmem:[%s1 + $0x1a0] sm:$0xff]
        %v616 = vld [vmem:[%s1 + $0x1a8] sm:$0xff]
        %v617 = vld [vmem:[%s1 + $0x1b0] sm:$0xff]
        %v618 = vld [vmem:[%s1 + $0x1b8] sm:$0xff]
        %v619 = vld [vmem:[%s1 + $0x1c0] sm:$0xff]
        %v620 = vld [vmem:[%s1 + $0x1c8] sm:$0xff]
        %v621 = vld [vmem:[%s1 + $0x1d0] sm:$0xff]
        %v622 = vld [vmem:[%s1 + $0x1d8] sm:$0xff]
        %v623 = vld [vmem:[%s1 + $0x1e0] sm:$0xff]
        %v624 = vld [vmem:[%s1 + $0x1e8] sm:$0xff]
        %v625 = vld [vmem:[%s1 + $0x1f0] sm:$0xff]
        %v626 = vld [vmem:[%s1 + $0x1f8] sm:$0xff]
        %v627 = vld [vmem:[%s1 + $0x200] sm:$0xff]
        %v628 = vld [vmem:[%s1 + $0x208] sm:$0xff]
        %v629 = vld [vmem:[%s1 + $0x210] sm:$0xff]
        %v630 = vld [vmem:[%s1 + $0x218] sm:$0xff]
        %v631 = vld [vmem:[%s1 + $0x220] sm:$0xff]
        %v632 = vld [vmem:[%s1 + $0x228] sm:$0xff]
        %v633 = vld [vmem:[%s1 + $0x230] sm:$0xff]
        %v634 = vld [vmem:[%s1 + $0x238] sm:$0xff]
        %v635 = vld [vmem:[%s1 + $0x240] sm:$0xff]
        %v636 = vld [vmem:[%s1 + $0x248] sm:$0xff]
        %v637 = vld [vmem:[%s1 + $0x250] sm:$0xff]
        %v638 = vld [vmem:[%s1 + $0x258] sm:$0xff]
        %v639 = vld [vmem:[%s1 + $0x260] sm:$0xff]
        %v640 = vld [vmem:[%s1 + $0x268] sm:$0xff]
        %v641 = vld [vmem:[%s1 + $0x270] sm:$0xff]
        %v642 = vld [vmem:[%s1 + $0x278] sm:$0xff]
        %v643 = vld [vmem:[%s1 + $0x280] sm:$0xff]
        %v644 = vld [vmem:[%s1 + $0x288] sm:$0xff]
        %v645 = vld [vmem:[%s1 + $0x290] sm:$0xff]
        %v646 = vld [vmem:[%s1 + $0x298] sm:$0xff]
        %v647 = vld [vmem:[%s1 + $0x2a0] sm:$0xff]
        %v648 = vld [vmem:[%s1 + $0x2a8] sm:$0xff]
        %v649 = vld [vmem:[%s1 + $0x2b0] sm:$0xff]
        %v650 = vld [vmem:[%s1 + $0x2b8] sm:$0xff]
        %v651 = vld [vmem:[%s1 + $0x2c0] sm:$0xff]
        %v652 = vld [vmem:[%s1 + $0x2c8] sm:$0xff]
        %v653 = vld [vmem:[%s1 + $0x2d0] sm:$0xff]
        %v654 = vld [vmem:[%s1 + $0x2d8] sm:$0xff]
        %v655 = vld [vmem:[%s1 + $0x2e0] sm:$0xff]
        %v656 = vld [vmem:[%s1 + $0x2e8] sm:$0xff]
        %v657 = vld [vmem:[%s1 + $0x2f0] sm:$0xff]
        %v658 = vld [vmem:[%s1 + $0x2f8] sm:$0xff]
        %v659 = vld [vmem:[%s1 + $0x300] sm:$0xff]
        %v660 = vld [vmem:[%s1 + $0x308] sm:$0xff]
        %v661 = vld [vmem:[%s1 + $0x310] sm:$0xff]
        %v662 = vld [vmem:[%s1 + $0x318] sm:$0xff]
        %v663 = vld [vmem:[%s1 + $0x320] sm:$0xff]
        %v664 = vld [vmem:[%s1 + $0x328] sm:$0xff]
        %v665 = vld [vmem:[%s1 + $0x330] sm:$0xff]
        %v666 = vld [vmem:[%s1 + $0x338] sm:$0xff]
        %v667 = vld [vmem:[%s1 + $0x340] sm:$0xff]
        %v668 = vld [vmem:[%s1 + $0x348] sm:$0xff]
        %v669 = vld [vmem:[%s1 + $0x350] sm:$0xff]
        %v670 = vld [vmem:[%s1 + $0x358] sm:$0xff]
        %v671 = vld [vmem:[%s1 + $0x360] sm:$0xff]
        %v672 = vld [vmem:[%s1 + $0x368] sm:$0xff]
        %v673 = vld [vmem:[%s1 + $0x370] sm:$0xff]
        %v674 = vld [vmem:[%s1 + $0x378] sm:$0xff]
        %v675 = vld [vmem:[%s1 + $0x380] sm:$0xff]
        %v676 = vld [vmem:[%s1 + $0x388] sm:$0xff]
        %v677 = vld [vmem:[%s1 + $0x390] sm:$0xff]
        %v678 = vld [vmem:[%s1 + $0x398] sm:$0xff]
        %v679 = vld [vmem:[%s1 + $0x3a0] sm:$0xff]
        %v680 = vld [vmem:[%s1 + $0x3a8] sm:$0xff]
        %v681 = vld [vmem:[%s1 + $0x3b0] sm:$0xff]
        %v682 = vld [vmem:[%s1 + $0x3b8] sm:$0xff]
        %v683 = vld [vmem:[%s1 + $0x3c0] sm:$0xff]
        %v684 = vld [vmem:[%s1 + $0x3c8] sm:$0xff]
        %v685 = vld [vmem:[%s1 + $0x3d0] sm:$0xff]
        %v686 = vld [vmem:[%s1 + $0x3d8] sm:$0xff]
        %v687 = vld [vmem:[%s1 + $0x3e0] sm:$0xff]
        %v688 = vld [vmem:[%s1 + $0x3e8] sm:$0xff]
        %v689 = vld [vmem:[%s1 + $0x3f0] sm:$0xff]
        %v690 = vld [vmem:[%s1 + $0x3f8] sm:$0xff]
        %v691 = vld [vmem:[%s1 + $0x400] sm:$0xff]
        %v692 = vld [vmem:[%s1 + $0x408] sm:$0xff]
        %v693 = vld [vmem:[%s1 + $0x410] sm:$0xff]
        %v694 = vld [vmem:[%s1 + $0x418] sm:$0xff]
        %v695 = vld [vmem:[%s1 + $0x420] sm:$0xff]
        %v696 = vld [vmem:[%s1 + $0x428] sm:$0xff]
        %v697 = vld [vmem:[%s1 + $0x430] sm:$0xff]
        %v698 = vld [vmem:[%s1 + $0x438] sm:$0xff]
        %v699 = vld [vmem:[%s1 + $0x440] sm:$0xff]
        %v700 = vld [vmem:[%s1 + $0x448] sm:$0xff]
        %v701 = vld [vmem:[%s1 + $0x450] sm:$0xff]
        %v702 = vld [vmem:[%s1 + $0x458] sm:$0xff]
        %v703 = vld [vmem:[%s1 + $0x460] sm:$0xff]
        %v704 = vld [vmem:[%s1 + $0x468] sm:$0xff]
        %v705 = vld [vmem:[%s1 + $0x470] sm:$0xff]
        %v706 = vld [vmem:[%s1 + $0x478] sm:$0xff]
        %v707 = vld [vmem:[%s1 + $0x480] sm:$0xff]
        %v708 = vld [vmem:[%s1 + $0x488] sm:$0xff]
        %v709 = vld [vmem:[%s1 + $0x490] sm:$0xff]
        %v710 = vld [vmem:[%s1 + $0x498] sm:$0xff]
        %v711 = vld [vmem:[%s1 + $0x4a0] sm:$0xff]
        %v712 = vld [vmem:[%s1 + $0x4a8] sm:$0xff]
        %v713 = vld [vmem:[%s1 + $0x4b0] sm:$0xff]
        %v714 = vld [vmem:[%s1 + $0x4b8] sm:$0xff]
        %v715 = vld [vmem:[%s1 + $0x4c0] sm:$0xff]
        %v716 = vld [vmem:[%s1 + $0x4c8] sm:$0xff]
        %v717 = vld [vmem:[%s1 + $0x4d0] sm:$0xff]
        %v718 = vld [vmem:[%s1 + $0x4d8] sm:$0xff]
        %v719 = vld [vmem:[%s1 + $0x4e0] sm:$0xff]
        %v720 = vld [vmem:[%s1 + $0x4e8] sm:$0xff]
        %v721 = vld [vmem:[%s1 + $0x4f0] sm:$0xff]
        %v722 = vld [vmem:[%s1 + $0x4f8] sm:$0xff]
        %v723 = vld [vmem:[%s1 + $0x500] sm:$0xff]
        %v724 = vld [vmem:[%s1 + $0x508] sm:$0xff]
        %v725 = vld [vmem:[%s1 + $0x510] sm:$0xff]
        %v726 = vld [vmem:[%s1 + $0x518] sm:$0xff]
        %v727 = vld [vmem:[%s1 + $0x520] sm:$0xff]
        %v728 = vld [vmem:[%s1 + $0x528] sm:$0xff]
        %v729 = vld [vmem:[%s1 + $0x530] sm:$0xff]
        %v730 = vld [vmem:[%s1 + $0x538] sm:$0xff]
        %v731 = vld [vmem:[%s1 + $0x540] sm:$0xff]
        %v732 = vld [vmem:[%s1 + $0x548] sm:$0xff]
        %v733 = vld [vmem:[%s1 + $0x550] sm:$0xff]
        %v734 = vld [vmem:[%s1 + $0x558] sm:$0xff]
        %v735 = vld [vmem:[%s1 + $0x560] sm:$0xff]
        %v736 = vld [vmem:[%s1 + $0x568] sm:$0xff]
        %v737 = vld [vmem:[%s1 + $0x570] sm:$0xff]
        %v738 = vld [vmem:[%s1 + $0x578] sm:$0xff]
        %v739 = vld [vmem:[%s1 + $0x580] sm:$0xff]
        %v740 = vld [vmem:[%s1 + $0x588] sm:$0xff]
        %v741 = vld [vmem:[%s1 + $0x590] sm:$0xff]
        %v742 = vld [vmem:[%s1 + $0x598] sm:$0xff]
        %v743 = vld [vmem:[%s1 + $0x5a0] sm:$0xff]
        %v744 = vld [vmem:[%s1 + $0x5a8] sm:$0xff]
        %v745 = vld [vmem:[%s1 + $0x5b0] sm:$0xff]
        %v746 = vld [vmem:[%s1 + $0x5b8] sm:$0xff]
        %v747 = vld [vmem:[%s1 + $0x5c0] sm:$0xff]
        %v748 = vld [vmem:[%s1 + $0x5c8] sm:$0xff]
        %v749 = vld [vmem:[%s1 + $0x5d0] sm:$0xff]
        %v750 = vld [vmem:[%s1 + $0x5d8] sm:$0xff]
        %v751 = vld [vmem:[%s1 + $0x5e0] sm:$0xff]
        %v752 = vld [vmem:[%s1 + $0x5e8] sm:$0xff]
        %v753 = vld [vmem:[%s1 + $0x5f0] sm:$0xff]
        %v754 = vld [vmem:[%s1 + $0x5f8] sm:$0xff]
        %v755 = vld [vmem:[%s545] sm:$0x1e]
        %v756 = vld [vmem:[%s545 + $0x8] sm:$0x1e]
        %v757 = vld [vmem:[%s545 + $0x10] sm:$0x1e]
        %v758 = vld [vmem:[%s545 + $0x18] sm:$0x1e]
        %v759 = vld [vmem:[%s545 + $0x20] sm:$0x1e]
        %v760 = vld [vmem:[%s545 + $0x28] sm:$0x1e]
        %v761 = vpack.c.bf16 %v755, %v755
        %v762 = vpack.c.bf16 %v756, %v756
        %v763 = vpack.c.bf16 %v757, %v757
        %v764 = vpack.c.bf16 %v758, %v758
        %v765 = vpack.c.bf16 %v759, %v759
        %v766 = vpack.c.bf16 %v760, %v760
        %s767 = scalar_lea.vmem %s1, 1536
        %v768 = vld [vmem:[%s767] sm:$0xff]
        %v769 = vld [vmem:[%s767 + $0x8] sm:$0xff]
        %v770 = vld [vmem:[%s767 + $0x10] sm:$0xff]
        %v771 = vld [vmem:[%s767 + $0x18] sm:$0xff]
        %v772 = vld [vmem:[%s767 + $0x20] sm:$0xff]
        %v773 = vld [vmem:[%s767 + $0x28] sm:$0xff]
        %v774 = vld [vmem:[%s767 + $0x30] sm:$0xff]
        %v775 = vld [vmem:[%s767 + $0x38] sm:$0xff]
        %v776 = vld [vmem:[%s767 + $0x40] sm:$0xff]
        %v777 = vld [vmem:[%s767 + $0x48] sm:$0xff]
        %v778 = vld [vmem:[%s767 + $0x50] sm:$0xff]
        %v779 = vld [vmem:[%s767 + $0x58] sm:$0xff]
        %v780 = vld [vmem:[%s767 + $0x60] sm:$0xff]
        %v781 = vld [vmem:[%s767 + $0x68] sm:$0xff]
        %v782 = vld [vmem:[%s767 + $0x70] sm:$0xff]
        %v783 = vld [vmem:[%s767 + $0x78] sm:$0xff]
        %v784 = vld [vmem:[%s767 + $0x80] sm:$0xff]
        %v785 = vld [vmem:[%s767 + $0x88] sm:$0xff]
        %v786 = vld [vmem:[%s767 + $0x90] sm:$0xff]
        %v787 = vld [vmem:[%s767 + $0x98] sm:$0xff]
        %v788 = vld [vmem:[%s767 + $0xa0] sm:$0xff]
        %v789 = vld [vmem:[%s767 + $0xa8] sm:$0xff]
        %v790 = vld [vmem:[%s767 + $0xb0] sm:$0xff]
        %v791 = vld [vmem:[%s767 + $0xb8] sm:$0xff]
        %v792 = vld [vmem:[%s767 + $0xc0] sm:$0xff]
        %v793 = vld [vmem:[%s767 + $0xc8] sm:$0xff]
        %v794 = vld [vmem:[%s767 + $0xd0] sm:$0xff]
        %v795 = vld [vmem:[%s767 + $0xd8] sm:$0xff]
        %v796 = vld [vmem:[%s767 + $0xe0] sm:$0xff]
        %v797 = vld [vmem:[%s767 + $0xe8] sm:$0xff]
        %v798 = vld [vmem:[%s767 + $0xf0] sm:$0xff]
        %v799 = vld [vmem:[%s767 + $0xf8] sm:$0xff]
        %v800 = vld [vmem:[%s767 + $0x100] sm:$0xff]
        %v801 = vld [vmem:[%s767 + $0x108] sm:$0xff]
        %v802 = vld [vmem:[%s767 + $0x110] sm:$0xff]
        %v803 = vld [vmem:[%s767 + $0x118] sm:$0xff]
        %v804 = vld [vmem:[%s767 + $0x120] sm:$0xff]
        %v805 = vld [vmem:[%s767 + $0x128] sm:$0xff]
        %v806 = vld [vmem:[%s767 + $0x130] sm:$0xff]
        %v807 = vld [vmem:[%s767 + $0x138] sm:$0xff]
        %v808 = vld [vmem:[%s767 + $0x140] sm:$0xff]
        %v809 = vld [vmem:[%s767 + $0x148] sm:$0xff]
        %v810 = vld [vmem:[%s767 + $0x150] sm:$0xff]
        %v811 = vld [vmem:[%s767 + $0x158] sm:$0xff]
        %v812 = vld [vmem:[%s767 + $0x160] sm:$0xff]
        %v813 = vld [vmem:[%s767 + $0x168] sm:$0xff]
        %v814 = vld [vmem:[%s767 + $0x170] sm:$0xff]
        %v815 = vld [vmem:[%s767 + $0x178] sm:$0xff]
        %v816 = vld [vmem:[%s767 + $0x180] sm:$0xff]
        %v817 = vld [vmem:[%s767 + $0x188] sm:$0xff]
        %v818 = vld [vmem:[%s767 + $0x190] sm:$0xff]
        %v819 = vld [vmem:[%s767 + $0x198] sm:$0xff]
        %v820 = vld [vmem:[%s767 + $0x1a0] sm:$0xff]
        %v821 = vld [vmem:[%s767 + $0x1a8] sm:$0xff]
        %v822 = vld [vmem:[%s767 + $0x1b0] sm:$0xff]
        %v823 = vld [vmem:[%s767 + $0x1b8] sm:$0xff]
        %v824 = vld [vmem:[%s767 + $0x1c0] sm:$0xff]
        %v825 = vld [vmem:[%s767 + $0x1c8] sm:$0xff]
        %v826 = vld [vmem:[%s767 + $0x1d0] sm:$0xff]
        %v827 = vld [vmem:[%s767 + $0x1d8] sm:$0xff]
        %v828 = vld [vmem:[%s767 + $0x1e0] sm:$0xff]
        %v829 = vld [vmem:[%s767 + $0x1e8] sm:$0xff]
        %v830 = vld [vmem:[%s767 + $0x1f0] sm:$0xff]
        %v831 = vld [vmem:[%s767 + $0x1f8] sm:$0xff]
        %v832 = vld [vmem:[%s767 + $0x200] sm:$0xff]
        %v833 = vld [vmem:[%s767 + $0x208] sm:$0xff]
        %v834 = vld [vmem:[%s767 + $0x210] sm:$0xff]
        %v835 = vld [vmem:[%s767 + $0x218] sm:$0xff]
        %v836 = vld [vmem:[%s767 + $0x220] sm:$0xff]
        %v837 = vld [vmem:[%s767 + $0x228] sm:$0xff]
        %v838 = vld [vmem:[%s767 + $0x230] sm:$0xff]
        %v839 = vld [vmem:[%s767 + $0x238] sm:$0xff]
        %v840 = vld [vmem:[%s767 + $0x240] sm:$0xff]
        %v841 = vld [vmem:[%s767 + $0x248] sm:$0xff]
        %v842 = vld [vmem:[%s767 + $0x250] sm:$0xff]
        %v843 = vld [vmem:[%s767 + $0x258] sm:$0xff]
        %v844 = vld [vmem:[%s767 + $0x260] sm:$0xff]
        %v845 = vld [vmem:[%s767 + $0x268] sm:$0xff]
        %v846 = vld [vmem:[%s767 + $0x270] sm:$0xff]
        %v847 = vld [vmem:[%s767 + $0x278] sm:$0xff]
        %v848 = vld [vmem:[%s767 + $0x280] sm:$0xff]
        %v849 = vld [vmem:[%s767 + $0x288] sm:$0xff]
        %v850 = vld [vmem:[%s767 + $0x290] sm:$0xff]
        %v851 = vld [vmem:[%s767 + $0x298] sm:$0xff]
        %v852 = vld [vmem:[%s767 + $0x2a0] sm:$0xff]
        %v853 = vld [vmem:[%s767 + $0x2a8] sm:$0xff]
        %v854 = vld [vmem:[%s767 + $0x2b0] sm:$0xff]
        %v855 = vld [vmem:[%s767 + $0x2b8] sm:$0xff]
        %v856 = vld [vmem:[%s767 + $0x2c0] sm:$0xff]
        %v857 = vld [vmem:[%s767 + $0x2c8] sm:$0xff]
        %v858 = vld [vmem:[%s767 + $0x2d0] sm:$0xff]
        %v859 = vld [vmem:[%s767 + $0x2d8] sm:$0xff]
        %v860 = vld [vmem:[%s767 + $0x2e0] sm:$0xff]
        %v861 = vld [vmem:[%s767 + $0x2e8] sm:$0xff]
        %v862 = vld [vmem:[%s767 + $0x2f0] sm:$0xff]
        %v863 = vld [vmem:[%s767 + $0x2f8] sm:$0xff]
        %v864 = vld [vmem:[%s767 + $0x300] sm:$0xff]
        %v865 = vld [vmem:[%s767 + $0x308] sm:$0xff]
        %v866 = vld [vmem:[%s767 + $0x310] sm:$0xff]
        %v867 = vld [vmem:[%s767 + $0x318] sm:$0xff]
        %v868 = vld [vmem:[%s767 + $0x320] sm:$0xff]
        %v869 = vld [vmem:[%s767 + $0x328] sm:$0xff]
        %v870 = vld [vmem:[%s767 + $0x330] sm:$0xff]
        %v871 = vld [vmem:[%s767 + $0x338] sm:$0xff]
        %v872 = vld [vmem:[%s767 + $0x340] sm:$0xff]
        %v873 = vld [vmem:[%s767 + $0x348] sm:$0xff]
        %v874 = vld [vmem:[%s767 + $0x350] sm:$0xff]
        %v875 = vld [vmem:[%s767 + $0x358] sm:$0xff]
        %v876 = vld [vmem:[%s767 + $0x360] sm:$0xff]
        %v877 = vld [vmem:[%s767 + $0x368] sm:$0xff]
        %v878 = vld [vmem:[%s767 + $0x370] sm:$0xff]
        %v879 = vld [vmem:[%s767 + $0x378] sm:$0xff]
        %v880 = vld [vmem:[%s767 + $0x380] sm:$0xff]
        %v881 = vld [vmem:[%s767 + $0x388] sm:$0xff]
        %v882 = vld [vmem:[%s767 + $0x390] sm:$0xff]
        %v883 = vld [vmem:[%s767 + $0x398] sm:$0xff]
        %v884 = vld [vmem:[%s767 + $0x3a0] sm:$0xff]
        %v885 = vld [vmem:[%s767 + $0x3a8] sm:$0xff]
        %v886 = vld [vmem:[%s767 + $0x3b0] sm:$0xff]
        %v887 = vld [vmem:[%s767 + $0x3b8] sm:$0xff]
        %v888 = vld [vmem:[%s767 + $0x3c0] sm:$0xff]
        %v889 = vld [vmem:[%s767 + $0x3c8] sm:$0xff]
        %v890 = vld [vmem:[%s767 + $0x3d0] sm:$0xff]
        %v891 = vld [vmem:[%s767 + $0x3d8] sm:$0xff]
        %v892 = vld [vmem:[%s767 + $0x3e0] sm:$0xff]
        %v893 = vld [vmem:[%s767 + $0x3e8] sm:$0xff]
        %v894 = vld [vmem:[%s767 + $0x3f0] sm:$0xff]
        %v895 = vld [vmem:[%s767 + $0x3f8] sm:$0xff]
        %v896 = vld [vmem:[%s767 + $0x400] sm:$0xff]
        %v897 = vld [vmem:[%s767 + $0x408] sm:$0xff]
        %v898 = vld [vmem:[%s767 + $0x410] sm:$0xff]
        %v899 = vld [vmem:[%s767 + $0x418] sm:$0xff]
        %v900 = vld [vmem:[%s767 + $0x420] sm:$0xff]
        %v901 = vld [vmem:[%s767 + $0x428] sm:$0xff]
        %v902 = vld [vmem:[%s767 + $0x430] sm:$0xff]
        %v903 = vld [vmem:[%s767 + $0x438] sm:$0xff]
        %v904 = vld [vmem:[%s767 + $0x440] sm:$0xff]
        %v905 = vld [vmem:[%s767 + $0x448] sm:$0xff]
        %v906 = vld [vmem:[%s767 + $0x450] sm:$0xff]
        %v907 = vld [vmem:[%s767 + $0x458] sm:$0xff]
        %v908 = vld [vmem:[%s767 + $0x460] sm:$0xff]
        %v909 = vld [vmem:[%s767 + $0x468] sm:$0xff]
        %v910 = vld [vmem:[%s767 + $0x470] sm:$0xff]
        %v911 = vld [vmem:[%s767 + $0x478] sm:$0xff]
        %v912 = vld [vmem:[%s767 + $0x480] sm:$0xff]
        %v913 = vld [vmem:[%s767 + $0x488] sm:$0xff]
        %v914 = vld [vmem:[%s767 + $0x490] sm:$0xff]
        %v915 = vld [vmem:[%s767 + $0x498] sm:$0xff]
        %v916 = vld [vmem:[%s767 + $0x4a0] sm:$0xff]
        %v917 = vld [vmem:[%s767 + $0x4a8] sm:$0xff]
        %v918 = vld [vmem:[%s767 + $0x4b0] sm:$0xff]
        %v919 = vld [vmem:[%s767 + $0x4b8] sm:$0xff]
        %v920 = vld [vmem:[%s767 + $0x4c0] sm:$0xff]
        %v921 = vld [vmem:[%s767 + $0x4c8] sm:$0xff]
        %v922 = vld [vmem:[%s767 + $0x4d0] sm:$0xff]
        %v923 = vld [vmem:[%s767 + $0x4d8] sm:$0xff]
        %v924 = vld [vmem:[%s767 + $0x4e0] sm:$0xff]
        %v925 = vld [vmem:[%s767 + $0x4e8] sm:$0xff]
        %v926 = vld [vmem:[%s767 + $0x4f0] sm:$0xff]
        %v927 = vld [vmem:[%s767 + $0x4f8] sm:$0xff]
        %v928 = vld [vmem:[%s767 + $0x500] sm:$0xff]
        %v929 = vld [vmem:[%s767 + $0x508] sm:$0xff]
        %v930 = vld [vmem:[%s767 + $0x510] sm:$0xff]
        %v931 = vld [vmem:[%s767 + $0x518] sm:$0xff]
        %v932 = vld [vmem:[%s767 + $0x520] sm:$0xff]
        %v933 = vld [vmem:[%s767 + $0x528] sm:$0xff]
        %v934 = vld [vmem:[%s767 + $0x530] sm:$0xff]
        %v935 = vld [vmem:[%s767 + $0x538] sm:$0xff]
        %v936 = vld [vmem:[%s767 + $0x540] sm:$0xff]
        %v937 = vld [vmem:[%s767 + $0x548] sm:$0xff]
        %v938 = vld [vmem:[%s767 + $0x550] sm:$0xff]
        %v939 = vld [vmem:[%s767 + $0x558] sm:$0xff]
        %v940 = vld [vmem:[%s767 + $0x560] sm:$0xff]
        %v941 = vld [vmem:[%s767 + $0x568] sm:$0xff]
        %v942 = vld [vmem:[%s767 + $0x570] sm:$0xff]
        %v943 = vld [vmem:[%s767 + $0x578] sm:$0xff]
        %v944 = vld [vmem:[%s767 + $0x580] sm:$0xff]
        %v945 = vld [vmem:[%s767 + $0x588] sm:$0xff]
        %v946 = vld [vmem:[%s767 + $0x590] sm:$0xff]
        %v947 = vld [vmem:[%s767 + $0x598] sm:$0xff]
        %v948 = vld [vmem:[%s767 + $0x5a0] sm:$0xff]
        %v949 = vld [vmem:[%s767 + $0x5a8] sm:$0xff]
        %v950 = vld [vmem:[%s767 + $0x5b0] sm:$0xff]
        %v951 = vld [vmem:[%s767 + $0x5b8] sm:$0xff]
        %v952 = vld [vmem:[%s767 + $0x5c0] sm:$0xff]
        %v953 = vld [vmem:[%s767 + $0x5c8] sm:$0xff]
        %v954 = vld [vmem:[%s767 + $0x5d0] sm:$0xff]
        %v955 = vld [vmem:[%s767 + $0x5d8] sm:$0xff]
        %v956 = vld [vmem:[%s767 + $0x5e0] sm:$0xff]
        %v957 = vld [vmem:[%s767 + $0x5e8] sm:$0xff]
        %v958 = vld [vmem:[%s767 + $0x5f0] sm:$0xff]
        %v959 = vld [vmem:[%s767 + $0x5f8] sm:$0xff]
        %v961 = vshrl.u32 %v761, 16
        %v963 = vshll.u32 %v761, 16
        %v965 = vrot.slane %v963, 1
        %v966 = vor.u32 %v961, %v965
        %v968 = vshrl.u32 %v762, 16
        %v970 = vshll.u32 %v762, 16
        %v972 = vrot.slane %v970, 1
        %v973 = vor.u32 %v968, %v972
        %v975 = vshrl.u32 %v763, 16
        %v977 = vshll.u32 %v763, 16
        %v979 = vrot.slane %v977, 1
        %v980 = vor.u32 %v975, %v979
        %v982 = vshrl.u32 %v764, 16
        %v984 = vshll.u32 %v764, 16
        %v986 = vrot.slane %v984, 1
        %v987 = vor.u32 %v982, %v986
        %v989 = vshrl.u32 %v765, 16
        %v991 = vshll.u32 %v765, 16
        %v993 = vrot.slane %v991, 1
        %v994 = vor.u32 %v989, %v993
        %v996 = vshrl.u32 %v766, 16
        %v998 = vshll.u32 %v766, 16
        %v1000 = vrot.slane %v998, 1
        %v1001 = vor.u32 %v996, %v1000
        %v1200 = vunpack.c.l.b16 %v768
        %v1201 = vunpack.c.h.b16 %v768
        %v1202 = vunpack.c.l.b16 %v769
        %v1203 = vunpack.c.h.b16 %v769
        %v1204 = vunpack.c.l.b16 %v770
        %v1205 = vunpack.c.h.b16 %v770
        %v1206 = vunpack.c.l.b16 %v771
        %v1207 = vunpack.c.h.b16 %v771
        %v1208 = vunpack.c.l.b16 %v772
        %v1209 = vunpack.c.h.b16 %v772
        %v1210 = vunpack.c.l.b16 %v773
        %v1211 = vunpack.c.h.b16 %v773
        %v1212 = vunpack.c.l.b16 %v774
        %v1213 = vunpack.c.h.b16 %v774
        %v1214 = vunpack.c.l.b16 %v775
        %v1215 = vunpack.c.h.b16 %v775
        %v1216 = vunpack.c.l.b16 %v776
        %v1217 = vunpack.c.h.b16 %v776
        %v1218 = vunpack.c.l.b16 %v777
        %v1219 = vunpack.c.h.b16 %v777
        %v1220 = vunpack.c.l.b16 %v778
        %v1221 = vunpack.c.h.b16 %v778
        %v1222 = vunpack.c.l.b16 %v779
        %v1223 = vunpack.c.h.b16 %v779
        %v1224 = vunpack.c.l.b16 %v780
        %v1225 = vunpack.c.h.b16 %v780
        %v1226 = vunpack.c.l.b16 %v781
        %v1227 = vunpack.c.h.b16 %v781
        %v1228 = vunpack.c.l.b16 %v782
        %v1229 = vunpack.c.h.b16 %v782
        %v1230 = vunpack.c.l.b16 %v783
        %v1231 = vunpack.c.h.b16 %v783
        %v1232 = vunpack.c.l.b16 %v784
        %v1233 = vunpack.c.h.b16 %v784
        %v1234 = vunpack.c.l.b16 %v785
        %v1235 = vunpack.c.h.b16 %v785
        %v1236 = vunpack.c.l.b16 %v786
        %v1237 = vunpack.c.h.b16 %v786
        %v1238 = vunpack.c.l.b16 %v787
        %v1239 = vunpack.c.h.b16 %v787
        %v1240 = vunpack.c.l.b16 %v788
        %v1241 = vunpack.c.h.b16 %v788
        %v1242 = vunpack.c.l.b16 %v789
        %v1243 = vunpack.c.h.b16 %v789
        %v1244 = vunpack.c.l.b16 %v790
        %v1245 = vunpack.c.h.b16 %v790
        %v1246 = vunpack.c.l.b16 %v791
        %v1247 = vunpack.c.h.b16 %v791
        %v1248 = vunpack.c.l.b16 %v792
        %v1249 = vunpack.c.h.b16 %v792
        %v1250 = vunpack.c.l.b16 %v793
        %v1251 = vunpack.c.h.b16 %v793
        %v1252 = vunpack.c.l.b16 %v794
        %v1253 = vunpack.c.h.b16 %v794
        %v1254 = vunpack.c.l.b16 %v795
        %v1255 = vunpack.c.h.b16 %v795
        %v1256 = vunpack.c.l.b16 %v796
        %v1257 = vunpack.c.h.b16 %v796
        %v1258 = vunpack.c.l.b16 %v797
        %v1259 = vunpack.c.h.b16 %v797
        %v1260 = vunpack.c.l.b16 %v798
        %v1261 = vunpack.c.h.b16 %v798
        %v1262 = vunpack.c.l.b16 %v799
        %v1263 = vunpack.c.h.b16 %v799
        %v1264 = vunpack.c.l.b16 %v800
        %v1265 = vunpack.c.h.b16 %v800
        %v1266 = vunpack.c.l.b16 %v801
        %v1267 = vunpack.c.h.b16 %v801
        %v1268 = vunpack.c.l.b16 %v802
        %v1269 = vunpack.c.h.b16 %v802
        %v1270 = vunpack.c.l.b16 %v803
        %v1271 = vunpack.c.h.b16 %v803
        %v1272 = vunpack.c.l.b16 %v804
        %v1273 = vunpack.c.h.b16 %v804
        %v1274 = vunpack.c.l.b16 %v805
        %v1275 = vunpack.c.h.b16 %v805
        %v1276 = vunpack.c.l.b16 %v806
        %v1277 = vunpack.c.h.b16 %v806
        %v1278 = vunpack.c.l.b16 %v807
        %v1279 = vunpack.c.h.b16 %v807
        %v1280 = vunpack.c.l.b16 %v808
        %v1281 = vunpack.c.h.b16 %v808
        %v1282 = vunpack.c.l.b16 %v809
        %v1283 = vunpack.c.h.b16 %v809
        %v1284 = vunpack.c.l.b16 %v810
        %v1285 = vunpack.c.h.b16 %v810
        %v1286 = vunpack.c.l.b16 %v811
        %v1287 = vunpack.c.h.b16 %v811
        %v1288 = vunpack.c.l.b16 %v812
        %v1289 = vunpack.c.h.b16 %v812
        %v1290 = vunpack.c.l.b16 %v813
        %v1291 = vunpack.c.h.b16 %v813
        %v1292 = vunpack.c.l.b16 %v814
        %v1293 = vunpack.c.h.b16 %v814
        %v1294 = vunpack.c.l.b16 %v815
        %v1295 = vunpack.c.h.b16 %v815
        %v1296 = vunpack.c.l.b16 %v816
        %v1297 = vunpack.c.h.b16 %v816
        %v1298 = vunpack.c.l.b16 %v817
        %v1299 = vunpack.c.h.b16 %v817
        %v1300 = vunpack.c.l.b16 %v818
        %v1301 = vunpack.c.h.b16 %v818
        %v1302 = vunpack.c.l.b16 %v819
        %v1303 = vunpack.c.h.b16 %v819
        %v1304 = vunpack.c.l.b16 %v820
        %v1305 = vunpack.c.h.b16 %v820
        %v1306 = vunpack.c.l.b16 %v821
        %v1307 = vunpack.c.h.b16 %v821
        %v1308 = vunpack.c.l.b16 %v822
        %v1309 = vunpack.c.h.b16 %v822
        %v1310 = vunpack.c.l.b16 %v823
        %v1311 = vunpack.c.h.b16 %v823
        %v1312 = vunpack.c.l.b16 %v824
        %v1313 = vunpack.c.h.b16 %v824
        %v1314 = vunpack.c.l.b16 %v825
        %v1315 = vunpack.c.h.b16 %v825
        %v1316 = vunpack.c.l.b16 %v826
        %v1317 = vunpack.c.h.b16 %v826
        %v1318 = vunpack.c.l.b16 %v827
        %v1319 = vunpack.c.h.b16 %v827
        %v1320 = vunpack.c.l.b16 %v828
        %v1321 = vunpack.c.h.b16 %v828
        %v1322 = vunpack.c.l.b16 %v829
        %v1323 = vunpack.c.h.b16 %v829
        %v1324 = vunpack.c.l.b16 %v830
        %v1325 = vunpack.c.h.b16 %v830
        %v1326 = vunpack.c.l.b16 %v831
        %v1327 = vunpack.c.h.b16 %v831
        %v1328 = vunpack.c.l.b16 %v832
        %v1329 = vunpack.c.h.b16 %v832
        %v1330 = vunpack.c.l.b16 %v833
        %v1331 = vunpack.c.h.b16 %v833
        %v1332 = vunpack.c.l.b16 %v834
        %v1333 = vunpack.c.h.b16 %v834
        %v1334 = vunpack.c.l.b16 %v835
        %v1335 = vunpack.c.h.b16 %v835
        %v1336 = vunpack.c.l.b16 %v836
        %v1337 = vunpack.c.h.b16 %v836
        %v1338 = vunpack.c.l.b16 %v837
        %v1339 = vunpack.c.h.b16 %v837
        %v1340 = vunpack.c.l.b16 %v838
        %v1341 = vunpack.c.h.b16 %v838
        %v1342 = vunpack.c.l.b16 %v839
        %v1343 = vunpack.c.h.b16 %v839
        %v1344 = vunpack.c.l.b16 %v840
        %v1345 = vunpack.c.h.b16 %v840
        %v1346 = vunpack.c.l.b16 %v841
        %v1347 = vunpack.c.h.b16 %v841
        %v1348 = vunpack.c.l.b16 %v842
        %v1349 = vunpack.c.h.b16 %v842
        %v1350 = vunpack.c.l.b16 %v843
        %v1351 = vunpack.c.h.b16 %v843
        %v1352 = vunpack.c.l.b16 %v844
        %v1353 = vunpack.c.h.b16 %v844
        %v1354 = vunpack.c.l.b16 %v845
        %v1355 = vunpack.c.h.b16 %v845
        %v1356 = vunpack.c.l.b16 %v846
        %v1357 = vunpack.c.h.b16 %v846
        %v1358 = vunpack.c.l.b16 %v847
        %v1359 = vunpack.c.h.b16 %v847
        %v1360 = vunpack.c.l.b16 %v848
        %v1361 = vunpack.c.h.b16 %v848
        %v1362 = vunpack.c.l.b16 %v849
        %v1363 = vunpack.c.h.b16 %v849
        %v1364 = vunpack.c.l.b16 %v850
        %v1365 = vunpack.c.h.b16 %v850
        %v1366 = vunpack.c.l.b16 %v851
        %v1367 = vunpack.c.h.b16 %v851
        %v1368 = vunpack.c.l.b16 %v852
        %v1369 = vunpack.c.h.b16 %v852
        %v1370 = vunpack.c.l.b16 %v853
        %v1371 = vunpack.c.h.b16 %v853
        %v1372 = vunpack.c.l.b16 %v854
        %v1373 = vunpack.c.h.b16 %v854
        %v1374 = vunpack.c.l.b16 %v855
        %v1375 = vunpack.c.h.b16 %v855
        %v1376 = vunpack.c.l.b16 %v856
        %v1377 = vunpack.c.h.b16 %v856
        %v1378 = vunpack.c.l.b16 %v857
        %v1379 = vunpack.c.h.b16 %v857
        %v1380 = vunpack.c.l.b16 %v858
        %v1381 = vunpack.c.h.b16 %v858
        %v1382 = vunpack.c.l.b16 %v859
        %v1383 = vunpack.c.h.b16 %v859
        %v1384 = vunpack.c.l.b16 %v860
        %v1385 = vunpack.c.h.b16 %v860
        %v1386 = vunpack.c.l.b16 %v861
        %v1387 = vunpack.c.h.b16 %v861
        %v1388 = vunpack.c.l.b16 %v862
        %v1389 = vunpack.c.h.b16 %v862
        %v1390 = vunpack.c.l.b16 %v863
        %v1391 = vunpack.c.h.b16 %v863
        %v1392 = vunpack.c.l.b16 %v864
        %v1393 = vunpack.c.h.b16 %v864
        %v1394 = vunpack.c.l.b16 %v865
        %v1395 = vunpack.c.h.b16 %v865
        %v1396 = vunpack.c.l.b16 %v866
        %v1397 = vunpack.c.h.b16 %v866
        %v1398 = vunpack.c.l.b16 %v867
        %v1399 = vunpack.c.h.b16 %v867
        %v1400 = vunpack.c.l.b16 %v868
        %v1401 = vunpack.c.h.b16 %v868
        %v1402 = vunpack.c.l.b16 %v869
        %v1403 = vunpack.c.h.b16 %v869
        %v1404 = vunpack.c.l.b16 %v870
        %v1405 = vunpack.c.h.b16 %v870
        %v1406 = vunpack.c.l.b16 %v871
        %v1407 = vunpack.c.h.b16 %v871
        %v1408 = vunpack.c.l.b16 %v872
        %v1409 = vunpack.c.h.b16 %v872
        %v1410 = vunpack.c.l.b16 %v873
        %v1411 = vunpack.c.h.b16 %v873
        %v1412 = vunpack.c.l.b16 %v874
        %v1413 = vunpack.c.h.b16 %v874
        %v1414 = vunpack.c.l.b16 %v875
        %v1415 = vunpack.c.h.b16 %v875
        %v1416 = vunpack.c.l.b16 %v876
        %v1417 = vunpack.c.h.b16 %v876
        %v1418 = vunpack.c.l.b16 %v877
        %v1419 = vunpack.c.h.b16 %v877
        %v1420 = vunpack.c.l.b16 %v878
        %v1421 = vunpack.c.h.b16 %v878
        %v1422 = vunpack.c.l.b16 %v879
        %v1423 = vunpack.c.h.b16 %v879
        %v1424 = vunpack.c.l.b16 %v880
        %v1425 = vunpack.c.h.b16 %v880
        %v1426 = vunpack.c.l.b16 %v881
        %v1427 = vunpack.c.h.b16 %v881
        %v1428 = vunpack.c.l.b16 %v882
        %v1429 = vunpack.c.h.b16 %v882
        %v1430 = vunpack.c.l.b16 %v883
        %v1431 = vunpack.c.h.b16 %v883
        %v1432 = vunpack.c.l.b16 %v884
        %v1433 = vunpack.c.h.b16 %v884
        %v1434 = vunpack.c.l.b16 %v885
        %v1435 = vunpack.c.h.b16 %v885
        %v1436 = vunpack.c.l.b16 %v886
        %v1437 = vunpack.c.h.b16 %v886
        %v1438 = vunpack.c.l.b16 %v887
        %v1439 = vunpack.c.h.b16 %v887
        %v1440 = vunpack.c.l.b16 %v888
        %v1441 = vunpack.c.h.b16 %v888
        %v1442 = vunpack.c.l.b16 %v889
        %v1443 = vunpack.c.h.b16 %v889
        %v1444 = vunpack.c.l.b16 %v890
        %v1445 = vunpack.c.h.b16 %v890
        %v1446 = vunpack.c.l.b16 %v891
        %v1447 = vunpack.c.h.b16 %v891
        %v1448 = vunpack.c.l.b16 %v892
        %v1449 = vunpack.c.h.b16 %v892
        %v1450 = vunpack.c.l.b16 %v893
        %v1451 = vunpack.c.h.b16 %v893
        %v1452 = vunpack.c.l.b16 %v894
        %v1453 = vunpack.c.h.b16 %v894
        %v1454 = vunpack.c.l.b16 %v895
        %v1455 = vunpack.c.h.b16 %v895
        %v1456 = vunpack.c.l.b16 %v896
        %v1457 = vunpack.c.h.b16 %v896
        %v1458 = vunpack.c.l.b16 %v897
        %v1459 = vunpack.c.h.b16 %v897
        %v1460 = vunpack.c.l.b16 %v898
        %v1461 = vunpack.c.h.b16 %v898
        %v1462 = vunpack.c.l.b16 %v899
        %v1463 = vunpack.c.h.b16 %v899
        %v1464 = vunpack.c.l.b16 %v900
        %v1465 = vunpack.c.h.b16 %v900
        %v1466 = vunpack.c.l.b16 %v901
        %v1467 = vunpack.c.h.b16 %v901
        %v1468 = vunpack.c.l.b16 %v902
        %v1469 = vunpack.c.h.b16 %v902
        %v1470 = vunpack.c.l.b16 %v903
        %v1471 = vunpack.c.h.b16 %v903
        %v1472 = vunpack.c.l.b16 %v904
        %v1473 = vunpack.c.h.b16 %v904
        %v1474 = vunpack.c.l.b16 %v905
        %v1475 = vunpack.c.h.b16 %v905
        %v1476 = vunpack.c.l.b16 %v906
        %v1477 = vunpack.c.h.b16 %v906
        %v1478 = vunpack.c.l.b16 %v907
        %v1479 = vunpack.c.h.b16 %v907
        %v1480 = vunpack.c.l.b16 %v908
        %v1481 = vunpack.c.h.b16 %v908
        %v1482 = vunpack.c.l.b16 %v909
        %v1483 = vunpack.c.h.b16 %v909
        %v1484 = vunpack.c.l.b16 %v910
        %v1485 = vunpack.c.h.b16 %v910
        %v1486 = vunpack.c.l.b16 %v911
        %v1487 = vunpack.c.h.b16 %v911
        %v1488 = vunpack.c.l.b16 %v912
        %v1489 = vunpack.c.h.b16 %v912
        %v1490 = vunpack.c.l.b16 %v913
        %v1491 = vunpack.c.h.b16 %v913
        %v1492 = vunpack.c.l.b16 %v914
        %v1493 = vunpack.c.h.b16 %v914
        %v1494 = vunpack.c.l.b16 %v915
        %v1495 = vunpack.c.h.b16 %v915
        %v1496 = vunpack.c.l.b16 %v916
        %v1497 = vunpack.c.h.b16 %v916
        %v1498 = vunpack.c.l.b16 %v917
        %v1499 = vunpack.c.h.b16 %v917
        %v1500 = vunpack.c.l.b16 %v918
        %v1501 = vunpack.c.h.b16 %v918
        %v1502 = vunpack.c.l.b16 %v919
        %v1503 = vunpack.c.h.b16 %v919
        %v1504 = vunpack.c.l.b16 %v920
        %v1505 = vunpack.c.h.b16 %v920
        %v1506 = vunpack.c.l.b16 %v921
        %v1507 = vunpack.c.h.b16 %v921
        %v1508 = vunpack.c.l.b16 %v922
        %v1509 = vunpack.c.h.b16 %v922
        %v1510 = vunpack.c.l.b16 %v923
        %v1511 = vunpack.c.h.b16 %v923
        %v1512 = vunpack.c.l.b16 %v924
        %v1513 = vunpack.c.h.b16 %v924
        %v1514 = vunpack.c.l.b16 %v925
        %v1515 = vunpack.c.h.b16 %v925
        %v1516 = vunpack.c.l.b16 %v926
        %v1517 = vunpack.c.h.b16 %v926
        %v1518 = vunpack.c.l.b16 %v927
        %v1519 = vunpack.c.h.b16 %v927
        %v1520 = vunpack.c.l.b16 %v928
        %v1521 = vunpack.c.h.b16 %v928
        %v1522 = vunpack.c.l.b16 %v929
        %v1523 = vunpack.c.h.b16 %v929
        %v1524 = vunpack.c.l.b16 %v930
        %v1525 = vunpack.c.h.b16 %v930
        %v1526 = vunpack.c.l.b16 %v931
        %v1527 = vunpack.c.h.b16 %v931
        %v1528 = vunpack.c.l.b16 %v932
        %v1529 = vunpack.c.h.b16 %v932
        %v1530 = vunpack.c.l.b16 %v933
        %v1531 = vunpack.c.h.b16 %v933
        %v1532 = vunpack.c.l.b16 %v934
        %v1533 = vunpack.c.h.b16 %v934
        %v1534 = vunpack.c.l.b16 %v935
        %v1535 = vunpack.c.h.b16 %v935
        %v1536 = vunpack.c.l.b16 %v936
        %v1537 = vunpack.c.h.b16 %v936
        %v1538 = vunpack.c.l.b16 %v937
        %v1539 = vunpack.c.h.b16 %v937
        %v1540 = vunpack.c.l.b16 %v938
        %v1541 = vunpack.c.h.b16 %v938
        %v1542 = vunpack.c.l.b16 %v939
        %v1543 = vunpack.c.h.b16 %v939
        %v1544 = vunpack.c.l.b16 %v940
        %v1545 = vunpack.c.h.b16 %v940
        %v1546 = vunpack.c.l.b16 %v941
        %v1547 = vunpack.c.h.b16 %v941
        %v1548 = vunpack.c.l.b16 %v942
        %v1549 = vunpack.c.h.b16 %v942
        %v1550 = vunpack.c.l.b16 %v943
        %v1551 = vunpack.c.h.b16 %v943
        %v1552 = vunpack.c.l.b16 %v944
        %v1553 = vunpack.c.h.b16 %v944
        %v1554 = vunpack.c.l.b16 %v945
        %v1555 = vunpack.c.h.b16 %v945
        %v1556 = vunpack.c.l.b16 %v946
        %v1557 = vunpack.c.h.b16 %v946
        %v1558 = vunpack.c.l.b16 %v947
        %v1559 = vunpack.c.h.b16 %v947
        %v1560 = vunpack.c.l.b16 %v948
        %v1561 = vunpack.c.h.b16 %v948
        %v1562 = vunpack.c.l.b16 %v949
        %v1563 = vunpack.c.h.b16 %v949
        %v1564 = vunpack.c.l.b16 %v950
        %v1565 = vunpack.c.h.b16 %v950
        %v1566 = vunpack.c.l.b16 %v951
        %v1567 = vunpack.c.h.b16 %v951
        %v1568 = vunpack.c.l.b16 %v952
        %v1569 = vunpack.c.h.b16 %v952
        %v1570 = vunpack.c.l.b16 %v953
        %v1571 = vunpack.c.h.b16 %v953
        %v1572 = vunpack.c.l.b16 %v954
        %v1573 = vunpack.c.h.b16 %v954
        %v1574 = vunpack.c.l.b16 %v955
        %v1575 = vunpack.c.h.b16 %v955
        %v1576 = vunpack.c.l.b16 %v956
        %v1577 = vunpack.c.h.b16 %v956
        %v1578 = vunpack.c.l.b16 %v957
        %v1579 = vunpack.c.h.b16 %v957
        %v1580 = vunpack.c.l.b16 %v958
        %v1581 = vunpack.c.h.b16 %v958
        %v1582 = vunpack.c.l.b16 %v959
        %v1583 = vunpack.c.h.b16 %v959
        %v1584 = vpack.c.b16 %v1204, %v1200
        %v1585 = vpack.c.b16 %v1205, %v1201
        %v1586 = vpack.c.b16 %v1206, %v1202
        %v1587 = vpack.c.b16 %v1207, %v1203
        %v1588 = vpack.c.b16 %v1212, %v1208
        %v1589 = vpack.c.b16 %v1213, %v1209
        %v1590 = vpack.c.b16 %v1214, %v1210
        %v1591 = vpack.c.b16 %v1215, %v1211
        %v1592 = vpack.c.b16 %v1220, %v1216
        %v1593 = vpack.c.b16 %v1221, %v1217
        %v1594 = vpack.c.b16 %v1222, %v1218
        %v1595 = vpack.c.b16 %v1223, %v1219
        %v1596 = vpack.c.b16 %v1228, %v1224
        %v1597 = vpack.c.b16 %v1229, %v1225
        %v1598 = vpack.c.b16 %v1230, %v1226
        %v1599 = vpack.c.b16 %v1231, %v1227
        %v1600 = vpack.c.b16 %v1236, %v1232
        %v1601 = vpack.c.b16 %v1237, %v1233
        %v1602 = vpack.c.b16 %v1238, %v1234
        %v1603 = vpack.c.b16 %v1239, %v1235
        %v1604 = vpack.c.b16 %v1244, %v1240
        %v1605 = vpack.c.b16 %v1245, %v1241
        %v1606 = vpack.c.b16 %v1246, %v1242
        %v1607 = vpack.c.b16 %v1247, %v1243
        %v1608 = vpack.c.b16 %v1252, %v1248
        %v1609 = vpack.c.b16 %v1253, %v1249
        %v1610 = vpack.c.b16 %v1254, %v1250
        %v1611 = vpack.c.b16 %v1255, %v1251
        %v1612 = vpack.c.b16 %v1260, %v1256
        %v1613 = vpack.c.b16 %v1261, %v1257
        %v1614 = vpack.c.b16 %v1262, %v1258
        %v1615 = vpack.c.b16 %v1263, %v1259
        %v1616 = vpack.c.b16 %v1268, %v1264
        %v1617 = vpack.c.b16 %v1269, %v1265
        %v1618 = vpack.c.b16 %v1270, %v1266
        %v1619 = vpack.c.b16 %v1271, %v1267
        %v1620 = vpack.c.b16 %v1276, %v1272
        %v1621 = vpack.c.b16 %v1277, %v1273
        %v1622 = vpack.c.b16 %v1278, %v1274
        %v1623 = vpack.c.b16 %v1279, %v1275
        %v1624 = vpack.c.b16 %v1284, %v1280
        %v1625 = vpack.c.b16 %v1285, %v1281
        %v1626 = vpack.c.b16 %v1286, %v1282
        %v1627 = vpack.c.b16 %v1287, %v1283
        %v1628 = vpack.c.b16 %v1292, %v1288
        %v1629 = vpack.c.b16 %v1293, %v1289
        %v1630 = vpack.c.b16 %v1294, %v1290
        %v1631 = vpack.c.b16 %v1295, %v1291
        %v1632 = vpack.c.b16 %v1300, %v1296
        %v1633 = vpack.c.b16 %v1301, %v1297
        %v1634 = vpack.c.b16 %v1302, %v1298
        %v1635 = vpack.c.b16 %v1303, %v1299
        %v1636 = vpack.c.b16 %v1308, %v1304
        %v1637 = vpack.c.b16 %v1309, %v1305
        %v1638 = vpack.c.b16 %v1310, %v1306
        %v1639 = vpack.c.b16 %v1311, %v1307
        %v1640 = vpack.c.b16 %v1316, %v1312
        %v1641 = vpack.c.b16 %v1317, %v1313
        %v1642 = vpack.c.b16 %v1318, %v1314
        %v1643 = vpack.c.b16 %v1319, %v1315
        %v1644 = vpack.c.b16 %v1324, %v1320
        %v1645 = vpack.c.b16 %v1325, %v1321
        %v1646 = vpack.c.b16 %v1326, %v1322
        %v1647 = vpack.c.b16 %v1327, %v1323
        %v1648 = vpack.c.b16 %v1332, %v1328
        %v1649 = vpack.c.b16 %v1333, %v1329
        %v1650 = vpack.c.b16 %v1334, %v1330
        %v1651 = vpack.c.b16 %v1335, %v1331
        %v1652 = vpack.c.b16 %v1340, %v1336
        %v1653 = vpack.c.b16 %v1341, %v1337
        %v1654 = vpack.c.b16 %v1342, %v1338
        %v1655 = vpack.c.b16 %v1343, %v1339
        %v1656 = vpack.c.b16 %v1348, %v1344
        %v1657 = vpack.c.b16 %v1349, %v1345
        %v1658 = vpack.c.b16 %v1350, %v1346
        %v1659 = vpack.c.b16 %v1351, %v1347
        %v1660 = vpack.c.b16 %v1356, %v1352
        %v1661 = vpack.c.b16 %v1357, %v1353
        %v1662 = vpack.c.b16 %v1358, %v1354
        %v1663 = vpack.c.b16 %v1359, %v1355
        %v1664 = vpack.c.b16 %v1364, %v1360
        %v1665 = vpack.c.b16 %v1365, %v1361
        %v1666 = vpack.c.b16 %v1366, %v1362
        %v1667 = vpack.c.b16 %v1367, %v1363
        %v1668 = vpack.c.b16 %v1372, %v1368
        %v1669 = vpack.c.b16 %v1373, %v1369
        %v1670 = vpack.c.b16 %v1374, %v1370
        %v1671 = vpack.c.b16 %v1375, %v1371
        %v1672 = vpack.c.b16 %v1380, %v1376
        %v1673 = vpack.c.b16 %v1381, %v1377
        %v1674 = vpack.c.b16 %v1382, %v1378
        %v1675 = vpack.c.b16 %v1383, %v1379
        %v1676 = vpack.c.b16 %v1388, %v1384
        %v1677 = vpack.c.b16 %v1389, %v1385
        %v1678 = vpack.c.b16 %v1390, %v1386
        %v1679 = vpack.c.b16 %v1391, %v1387
        %v1680 = vpack.c.b16 %v1396, %v1392
        %v1681 = vpack.c.b16 %v1397, %v1393
        %v1682 = vpack.c.b16 %v1398, %v1394
        %v1683 = vpack.c.b16 %v1399, %v1395
        %v1684 = vpack.c.b16 %v1404, %v1400
        %v1685 = vpack.c.b16 %v1405, %v1401
        %v1686 = vpack.c.b16 %v1406, %v1402
        %v1687 = vpack.c.b16 %v1407, %v1403
        %v1688 = vpack.c.b16 %v1412, %v1408
        %v1689 = vpack.c.b16 %v1413, %v1409
        %v1690 = vpack.c.b16 %v1414, %v1410
        %v1691 = vpack.c.b16 %v1415, %v1411
        %v1692 = vpack.c.b16 %v1420, %v1416
        %v1693 = vpack.c.b16 %v1421, %v1417
        %v1694 = vpack.c.b16 %v1422, %v1418
        %v1695 = vpack.c.b16 %v1423, %v1419
        %v1696 = vpack.c.b16 %v1428, %v1424
        %v1697 = vpack.c.b16 %v1429, %v1425
        %v1698 = vpack.c.b16 %v1430, %v1426
        %v1699 = vpack.c.b16 %v1431, %v1427
        %v1700 = vpack.c.b16 %v1436, %v1432
        %v1701 = vpack.c.b16 %v1437, %v1433
        %v1702 = vpack.c.b16 %v1438, %v1434
        %v1703 = vpack.c.b16 %v1439, %v1435
        %v1704 = vpack.c.b16 %v1444, %v1440
        %v1705 = vpack.c.b16 %v1445, %v1441
        %v1706 = vpack.c.b16 %v1446, %v1442
        %v1707 = vpack.c.b16 %v1447, %v1443
        %v1708 = vpack.c.b16 %v1452, %v1448
        %v1709 = vpack.c.b16 %v1453, %v1449
        %v1710 = vpack.c.b16 %v1454, %v1450
        %v1711 = vpack.c.b16 %v1455, %v1451
        %v1712 = vpack.c.b16 %v1460, %v1456
        %v1713 = vpack.c.b16 %v1461, %v1457
        %v1714 = vpack.c.b16 %v1462, %v1458
        %v1715 = vpack.c.b16 %v1463, %v1459
        %v1716 = vpack.c.b16 %v1468, %v1464
        %v1717 = vpack.c.b16 %v1469, %v1465
        %v1718 = vpack.c.b16 %v1470, %v1466
        %v1719 = vpack.c.b16 %v1471, %v1467
        %v1720 = vpack.c.b16 %v1476, %v1472
        %v1721 = vpack.c.b16 %v1477, %v1473
        %v1722 = vpack.c.b16 %v1478, %v1474
        %v1723 = vpack.c.b16 %v1479, %v1475
        %v1724 = vpack.c.b16 %v1484, %v1480
        %v1725 = vpack.c.b16 %v1485, %v1481
        %v1726 = vpack.c.b16 %v1486, %v1482
        %v1727 = vpack.c.b16 %v1487, %v1483
        %v1728 = vpack.c.b16 %v1492, %v1488
        %v1729 = vpack.c.b16 %v1493, %v1489
        %v1730 = vpack.c.b16 %v1494, %v1490
        %v1731 = vpack.c.b16 %v1495, %v1491
        %v1732 = vpack.c.b16 %v1500, %v1496
        %v1733 = vpack.c.b16 %v1501, %v1497
        %v1734 = vpack.c.b16 %v1502, %v1498
        %v1735 = vpack.c.b16 %v1503, %v1499
        %v1736 = vpack.c.b16 %v1508, %v1504
        %v1737 = vpack.c.b16 %v1509, %v1505
        %v1738 = vpack.c.b16 %v1510, %v1506
        %v1739 = vpack.c.b16 %v1511, %v1507
        %v1740 = vpack.c.b16 %v1516, %v1512
        %v1741 = vpack.c.b16 %v1517, %v1513
        %v1742 = vpack.c.b16 %v1518, %v1514
        %v1743 = vpack.c.b16 %v1519, %v1515
        %v1744 = vpack.c.b16 %v1524, %v1520
        %v1745 = vpack.c.b16 %v1525, %v1521
        %v1746 = vpack.c.b16 %v1526, %v1522
        %v1747 = vpack.c.b16 %v1527, %v1523
        %v1748 = vpack.c.b16 %v1532, %v1528
        %v1749 = vpack.c.b16 %v1533, %v1529
        %v1750 = vpack.c.b16 %v1534, %v1530
        %v1751 = vpack.c.b16 %v1535, %v1531
        %v1752 = vpack.c.b16 %v1540, %v1536
        %v1753 = vpack.c.b16 %v1541, %v1537
        %v1754 = vpack.c.b16 %v1542, %v1538
        %v1755 = vpack.c.b16 %v1543, %v1539
        %v1756 = vpack.c.b16 %v1548, %v1544
        %v1757 = vpack.c.b16 %v1549, %v1545
        %v1758 = vpack.c.b16 %v1550, %v1546
        %v1759 = vpack.c.b16 %v1551, %v1547
        %v1760 = vpack.c.b16 %v1556, %v1552
        %v1761 = vpack.c.b16 %v1557, %v1553
        %v1762 = vpack.c.b16 %v1558, %v1554
        %v1763 = vpack.c.b16 %v1559, %v1555
        %v1764 = vpack.c.b16 %v1564, %v1560
        %v1765 = vpack.c.b16 %v1565, %v1561
        %v1766 = vpack.c.b16 %v1566, %v1562
        %v1767 = vpack.c.b16 %v1567, %v1563
        %v1768 = vpack.c.b16 %v1572, %v1568
        %v1769 = vpack.c.b16 %v1573, %v1569
        %v1770 = vpack.c.b16 %v1574, %v1570
        %v1771 = vpack.c.b16 %v1575, %v1571
        %v1772 = vpack.c.b16 %v1580, %v1576
        %v1773 = vpack.c.b16 %v1581, %v1577
        %v1774 = vpack.c.b16 %v1582, %v1578
        %v1775 = vpack.c.b16 %v1583, %v1579
        %1968 = vmatprep.subr.bf16.mxu0 %v1585
        %1969 = vmatpush1.bf16.msra.mxu0 %v1584
        %1970 = vmatprep.subr.bf16.mxu0 %v1589
        %1971 = vmatpush1.bf16.msra.mxu0 %v1588
        %1972 = vmatprep.subr.bf16.mxu0 %v1593
        %1973 = vmatpush1.bf16.msra.mxu0 %v1592
        %1974 = vmatprep.subr.bf16.mxu0 %v1597
        %1975 = vmatpush1.bf16.msra.mxu0 %v1596
        %1976 = vmatprep.subr.bf16.mxu0 %v1601
        %1977 = vmatpush1.bf16.msra.mxu0 %v1600
        %1978 = vmatprep.subr.bf16.mxu0 %v1605
        %1979 = vmatpush1.bf16.msra.mxu0 %v1604
        %1980 = vmatprep.subr.bf16.mxu0 %v1609
        %1981 = vmatpush1.bf16.msra.mxu0 %v1608
        %1982 = vmatprep.subr.bf16.mxu0 %v1613
        %1983 = vmatpush1.bf16.msra.mxu0 %v1612
        %1984 = vmatprep.subr.bf16.mxu0 %v1617
        %1985 = vmatpush1.bf16.msra.mxu0 %v1616
        %1986 = vmatprep.subr.bf16.mxu0 %v1621
        %1987 = vmatpush1.bf16.msra.mxu0 %v1620
        %1988 = vmatprep.subr.bf16.mxu0 %v1625
        %1989 = vmatpush1.bf16.msra.mxu0 %v1624
        %1990 = vmatprep.subr.bf16.mxu0 %v1629
        %1991 = vmatpush1.bf16.msra.mxu0 %v1628
        %1992 = vmatprep.subr.bf16.mxu0 %v1633
        %1993 = vmatpush1.bf16.msra.mxu0 %v1632
        %1994 = vmatprep.subr.bf16.mxu0 %v1637
        %1995 = vmatpush1.bf16.msra.mxu0 %v1636
        %1996 = vmatprep.subr.bf16.mxu0 %v1641
        %1997 = vmatpush1.bf16.msra.mxu0 %v1640
        %1998 = vmatprep.subr.bf16.mxu0 %v1645
        %1999 = vmatpush1.bf16.msra.mxu0 %v1644
        %2000 = vmatprep.mubr.bf16.mxu0 %v973
        %2001 = vmatmul.mubr.bf16.gmra.mrb[0].mxu0 %v966
        %v2002 = vpop.f32.mrb[0].mxu0
        %v2003 = vadd.f32 0.0, %v2002
        %v2004 = vpop.f32.mrb[0].mxu0
        %v2005 = vadd.f32 0.0, %v2004
        %v2006 = vpop.f32.mrb[0].mxu0
        %v2007 = vpop.f32.mrb[0].mxu0
        %2008 = vdwg.mxu0
        %2009 = vmatprep.subr.bf16.mxu0 %v1649
        %2010 = vmatpush1.bf16.msra.mxu0 %v1648
        %2011 = vmatprep.subr.bf16.mxu0 %v1653
        %2012 = vmatpush1.bf16.msra.mxu0 %v1652
        %2013 = vmatprep.subr.bf16.mxu0 %v1657
        %2014 = vmatpush1.bf16.msra.mxu0 %v1656
        %2015 = vmatprep.subr.bf16.mxu0 %v1661
        %2016 = vmatpush1.bf16.msra.mxu0 %v1660
        %2017 = vmatprep.subr.bf16.mxu0 %v1665
        %2018 = vmatpush1.bf16.msra.mxu0 %v1664
        %2019 = vmatprep.subr.bf16.mxu0 %v1669
        %2020 = vmatpush1.bf16.msra.mxu0 %v1668
        %2021 = vmatprep.subr.bf16.mxu0 %v1673
        %2022 = vmatpush1.bf16.msra.mxu0 %v1672
        %2023 = vmatprep.subr.bf16.mxu0 %v1677
        %2024 = vmatpush1.bf16.msra.mxu0 %v1676
        %2025 = vmatprep.subr.bf16.mxu0 %v1681
        %2026 = vmatpush1.bf16.msra.mxu0 %v1680
        %2027 = vmatprep.subr.bf16.mxu0 %v1685
        %2028 = vmatpush1.bf16.msra.mxu0 %v1684
        %2029 = vmatprep.subr.bf16.mxu0 %v1689
        %2030 = vmatpush1.bf16.msra.mxu0 %v1688
        %2031 = vmatprep.subr.bf16.mxu0 %v1693
        %2032 = vmatpush1.bf16.msra.mxu0 %v1692
        %2033 = vmatprep.subr.bf16.mxu0 %v1697
        %2034 = vmatpush1.bf16.msra.mxu0 %v1696
        %2035 = vmatprep.subr.bf16.mxu0 %v1701
        %2036 = vmatpush1.bf16.msra.mxu0 %v1700
        %2037 = vmatprep.subr.bf16.mxu0 %v1705
        %2038 = vmatpush1.bf16.msra.mxu0 %v1704
        %2039 = vmatprep.subr.bf16.mxu0 %v1709
        %2040 = vmatpush1.bf16.msra.mxu0 %v1708
        %2041 = vmatprep.mubr.bf16.mxu0 %v987
        %2042 = vmatmul.mubr.bf16.gmra.mrb[0].mxu0 %v980
        %v2043 = vpop.f32.mrb[0].mxu0
        %v2044 = vadd.f32 %v2003, %v2043
        %v2045 = vpop.f32.mrb[0].mxu0
        %v2046 = vadd.f32 %v2005, %v2045
        %v2047 = vpop.f32.mrb[0].mxu0
        %v2048 = vpop.f32.mrb[0].mxu0
        %2049 = vdwg.mxu0
        %2050 = vmatprep.subr.bf16.mxu0 %v1713
        %2051 = vmatpush1.bf16.msra.mxu0 %v1712
        %2052 = vmatprep.subr.bf16.mxu0 %v1717
        %2053 = vmatpush1.bf16.msra.mxu0 %v1716
        %2054 = vmatprep.subr.bf16.mxu0 %v1721
        %2055 = vmatpush1.bf16.msra.mxu0 %v1720
        %2056 = vmatprep.subr.bf16.mxu0 %v1725
        %2057 = vmatpush1.bf16.msra.mxu0 %v1724
        %2058 = vmatprep.subr.bf16.mxu0 %v1729
        %2059 = vmatpush1.bf16.msra.mxu0 %v1728
        %2060 = vmatprep.subr.bf16.mxu0 %v1733
        %2061 = vmatpush1.bf16.msra.mxu0 %v1732
        %2062 = vmatprep.subr.bf16.mxu0 %v1737
        %2063 = vmatpush1.bf16.msra.mxu0 %v1736
        %2064 = vmatprep.subr.bf16.mxu0 %v1741
        %2065 = vmatpush1.bf16.msra.mxu0 %v1740
        %2066 = vmatprep.subr.bf16.mxu0 %v1745
        %2067 = vmatpush1.bf16.msra.mxu0 %v1744
        %2068 = vmatprep.subr.bf16.mxu0 %v1749
        %2069 = vmatpush1.bf16.msra.mxu0 %v1748
        %2070 = vmatprep.subr.bf16.mxu0 %v1753
        %2071 = vmatpush1.bf16.msra.mxu0 %v1752
        %2072 = vmatprep.subr.bf16.mxu0 %v1757
        %2073 = vmatpush1.bf16.msra.mxu0 %v1756
        %2074 = vmatprep.subr.bf16.mxu0 %v1761
        %2075 = vmatpush1.bf16.msra.mxu0 %v1760
        %2076 = vmatprep.subr.bf16.mxu0 %v1765
        %2077 = vmatpush1.bf16.msra.mxu0 %v1764
        %2078 = vmatprep.subr.bf16.mxu0 %v1769
        %2079 = vmatpush1.bf16.msra.mxu0 %v1768
        %2080 = vmatprep.subr.bf16.mxu0 %v1773
        %2081 = vmatpush1.bf16.msra.mxu0 %v1772
        %2082 = vmatprep.mubr.bf16.mxu0 %v1001
        %2083 = vmatmul.mubr.bf16.gmra.mrb[0].mxu0 %v994
        %v2084 = vpop.f32.mrb[0].mxu0
        %v2085 = vadd.f32 %v2044, %v2084
        %v2086 = vpop.f32.mrb[0].mxu0
        %v2087 = vadd.f32 %v2046, %v2086
        %v2088 = vpop.f32.mrb[0].mxu0
        %v2089 = vpop.f32.mrb[0].mxu0
        %2090 = vdwg.mxu0
        %2091 = vmatprep.subr.bf16.mxu0 %v1587
        %2092 = vmatpush1.bf16.msra.mxu0 %v1586
        %2093 = vmatprep.subr.bf16.mxu0 %v1591
        %2094 = vmatpush1.bf16.msra.mxu0 %v1590
        %2095 = vmatprep.subr.bf16.mxu0 %v1595
        %2096 = vmatpush1.bf16.msra.mxu0 %v1594
        %2097 = vmatprep.subr.bf16.mxu0 %v1599
        %2098 = vmatpush1.bf16.msra.mxu0 %v1598
        %2099 = vmatprep.subr.bf16.mxu0 %v1603
        %2100 = vmatpush1.bf16.msra.mxu0 %v1602
        %2101 = vmatprep.subr.bf16.mxu0 %v1607
        %2102 = vmatpush1.bf16.msra.mxu0 %v1606
        %2103 = vmatprep.subr.bf16.mxu0 %v1611
        %2104 = vmatpush1.bf16.msra.mxu0 %v1610
        %2105 = vmatprep.subr.bf16.mxu0 %v1615
        %2106 = vmatpush1.bf16.msra.mxu0 %v1614
        %2107 = vmatprep.subr.bf16.mxu0 %v1619
        %2108 = vmatpush1.bf16.msra.mxu0 %v1618
        %2109 = vmatprep.subr.bf16.mxu0 %v1623
        %2110 = vmatpush1.bf16.msra.mxu0 %v1622
        %2111 = vmatprep.subr.bf16.mxu0 %v1627
        %2112 = vmatpush1.bf16.msra.mxu0 %v1626
        %2113 = vmatprep.subr.bf16.mxu0 %v1631
        %2114 = vmatpush1.bf16.msra.mxu0 %v1630
        %2115 = vmatprep.subr.bf16.mxu0 %v1635
        %2116 = vmatpush1.bf16.msra.mxu0 %v1634
        %2117 = vmatprep.subr.bf16.mxu0 %v1639
        %2118 = vmatpush1.bf16.msra.mxu0 %v1638
        %2119 = vmatprep.subr.bf16.mxu0 %v1643
        %2120 = vmatpush1.bf16.msra.mxu0 %v1642
        %2121 = vmatprep.subr.bf16.mxu0 %v1647
        %2122 = vmatpush1.bf16.msra.mxu0 %v1646
        %2123 = vmatprep.mubr.bf16.mxu0 %v973
        %2124 = vmatmul.mubr.bf16.gmra.mrb[0].mxu0 %v966
        %v2125 = vpop.f32.mrb[0].mxu0
        %v2126 = vadd.f32 0.0, %v2125
        %v2127 = vpop.f32.mrb[0].mxu0
        %v2128 = vadd.f32 0.0, %v2127
        %v2129 = vpop.f32.mrb[0].mxu0
        %v2130 = vpop.f32.mrb[0].mxu0
        %2131 = vdwg.mxu0
        %2132 = vmatprep.subr.bf16.mxu0 %v1651
        %2133 = vmatpush1.bf16.msra.mxu0 %v1650
        %2134 = vmatprep.subr.bf16.mxu0 %v1655
        %2135 = vmatpush1.bf16.msra.mxu0 %v1654
        %2136 = vmatprep.subr.bf16.mxu0 %v1659
        %2137 = vmatpush1.bf16.msra.mxu0 %v1658
        %2138 = vmatprep.subr.bf16.mxu0 %v1663
        %2139 = vmatpush1.bf16.msra.mxu0 %v1662
        %2140 = vmatprep.subr.bf16.mxu0 %v1667
        %2141 = vmatpush1.bf16.msra.mxu0 %v1666
        %2142 = vmatprep.subr.bf16.mxu0 %v1671
        %2143 = vmatpush1.bf16.msra.mxu0 %v1670
        %2144 = vmatprep.subr.bf16.mxu0 %v1675
        %2145 = vmatpush1.bf16.msra.mxu0 %v1674
        %2146 = vmatprep.subr.bf16.mxu0 %v1679
        %2147 = vmatpush1.bf16.msra.mxu0 %v1678
        %2148 = vmatprep.subr.bf16.mxu0 %v1683
        %2149 = vmatpush1.bf16.msra.mxu0 %v1682
        %2150 = vmatprep.subr.bf16.mxu0 %v1687
        %2151 = vmatpush1.bf16.msra.mxu0 %v1686
        %2152 = vmatprep.subr.bf16.mxu0 %v1691
        %2153 = vmatpush1.bf16.msra.mxu0 %v1690
        %2154 = vmatprep.subr.bf16.mxu0 %v1695
        %2155 = vmatpush1.bf16.msra.mxu0 %v1694
        %2156 = vmatprep.subr.bf16.mxu0 %v1699
        %2157 = vmatpush1.bf16.msra.mxu0 %v1698
        %2158 = vmatprep.subr.bf16.mxu0 %v1703
        %2159 = vmatpush1.bf16.msra.mxu0 %v1702
        %2160 = vmatprep.subr.bf16.mxu0 %v1707
        %2161 = vmatpush1.bf16.msra.mxu0 %v1706
        %2162 = vmatprep.subr.bf16.mxu0 %v1711
        %2163 = vmatpush1.bf16.msra.mxu0 %v1710
        %2164 = vmatprep.mubr.bf16.mxu0 %v987
        %2165 = vmatmul.mubr.bf16.gmra.mrb[0].mxu0 %v980
        %v2166 = vpop.f32.mrb[0].mxu0
        %v2167 = vadd.f32 %v2126, %v2166
        %v2168 = vpop.f32.mrb[0].mxu0
        %v2169 = vadd.f32 %v2128, %v2168
        %v2170 = vpop.f32.mrb[0].mxu0
        %v2171 = vpop.f32.mrb[0].mxu0
        %2172 = vdwg.mxu0
        %2173 = vmatprep.subr.bf16.mxu0 %v1715
        %2174 = vmatpush1.bf16.msra.mxu0 %v1714
        %2175 = vmatprep.subr.bf16.mxu0 %v1719
        %2176 = vmatpush1.bf16.msra.mxu0 %v1718
        %2177 = vmatprep.subr.bf16.mxu0 %v1723
        %2178 = vmatpush1.bf16.msra.mxu0 %v1722
        %2179 = vmatprep.subr.bf16.mxu0 %v1727
        %2180 = vmatpush1.bf16.msra.mxu0 %v1726
        %2181 = vmatprep.subr.bf16.mxu0 %v1731
        %2182 = vmatpush1.bf16.msra.mxu0 %v1730
        %2183 = vmatprep.subr.bf16.mxu0 %v1735
        %2184 = vmatpush1.bf16.msra.mxu0 %v1734
        %2185 = vmatprep.subr.bf16.mxu0 %v1739
        %2186 = vmatpush1.bf16.msra.mxu0 %v1738
        %2187 = vmatprep.subr.bf16.mxu0 %v1743
        %2188 = vmatpush1.bf16.msra.mxu0 %v1742
        %2189 = vmatprep.subr.bf16.mxu0 %v1747
        %2190 = vmatpush1.bf16.msra.mxu0 %v1746
        %2191 = vmatprep.subr.bf16.mxu0 %v1751
        %2192 = vmatpush1.bf16.msra.mxu0 %v1750
        %2193 = vmatprep.subr.bf16.mxu0 %v1755
        %2194 = vmatpush1.bf16.msra.mxu0 %v1754
        %2195 = vmatprep.subr.bf16.mxu0 %v1759
        %2196 = vmatpush1.bf16.msra.mxu0 %v1758
        %2197 = vmatprep.subr.bf16.mxu0 %v1763
        %2198 = vmatpush1.bf16.msra.mxu0 %v1762
        %2199 = vmatprep.subr.bf16.mxu0 %v1767
        %2200 = vmatpush1.bf16.msra.mxu0 %v1766
        %2201 = vmatprep.subr.bf16.mxu0 %v1771
        %2202 = vmatpush1.bf16.msra.mxu0 %v1770
        %2203 = vmatprep.subr.bf16.mxu0 %v1775
        %2204 = vmatpush1.bf16.msra.mxu0 %v1774
        %2205 = vmatprep.mubr.bf16.mxu0 %v1001
        %2206 = vmatmul.mubr.bf16.gmra.mrb[0].mxu0 %v994
        %v2207 = vpop.f32.mrb[0].mxu0
        %v2208 = vadd.f32 %v2167, %v2207
        %v2209 = vpop.f32.mrb[0].mxu0
        %v2210 = vadd.f32 %v2169, %v2209
        %v2211 = vpop.f32.mrb[0].mxu0
        %v2212 = vpop.f32.mrb[0].mxu0
        %2213 = vdwg.mxu0
        %v2406 = vunpack.c.l.b16 %v563
        %v2407 = vunpack.c.h.b16 %v563
        %v2408 = vunpack.c.l.b16 %v564
        %v2409 = vunpack.c.h.b16 %v564
        %v2410 = vunpack.c.l.b16 %v565
        %v2411 = vunpack.c.h.b16 %v565
        %v2412 = vunpack.c.l.b16 %v566
        %v2413 = vunpack.c.h.b16 %v566
        %v2414 = vunpack.c.l.b16 %v567
        %v2415 = vunpack.c.h.b16 %v567
        %v2416 = vunpack.c.l.b16 %v568
        %v2417 = vunpack.c.h.b16 %v568
        %v2418 = vunpack.c.l.b16 %v569
        %v2419 = vunpack.c.h.b16 %v569
        %v2420 = vunpack.c.l.b16 %v570
        %v2421 = vunpack.c.h.b16 %v570
        %v2422 = vunpack.c.l.b16 %v571
        %v2423 = vunpack.c.h.b16 %v571
        %v2424 = vunpack.c.l.b16 %v572
        %v2425 = vunpack.c.h.b16 %v572
        %v2426 = vunpack.c.l.b16 %v573
        %v2427 = vunpack.c.h.b16 %v573
        %v2428 = vunpack.c.l.b16 %v574
        %v2429 = vunpack.c.h.b16 %v574
        %v2430 = vunpack.c.l.b16 %v575
        %v2431 = vunpack.c.h.b16 %v575
        %v2432 = vunpack.c.l.b16 %v576
        %v2433 = vunpack.c.h.b16 %v576
        %v2434 = vunpack.c.l.b16 %v577
        %v2435 = vunpack.c.h.b16 %v577
        %v2436 = vunpack.c.l.b16 %v578
        %v2437 = vunpack.c.h.b16 %v578
        %v2438 = vunpack.c.l.b16 %v579
        %v2439 = vunpack.c.h.b16 %v579
        %v2440 = vunpack.c.l.b16 %v580
        %v2441 = vunpack.c.h.b16 %v580
        %v2442 = vunpack.c.l.b16 %v581
        %v2443 = vunpack.c.h.b16 %v581
        %v2444 = vunpack.c.l.b16 %v582
        %v2445 = vunpack.c.h.b16 %v582
        %v2446 = vunpack.c.l.b16 %v583
        %v2447 = vunpack.c.h.b16 %v583
        %v2448 = vunpack.c.l.b16 %v584
        %v2449 = vunpack.c.h.b16 %v584
        %v2450 = vunpack.c.l.b16 %v585
        %v2451 = vunpack.c.h.b16 %v585
        %v2452 = vunpack.c.l.b16 %v586
        %v2453 = vunpack.c.h.b16 %v586
        %v2454 = vunpack.c.l.b16 %v587
        %v2455 = vunpack.c.h.b16 %v587
        %v2456 = vunpack.c.l.b16 %v588
        %v2457 = vunpack.c.h.b16 %v588
        %v2458 = vunpack.c.l.b16 %v589
        %v2459 = vunpack.c.h.b16 %v589
        %v2460 = vunpack.c.l.b16 %v590
        %v2461 = vunpack.c.h.b16 %v590
        %v2462 = vunpack.c.l.b16 %v591
        %v2463 = vunpack.c.h.b16 %v591
        %v2464 = vunpack.c.l.b16 %v592
        %v2465 = vunpack.c.h.b16 %v592
        %v2466 = vunpack.c.l.b16 %v593
        %v2467 = vunpack.c.h.b16 %v593
        %v2468 = vunpack.c.l.b16 %v594
        %v2469 = vunpack.c.h.b16 %v594
        %v2470 = vunpack.c.l.b16 %v595
        %v2471 = vunpack.c.h.b16 %v595
        %v2472 = vunpack.c.l.b16 %v596
        %v2473 = vunpack.c.h.b16 %v596
        %v2474 = vunpack.c.l.b16 %v597
        %v2475 = vunpack.c.h.b16 %v597
        %v2476 = vunpack.c.l.b16 %v598
        %v2477 = vunpack.c.h.b16 %v598
        %v2478 = vunpack.c.l.b16 %v599
        %v2479 = vunpack.c.h.b16 %v599
        %v2480 = vunpack.c.l.b16 %v600
        %v2481 = vunpack.c.h.b16 %v600
        %v2482 = vunpack.c.l.b16 %v601
        %v2483 = vunpack.c.h.b16 %v601
        %v2484 = vunpack.c.l.b16 %v602
        %v2485 = vunpack.c.h.b16 %v602
        %v2486 = vunpack.c.l.b16 %v603
        %v2487 = vunpack.c.h.b16 %v603
        %v2488 = vunpack.c.l.b16 %v604
        %v2489 = vunpack.c.h.b16 %v604
        %v2490 = vunpack.c.l.b16 %v605
        %v2491 = vunpack.c.h.b16 %v605
        %v2492 = vunpack.c.l.b16 %v606
        %v2493 = vunpack.c.h.b16 %v606
        %v2494 = vunpack.c.l.b16 %v607
        %v2495 = vunpack.c.h.b16 %v607
        %v2496 = vunpack.c.l.b16 %v608
        %v2497 = vunpack.c.h.b16 %v608
        %v2498 = vunpack.c.l.b16 %v609
        %v2499 = vunpack.c.h.b16 %v609
        %v2500 = vunpack.c.l.b16 %v610
        %v2501 = vunpack.c.h.b16 %v610
        %v2502 = vunpack.c.l.b16 %v611
        %v2503 = vunpack.c.h.b16 %v611
        %v2504 = vunpack.c.l.b16 %v612
        %v2505 = vunpack.c.h.b16 %v612
        %v2506 = vunpack.c.l.b16 %v613
        %v2507 = vunpack.c.h.b16 %v613
        %v2508 = vunpack.c.l.b16 %v614
        %v2509 = vunpack.c.h.b16 %v614
        %v2510 = vunpack.c.l.b16 %v615
        %v2511 = vunpack.c.h.b16 %v615
        %v2512 = vunpack.c.l.b16 %v616
        %v2513 = vunpack.c.h.b16 %v616
        %v2514 = vunpack.c.l.b16 %v617
        %v2515 = vunpack.c.h.b16 %v617
        %v2516 = vunpack.c.l.b16 %v618
        %v2517 = vunpack.c.h.b16 %v618
        %v2518 = vunpack.c.l.b16 %v619
        %v2519 = vunpack.c.h.b16 %v619
        %v2520 = vunpack.c.l.b16 %v620
        %v2521 = vunpack.c.h.b16 %v620
        %v2522 = vunpack.c.l.b16 %v621
        %v2523 = vunpack.c.h.b16 %v621
        %v2524 = vunpack.c.l.b16 %v622
        %v2525 = vunpack.c.h.b16 %v622
        %v2526 = vunpack.c.l.b16 %v623
        %v2527 = vunpack.c.h.b16 %v623
        %v2528 = vunpack.c.l.b16 %v624
        %v2529 = vunpack.c.h.b16 %v624
        %v2530 = vunpack.c.l.b16 %v625
        %v2531 = vunpack.c.h.b16 %v625
        %v2532 = vunpack.c.l.b16 %v626
        %v2533 = vunpack.c.h.b16 %v626
        %v2534 = vunpack.c.l.b16 %v627
        %v2535 = vunpack.c.h.b16 %v627
        %v2536 = vunpack.c.l.b16 %v628
        %v2537 = vunpack.c.h.b16 %v628
        %v2538 = vunpack.c.l.b16 %v629
        %v2539 = vunpack.c.h.b16 %v629
        %v2540 = vunpack.c.l.b16 %v630
        %v2541 = vunpack.c.h.b16 %v630
        %v2542 = vunpack.c.l.b16 %v631
        %v2543 = vunpack.c.h.b16 %v631
        %v2544 = vunpack.c.l.b16 %v632
        %v2545 = vunpack.c.h.b16 %v632
        %v2546 = vunpack.c.l.b16 %v633
        %v2547 = vunpack.c.h.b16 %v633
        %v2548 = vunpack.c.l.b16 %v634
        %v2549 = vunpack.c.h.b16 %v634
        %v2550 = vunpack.c.l.b16 %v635
        %v2551 = vunpack.c.h.b16 %v635
        %v2552 = vunpack.c.l.b16 %v636
        %v2553 = vunpack.c.h.b16 %v636
        %v2554 = vunpack.c.l.b16 %v637
        %v2555 = vunpack.c.h.b16 %v637
        %v2556 = vunpack.c.l.b16 %v638
        %v2557 = vunpack.c.h.b16 %v638
        %v2558 = vunpack.c.l.b16 %v639
        %v2559 = vunpack.c.h.b16 %v639
        %v2560 = vunpack.c.l.b16 %v640
        %v2561 = vunpack.c.h.b16 %v640
        %v2562 = vunpack.c.l.b16 %v641
        %v2563 = vunpack.c.h.b16 %v641
        %v2564 = vunpack.c.l.b16 %v642
        %v2565 = vunpack.c.h.b16 %v642
        %v2566 = vunpack.c.l.b16 %v643
        %v2567 = vunpack.c.h.b16 %v643
        %v2568 = vunpack.c.l.b16 %v644
        %v2569 = vunpack.c.h.b16 %v644
        %v2570 = vunpack.c.l.b16 %v645
        %v2571 = vunpack.c.h.b16 %v645
        %v2572 = vunpack.c.l.b16 %v646
        %v2573 = vunpack.c.h.b16 %v646
        %v2574 = vunpack.c.l.b16 %v647
        %v2575 = vunpack.c.h.b16 %v647
        %v2576 = vunpack.c.l.b16 %v648
        %v2577 = vunpack.c.h.b16 %v648
        %v2578 = vunpack.c.l.b16 %v649
        %v2579 = vunpack.c.h.b16 %v649
        %v2580 = vunpack.c.l.b16 %v650
        %v2581 = vunpack.c.h.b16 %v650
        %v2582 = vunpack.c.l.b16 %v651
        %v2583 = vunpack.c.h.b16 %v651
        %v2584 = vunpack.c.l.b16 %v652
        %v2585 = vunpack.c.h.b16 %v652
        %v2586 = vunpack.c.l.b16 %v653
        %v2587 = vunpack.c.h.b16 %v653
        %v2588 = vunpack.c.l.b16 %v654
        %v2589 = vunpack.c.h.b16 %v654
        %v2590 = vunpack.c.l.b16 %v655
        %v2591 = vunpack.c.h.b16 %v655
        %v2592 = vunpack.c.l.b16 %v656
        %v2593 = vunpack.c.h.b16 %v656
        %v2594 = vunpack.c.l.b16 %v657
        %v2595 = vunpack.c.h.b16 %v657
        %v2596 = vunpack.c.l.b16 %v658
        %v2597 = vunpack.c.h.b16 %v658
        %v2598 = vunpack.c.l.b16 %v659
        %v2599 = vunpack.c.h.b16 %v659
        %v2600 = vunpack.c.l.b16 %v660
        %v2601 = vunpack.c.h.b16 %v660
        %v2602 = vunpack.c.l.b16 %v661
        %v2603 = vunpack.c.h.b16 %v661
        %v2604 = vunpack.c.l.b16 %v662
        %v2605 = vunpack.c.h.b16 %v662
        %v2606 = vunpack.c.l.b16 %v663
        %v2607 = vunpack.c.h.b16 %v663
        %v2608 = vunpack.c.l.b16 %v664
        %v2609 = vunpack.c.h.b16 %v664
        %v2610 = vunpack.c.l.b16 %v665
        %v2611 = vunpack.c.h.b16 %v665
        %v2612 = vunpack.c.l.b16 %v666
        %v2613 = vunpack.c.h.b16 %v666
        %v2614 = vunpack.c.l.b16 %v667
        %v2615 = vunpack.c.h.b16 %v667
        %v2616 = vunpack.c.l.b16 %v668
        %v2617 = vunpack.c.h.b16 %v668
        %v2618 = vunpack.c.l.b16 %v669
        %v2619 = vunpack.c.h.b16 %v669
        %v2620 = vunpack.c.l.b16 %v670
        %v2621 = vunpack.c.h.b16 %v670
        %v2622 = vunpack.c.l.b16 %v671
        %v2623 = vunpack.c.h.b16 %v671
        %v2624 = vunpack.c.l.b16 %v672
        %v2625 = vunpack.c.h.b16 %v672
        %v2626 = vunpack.c.l.b16 %v673
        %v2627 = vunpack.c.h.b16 %v673
        %v2628 = vunpack.c.l.b16 %v674
        %v2629 = vunpack.c.h.b16 %v674
        %v2630 = vunpack.c.l.b16 %v675
        %v2631 = vunpack.c.h.b16 %v675
        %v2632 = vunpack.c.l.b16 %v676
        %v2633 = vunpack.c.h.b16 %v676
        %v2634 = vunpack.c.l.b16 %v677
        %v2635 = vunpack.c.h.b16 %v677
        %v2636 = vunpack.c.l.b16 %v678
        %v2637 = vunpack.c.h.b16 %v678
        %v2638 = vunpack.c.l.b16 %v679
        %v2639 = vunpack.c.h.b16 %v679
        %v2640 = vunpack.c.l.b16 %v680
        %v2641 = vunpack.c.h.b16 %v680
        %v2642 = vunpack.c.l.b16 %v681
        %v2643 = vunpack.c.h.b16 %v681
        %v2644 = vunpack.c.l.b16 %v682
        %v2645 = vunpack.c.h.b16 %v682
        %v2646 = vunpack.c.l.b16 %v683
        %v2647 = vunpack.c.h.b16 %v683
        %v2648 = vunpack.c.l.b16 %v684
        %v2649 = vunpack.c.h.b16 %v684
        %v2650 = vunpack.c.l.b16 %v685
        %v2651 = vunpack.c.h.b16 %v685
        %v2652 = vunpack.c.l.b16 %v686
        %v2653 = vunpack.c.h.b16 %v686
        %v2654 = vunpack.c.l.b16 %v687
        %v2655 = vunpack.c.h.b16 %v687
        %v2656 = vunpack.c.l.b16 %v688
        %v2657 = vunpack.c.h.b16 %v688
        %v2658 = vunpack.c.l.b16 %v689
        %v2659 = vunpack.c.h.b16 %v689
        %v2660 = vunpack.c.l.b16 %v690
        %v2661 = vunpack.c.h.b16 %v690
        %v2662 = vunpack.c.l.b16 %v691
        %v2663 = vunpack.c.h.b16 %v691
        %v2664 = vunpack.c.l.b16 %v692
        %v2665 = vunpack.c.h.b16 %v692
        %v2666 = vunpack.c.l.b16 %v693
        %v2667 = vunpack.c.h.b16 %v693
        %v2668 = vunpack.c.l.b16 %v694
        %v2669 = vunpack.c.h.b16 %v694
        %v2670 = vunpack.c.l.b16 %v695
        %v2671 = vunpack.c.h.b16 %v695
        %v2672 = vunpack.c.l.b16 %v696
        %v2673 = vunpack.c.h.b16 %v696
        %v2674 = vunpack.c.l.b16 %v697
        %v2675 = vunpack.c.h.b16 %v697
        %v2676 = vunpack.c.l.b16 %v698
        %v2677 = vunpack.c.h.b16 %v698
        %v2678 = vunpack.c.l.b16 %v699
        %v2679 = vunpack.c.h.b16 %v699
        %v2680 = vunpack.c.l.b16 %v700
        %v2681 = vunpack.c.h.b16 %v700
        %v2682 = vunpack.c.l.b16 %v701
        %v2683 = vunpack.c.h.b16 %v701
        %v2684 = vunpack.c.l.b16 %v702
        %v2685 = vunpack.c.h.b16 %v702
        %v2686 = vunpack.c.l.b16 %v703
        %v2687 = vunpack.c.h.b16 %v703
        %v2688 = vunpack.c.l.b16 %v704
        %v2689 = vunpack.c.h.b16 %v704
        %v2690 = vunpack.c.l.b16 %v705
        %v2691 = vunpack.c.h.b16 %v705
        %v2692 = vunpack.c.l.b16 %v706
        %v2693 = vunpack.c.h.b16 %v706
        %v2694 = vunpack.c.l.b16 %v707
        %v2695 = vunpack.c.h.b16 %v707
        %v2696 = vunpack.c.l.b16 %v708
        %v2697 = vunpack.c.h.b16 %v708
        %v2698 = vunpack.c.l.b16 %v709
        %v2699 = vunpack.c.h.b16 %v709
        %v2700 = vunpack.c.l.b16 %v710
        %v2701 = vunpack.c.h.b16 %v710
        %v2702 = vunpack.c.l.b16 %v711
        %v2703 = vunpack.c.h.b16 %v711
        %v2704 = vunpack.c.l.b16 %v712
        %v2705 = vunpack.c.h.b16 %v712
        %v2706 = vunpack.c.l.b16 %v713
        %v2707 = vunpack.c.h.b16 %v713
        %v2708 = vunpack.c.l.b16 %v714
        %v2709 = vunpack.c.h.b16 %v714
        %v2710 = vunpack.c.l.b16 %v715
        %v2711 = vunpack.c.h.b16 %v715
        %v2712 = vunpack.c.l.b16 %v716
        %v2713 = vunpack.c.h.b16 %v716
        %v2714 = vunpack.c.l.b16 %v717
        %v2715 = vunpack.c.h.b16 %v717
        %v2716 = vunpack.c.l.b16 %v718
        %v2717 = vunpack.c.h.b16 %v718
        %v2718 = vunpack.c.l.b16 %v719
        %v2719 = vunpack.c.h.b16 %v719
        %v2720 = vunpack.c.l.b16 %v720
        %v2721 = vunpack.c.h.b16 %v720
        %v2722 = vunpack.c.l.b16 %v721
        %v2723 = vunpack.c.h.b16 %v721
        %v2724 = vunpack.c.l.b16 %v722
        %v2725 = vunpack.c.h.b16 %v722
        %v2726 = vunpack.c.l.b16 %v723
        %v2727 = vunpack.c.h.b16 %v723
        %v2728 = vunpack.c.l.b16 %v724
        %v2729 = vunpack.c.h.b16 %v724
        %v2730 = vunpack.c.l.b16 %v725
        %v2731 = vunpack.c.h.b16 %v725
        %v2732 = vunpack.c.l.b16 %v726
        %v2733 = vunpack.c.h.b16 %v726
        %v2734 = vunpack.c.l.b16 %v727
        %v2735 = vunpack.c.h.b16 %v727
        %v2736 = vunpack.c.l.b16 %v728
        %v2737 = vunpack.c.h.b16 %v728
        %v2738 = vunpack.c.l.b16 %v729
        %v2739 = vunpack.c.h.b16 %v729
        %v2740 = vunpack.c.l.b16 %v730
        %v2741 = vunpack.c.h.b16 %v730
        %v2742 = vunpack.c.l.b16 %v731
        %v2743 = vunpack.c.h.b16 %v731
        %v2744 = vunpack.c.l.b16 %v732
        %v2745 = vunpack.c.h.b16 %v732
        %v2746 = vunpack.c.l.b16 %v733
        %v2747 = vunpack.c.h.b16 %v733
        %v2748 = vunpack.c.l.b16 %v734
        %v2749 = vunpack.c.h.b16 %v734
        %v2750 = vunpack.c.l.b16 %v735
        %v2751 = vunpack.c.h.b16 %v735
        %v2752 = vunpack.c.l.b16 %v736
        %v2753 = vunpack.c.h.b16 %v736
        %v2754 = vunpack.c.l.b16 %v737
        %v2755 = vunpack.c.h.b16 %v737
        %v2756 = vunpack.c.l.b16 %v738
        %v2757 = vunpack.c.h.b16 %v738
        %v2758 = vunpack.c.l.b16 %v739
        %v2759 = vunpack.c.h.b16 %v739
        %v2760 = vunpack.c.l.b16 %v740
        %v2761 = vunpack.c.h.b16 %v740
        %v2762 = vunpack.c.l.b16 %v741
        %v2763 = vunpack.c.h.b16 %v741
        %v2764 = vunpack.c.l.b16 %v742
        %v2765 = vunpack.c.h.b16 %v742
        %v2766 = vunpack.c.l.b16 %v743
        %v2767 = vunpack.c.h.b16 %v743
        %v2768 = vunpack.c.l.b16 %v744
        %v2769 = vunpack.c.h.b16 %v744
        %v2770 = vunpack.c.l.b16 %v745
        %v2771 = vunpack.c.h.b16 %v745
        %v2772 = vunpack.c.l.b16 %v746
        %v2773 = vunpack.c.h.b16 %v746
        %v2774 = vunpack.c.l.b16 %v747
        %v2775 = vunpack.c.h.b16 %v747
        %v2776 = vunpack.c.l.b16 %v748
        %v2777 = vunpack.c.h.b16 %v748
        %v2778 = vunpack.c.l.b16 %v749
        %v2779 = vunpack.c.h.b16 %v749
        %v2780 = vunpack.c.l.b16 %v750
        %v2781 = vunpack.c.h.b16 %v750
        %v2782 = vunpack.c.l.b16 %v751
        %v2783 = vunpack.c.h.b16 %v751
        %v2784 = vunpack.c.l.b16 %v752
        %v2785 = vunpack.c.h.b16 %v752
        %v2786 = vunpack.c.l.b16 %v753
        %v2787 = vunpack.c.h.b16 %v753
        %v2788 = vunpack.c.l.b16 %v754
        %v2789 = vunpack.c.h.b16 %v754
        %v2790 = vpack.c.b16 %v2410, %v2406
        %v2791 = vpack.c.b16 %v2411, %v2407
        %v2792 = vpack.c.b16 %v2412, %v2408
        %v2793 = vpack.c.b16 %v2413, %v2409
        %v2794 = vpack.c.b16 %v2418, %v2414
        %v2795 = vpack.c.b16 %v2419, %v2415
        %v2796 = vpack.c.b16 %v2420, %v2416
        %v2797 = vpack.c.b16 %v2421, %v2417
        %v2798 = vpack.c.b16 %v2426, %v2422
        %v2799 = vpack.c.b16 %v2427, %v2423
        %v2800 = vpack.c.b16 %v2428, %v2424
        %v2801 = vpack.c.b16 %v2429, %v2425
        %v2802 = vpack.c.b16 %v2434, %v2430
        %v2803 = vpack.c.b16 %v2435, %v2431
        %v2804 = vpack.c.b16 %v2436, %v2432
        %v2805 = vpack.c.b16 %v2437, %v2433
        %v2806 = vpack.c.b16 %v2442, %v2438
        %v2807 = vpack.c.b16 %v2443, %v2439
        %v2808 = vpack.c.b16 %v2444, %v2440
        %v2809 = vpack.c.b16 %v2445, %v2441
        %v2810 = vpack.c.b16 %v2450, %v2446
        %v2811 = vpack.c.b16 %v2451, %v2447
        %v2812 = vpack.c.b16 %v2452, %v2448
        %v2813 = vpack.c.b16 %v2453, %v2449
        %v2814 = vpack.c.b16 %v2458, %v2454
        %v2815 = vpack.c.b16 %v2459, %v2455
        %v2816 = vpack.c.b16 %v2460, %v2456
        %v2817 = vpack.c.b16 %v2461, %v2457
        %v2818 = vpack.c.b16 %v2466, %v2462
        %v2819 = vpack.c.b16 %v2467, %v2463
        %v2820 = vpack.c.b16 %v2468, %v2464
        %v2821 = vpack.c.b16 %v2469, %v2465
        %v2822 = vpack.c.b16 %v2474, %v2470
        %v2823 = vpack.c.b16 %v2475, %v2471
        %v2824 = vpack.c.b16 %v2476, %v2472
        %v2825 = vpack.c.b16 %v2477, %v2473
        %v2826 = vpack.c.b16 %v2482, %v2478
        %v2827 = vpack.c.b16 %v2483, %v2479
        %v2828 = vpack.c.b16 %v2484, %v2480
        %v2829 = vpack.c.b16 %v2485, %v2481
        %v2830 = vpack.c.b16 %v2490, %v2486
        %v2831 = vpack.c.b16 %v2491, %v2487
        %v2832 = vpack.c.b16 %v2492, %v2488
        %v2833 = vpack.c.b16 %v2493, %v2489
        %v2834 = vpack.c.b16 %v2498, %v2494
        %v2835 = vpack.c.b16 %v2499, %v2495
        %v2836 = vpack.c.b16 %v2500, %v2496
        %v2837 = vpack.c.b16 %v2501, %v2497
        %v2838 = vpack.c.b16 %v2506, %v2502
        %v2839 = vpack.c.b16 %v2507, %v2503
        %v2840 = vpack.c.b16 %v2508, %v2504
        %v2841 = vpack.c.b16 %v2509, %v2505
        %v2842 = vpack.c.b16 %v2514, %v2510
        %v2843 = vpack.c.b16 %v2515, %v2511
        %v2844 = vpack.c.b16 %v2516, %v2512
        %v2845 = vpack.c.b16 %v2517, %v2513
        %v2846 = vpack.c.b16 %v2522, %v2518
        %v2847 = vpack.c.b16 %v2523, %v2519
        %v2848 = vpack.c.b16 %v2524, %v2520
        %v2849 = vpack.c.b16 %v2525, %v2521
        %v2850 = vpack.c.b16 %v2530, %v2526
        %v2851 = vpack.c.b16 %v2531, %v2527
        %v2852 = vpack.c.b16 %v2532, %v2528
        %v2853 = vpack.c.b16 %v2533, %v2529
        %v2854 = vpack.c.b16 %v2538, %v2534
        %v2855 = vpack.c.b16 %v2539, %v2535
        %v2856 = vpack.c.b16 %v2540, %v2536
        %v2857 = vpack.c.b16 %v2541, %v2537
        %v2858 = vpack.c.b16 %v2546, %v2542
        %v2859 = vpack.c.b16 %v2547, %v2543
        %v2860 = vpack.c.b16 %v2548, %v2544
        %v2861 = vpack.c.b16 %v2549, %v2545
        %v2862 = vpack.c.b16 %v2554, %v2550
        %v2863 = vpack.c.b16 %v2555, %v2551
        %v2864 = vpack.c.b16 %v2556, %v2552
        %v2865 = vpack.c.b16 %v2557, %v2553
        %v2866 = vpack.c.b16 %v2562, %v2558
        %v2867 = vpack.c.b16 %v2563, %v2559
        %v2868 = vpack.c.b16 %v2564, %v2560
        %v2869 = vpack.c.b16 %v2565, %v2561
        %v2870 = vpack.c.b16 %v2570, %v2566
        %v2871 = vpack.c.b16 %v2571, %v2567
        %v2872 = vpack.c.b16 %v2572, %v2568
        %v2873 = vpack.c.b16 %v2573, %v2569
        %v2874 = vpack.c.b16 %v2578, %v2574
        %v2875 = vpack.c.b16 %v2579, %v2575
        %v2876 = vpack.c.b16 %v2580, %v2576
        %v2877 = vpack.c.b16 %v2581, %v2577
        %v2878 = vpack.c.b16 %v2586, %v2582
        %v2879 = vpack.c.b16 %v2587, %v2583
        %v2880 = vpack.c.b16 %v2588, %v2584
        %v2881 = vpack.c.b16 %v2589, %v2585
        %v2882 = vpack.c.b16 %v2594, %v2590
        %v2883 = vpack.c.b16 %v2595, %v2591
        %v2884 = vpack.c.b16 %v2596, %v2592
        %v2885 = vpack.c.b16 %v2597, %v2593
        %v2886 = vpack.c.b16 %v2602, %v2598
        %v2887 = vpack.c.b16 %v2603, %v2599
        %v2888 = vpack.c.b16 %v2604, %v2600
        %v2889 = vpack.c.b16 %v2605, %v2601
        %v2890 = vpack.c.b16 %v2610, %v2606
        %v2891 = vpack.c.b16 %v2611, %v2607
        %v2892 = vpack.c.b16 %v2612, %v2608
        %v2893 = vpack.c.b16 %v2613, %v2609
        %v2894 = vpack.c.b16 %v2618, %v2614
        %v2895 = vpack.c.b16 %v2619, %v2615
        %v2896 = vpack.c.b16 %v2620, %v2616
        %v2897 = vpack.c.b16 %v2621, %v2617
        %v2898 = vpack.c.b16 %v2626, %v2622
        %v2899 = vpack.c.b16 %v2627, %v2623
        %v2900 = vpack.c.b16 %v2628, %v2624
        %v2901 = vpack.c.b16 %v2629, %v2625
        %v2902 = vpack.c.b16 %v2634, %v2630
        %v2903 = vpack.c.b16 %v2635, %v2631
        %v2904 = vpack.c.b16 %v2636, %v2632
        %v2905 = vpack.c.b16 %v2637, %v2633
        %v2906 = vpack.c.b16 %v2642, %v2638
        %v2907 = vpack.c.b16 %v2643, %v2639
        %v2908 = vpack.c.b16 %v2644, %v2640
        %v2909 = vpack.c.b16 %v2645, %v2641
        %v2910 = vpack.c.b16 %v2650, %v2646
        %v2911 = vpack.c.b16 %v2651, %v2647
        %v2912 = vpack.c.b16 %v2652, %v2648
        %v2913 = vpack.c.b16 %v2653, %v2649
        %v2914 = vpack.c.b16 %v2658, %v2654
        %v2915 = vpack.c.b16 %v2659, %v2655
        %v2916 = vpack.c.b16 %v2660, %v2656
        %v2917 = vpack.c.b16 %v2661, %v2657
        %v2918 = vpack.c.b16 %v2666, %v2662
        %v2919 = vpack.c.b16 %v2667, %v2663
        %v2920 = vpack.c.b16 %v2668, %v2664
        %v2921 = vpack.c.b16 %v2669, %v2665
        %v2922 = vpack.c.b16 %v2674, %v2670
        %v2923 = vpack.c.b16 %v2675, %v2671
        %v2924 = vpack.c.b16 %v2676, %v2672
        %v2925 = vpack.c.b16 %v2677, %v2673
        %v2926 = vpack.c.b16 %v2682, %v2678
        %v2927 = vpack.c.b16 %v2683, %v2679
        %v2928 = vpack.c.b16 %v2684, %v2680
        %v2929 = vpack.c.b16 %v2685, %v2681
        %v2930 = vpack.c.b16 %v2690, %v2686
        %v2931 = vpack.c.b16 %v2691, %v2687
        %v2932 = vpack.c.b16 %v2692, %v2688
        %v2933 = vpack.c.b16 %v2693, %v2689
        %v2934 = vpack.c.b16 %v2698, %v2694
        %v2935 = vpack.c.b16 %v2699, %v2695
        %v2936 = vpack.c.b16 %v2700, %v2696
        %v2937 = vpack.c.b16 %v2701, %v2697
        %v2938 = vpack.c.b16 %v2706, %v2702
        %v2939 = vpack.c.b16 %v2707, %v2703
        %v2940 = vpack.c.b16 %v2708, %v2704
        %v2941 = vpack.c.b16 %v2709, %v2705
        %v2942 = vpack.c.b16 %v2714, %v2710
        %v2943 = vpack.c.b16 %v2715, %v2711
        %v2944 = vpack.c.b16 %v2716, %v2712
        %v2945 = vpack.c.b16 %v2717, %v2713
        %v2946 = vpack.c.b16 %v2722, %v2718
        %v2947 = vpack.c.b16 %v2723, %v2719
        %v2948 = vpack.c.b16 %v2724, %v2720
        %v2949 = vpack.c.b16 %v2725, %v2721
        %v2950 = vpack.c.b16 %v2730, %v2726
        %v2951 = vpack.c.b16 %v2731, %v2727
        %v2952 = vpack.c.b16 %v2732, %v2728
        %v2953 = vpack.c.b16 %v2733, %v2729
        %v2954 = vpack.c.b16 %v2738, %v2734
        %v2955 = vpack.c.b16 %v2739, %v2735
        %v2956 = vpack.c.b16 %v2740, %v2736
        %v2957 = vpack.c.b16 %v2741, %v2737
        %v2958 = vpack.c.b16 %v2746, %v2742
        %v2959 = vpack.c.b16 %v2747, %v2743
        %v2960 = vpack.c.b16 %v2748, %v2744
        %v2961 = vpack.c.b16 %v2749, %v2745
        %v2962 = vpack.c.b16 %v2754, %v2750
        %v2963 = vpack.c.b16 %v2755, %v2751
        %v2964 = vpack.c.b16 %v2756, %v2752
        %v2965 = vpack.c.b16 %v2757, %v2753
        %v2966 = vpack.c.b16 %v2762, %v2758
        %v2967 = vpack.c.b16 %v2763, %v2759
        %v2968 = vpack.c.b16 %v2764, %v2760
        %v2969 = vpack.c.b16 %v2765, %v2761
        %v2970 = vpack.c.b16 %v2770, %v2766
        %v2971 = vpack.c.b16 %v2771, %v2767
        %v2972 = vpack.c.b16 %v2772, %v2768
        %v2973 = vpack.c.b16 %v2773, %v2769
        %v2974 = vpack.c.b16 %v2778, %v2774
        %v2975 = vpack.c.b16 %v2779, %v2775
        %v2976 = vpack.c.b16 %v2780, %v2776
        %v2977 = vpack.c.b16 %v2781, %v2777
        %v2978 = vpack.c.b16 %v2786, %v2782
        %v2979 = vpack.c.b16 %v2787, %v2783
        %v2980 = vpack.c.b16 %v2788, %v2784
        %v2981 = vpack.c.b16 %v2789, %v2785
        %3174 = vmatprep.subr.bf16.mxu0 %v2791
        %3175 = vmatpush1.bf16.msra.mxu0 %v2790
        %3176 = vmatprep.subr.bf16.mxu0 %v2795
        %3177 = vmatpush1.bf16.msra.mxu0 %v2794
        %3178 = vmatprep.subr.bf16.mxu0 %v2799
        %3179 = vmatpush1.bf16.msra.mxu0 %v2798
        %3180 = vmatprep.subr.bf16.mxu0 %v2803
        %3181 = vmatpush1.bf16.msra.mxu0 %v2802
        %3182 = vmatprep.subr.bf16.mxu0 %v2807
        %3183 = vmatpush1.bf16.msra.mxu0 %v2806
        %3184 = vmatprep.subr.bf16.mxu0 %v2811
        %3185 = vmatpush1.bf16.msra.mxu0 %v2810
        %3186 = vmatprep.subr.bf16.mxu0 %v2815
        %3187 = vmatpush1.bf16.msra.mxu0 %v2814
        %3188 = vmatprep.subr.bf16.mxu0 %v2819
        %3189 = vmatpush1.bf16.msra.mxu0 %v2818
        %3190 = vmatprep.subr.bf16.mxu0 %v2823
        %3191 = vmatpush1.bf16.msra.mxu0 %v2822
        %3192 = vmatprep.subr.bf16.mxu0 %v2827
        %3193 = vmatpush1.bf16.msra.mxu0 %v2826
        %3194 = vmatprep.subr.bf16.mxu0 %v2831
        %3195 = vmatpush1.bf16.msra.mxu0 %v2830
        %3196 = vmatprep.subr.bf16.mxu0 %v2835
        %3197 = vmatpush1.bf16.msra.mxu0 %v2834
        %3198 = vmatprep.subr.bf16.mxu0 %v2839
        %3199 = vmatpush1.bf16.msra.mxu0 %v2838
        %3200 = vmatprep.subr.bf16.mxu0 %v2843
        %3201 = vmatpush1.bf16.msra.mxu0 %v2842
        %3202 = vmatprep.subr.bf16.mxu0 %v2847
        %3203 = vmatpush1.bf16.msra.mxu0 %v2846
        %3204 = vmatprep.subr.bf16.mxu0 %v2851
        %3205 = vmatpush1.bf16.msra.mxu0 %v2850
        %3206 = vmatprep.mubr.bf16.mxu0 %v558
        %3207 = vmatmul.mubr.bf16.gmra.mrb[0].mxu0 %v557
        %v3208 = vpop.f32.mrb[0].mxu0
        %v3209 = vadd.f32 %v2085, %v3208
        %v3210 = vpop.f32.mrb[0].mxu0
        %v3211 = vadd.f32 %v2087, %v3210
        %v3212 = vpop.f32.mrb[0].mxu0
        %v3213 = vpop.f32.mrb[0].mxu0
        %3214 = vdwg.mxu0
        %3215 = vmatprep.subr.bf16.mxu0 %v2855
        %3216 = vmatpush1.bf16.msra.mxu0 %v2854
        %3217 = vmatprep.subr.bf16.mxu0 %v2859
        %3218 = vmatpush1.bf16.msra.mxu0 %v2858
        %3219 = vmatprep.subr.bf16.mxu0 %v2863
        %3220 = vmatpush1.bf16.msra.mxu0 %v2862
        %3221 = vmatprep.subr.bf16.mxu0 %v2867
        %3222 = vmatpush1.bf16.msra.mxu0 %v2866
        %3223 = vmatprep.subr.bf16.mxu0 %v2871
        %3224 = vmatpush1.bf16.msra.mxu0 %v2870
        %3225 = vmatprep.subr.bf16.mxu0 %v2875
        %3226 = vmatpush1.bf16.msra.mxu0 %v2874
        %3227 = vmatprep.subr.bf16.mxu0 %v2879
        %3228 = vmatpush1.bf16.msra.mxu0 %v2878
        %3229 = vmatprep.subr.bf16.mxu0 %v2883
        %3230 = vmatpush1.bf16.msra.mxu0 %v2882
        %3231 = vmatprep.subr.bf16.mxu0 %v2887
        %3232 = vmatpush1.bf16.msra.mxu0 %v2886
        %3233 = vmatprep.subr.bf16.mxu0 %v2891
        %3234 = vmatpush1.bf16.msra.mxu0 %v2890
        %3235 = vmatprep.subr.bf16.mxu0 %v2895
        %3236 = vmatpush1.bf16.msra.mxu0 %v2894
        %3237 = vmatprep.subr.bf16.mxu0 %v2899
        %3238 = vmatpush1.bf16.msra.mxu0 %v2898
        %3239 = vmatprep.subr.bf16.mxu0 %v2903
        %3240 = vmatpush1.bf16.msra.mxu0 %v2902
        %3241 = vmatprep.subr.bf16.mxu0 %v2907
        %3242 = vmatpush1.bf16.msra.mxu0 %v2906
        %3243 = vmatprep.subr.bf16.mxu0 %v2911
        %3244 = vmatpush1.bf16.msra.mxu0 %v2910
        %3245 = vmatprep.subr.bf16.mxu0 %v2915
        %3246 = vmatpush1.bf16.msra.mxu0 %v2914
        %3247 = vmatprep.mubr.bf16.mxu0 %v560
        %3248 = vmatmul.mubr.bf16.gmra.mrb[0].mxu0 %v559
        %v3249 = vpop.f32.mrb[0].mxu0
        %v3250 = vadd.f32 %v3209, %v3249
        %v3251 = vpop.f32.mrb[0].mxu0
        %v3252 = vadd.f32 %v3211, %v3251
        %v3253 = vpop.f32.mrb[0].mxu0
        %v3254 = vpop.f32.mrb[0].mxu0
        %3255 = vdwg.mxu0
        %3256 = vmatprep.subr.bf16.mxu0 %v2919
        %3257 = vmatpush1.bf16.msra.mxu0 %v2918
        %3258 = vmatprep.subr.bf16.mxu0 %v2923
        %3259 = vmatpush1.bf16.msra.mxu0 %v2922
        %3260 = vmatprep.subr.bf16.mxu0 %v2927
        %3261 = vmatpush1.bf16.msra.mxu0 %v2926
        %3262 = vmatprep.subr.bf16.mxu0 %v2931
        %3263 = vmatpush1.bf16.msra.mxu0 %v2930
        %3264 = vmatprep.subr.bf16.mxu0 %v2935
        %3265 = vmatpush1.bf16.msra.mxu0 %v2934
        %3266 = vmatprep.subr.bf16.mxu0 %v2939
        %3267 = vmatpush1.bf16.msra.mxu0 %v2938
        %3268 = vmatprep.subr.bf16.mxu0 %v2943
        %3269 = vmatpush1.bf16.msra.mxu0 %v2942
        %3270 = vmatprep.subr.bf16.mxu0 %v2947
        %3271 = vmatpush1.bf16.msra.mxu0 %v2946
        %3272 = vmatprep.subr.bf16.mxu0 %v2951
        %3273 = vmatpush1.bf16.msra.mxu0 %v2950
        %3274 = vmatprep.subr.bf16.mxu0 %v2955
        %3275 = vmatpush1.bf16.msra.mxu0 %v2954
        %3276 = vmatprep.subr.bf16.mxu0 %v2959
        %3277 = vmatpush1.bf16.msra.mxu0 %v2958
        %3278 = vmatprep.subr.bf16.mxu0 %v2963
        %3279 = vmatpush1.bf16.msra.mxu0 %v2962
        %3280 = vmatprep.subr.bf16.mxu0 %v2967
        %3281 = vmatpush1.bf16.msra.mxu0 %v2966
        %3282 = vmatprep.subr.bf16.mxu0 %v2971
        %3283 = vmatpush1.bf16.msra.mxu0 %v2970
        %3284 = vmatprep.subr.bf16.mxu0 %v2975
        %3285 = vmatpush1.bf16.msra.mxu0 %v2974
        %3286 = vmatprep.subr.bf16.mxu0 %v2979
        %3287 = vmatpush1.bf16.msra.mxu0 %v2978
        %3288 = vmatprep.mubr.bf16.mxu0 %v562
        %3289 = vmatmul.mubr.bf16.gmra.mrb[0].mxu0 %v561
        %v3290 = vpop.f32.mrb[0].mxu0
        %v3291 = vadd.f32 %v3250, %v3290
        %v3292 = vpop.f32.mrb[0].mxu0
        %v3293 = vadd.f32 %v3252, %v3292
        %v3294 = vpop.f32.mrb[0].mxu0
        %v3295 = vpop.f32.mrb[0].mxu0
        %3296 = vdwg.mxu0
        %3297 = vmatprep.subr.bf16.mxu0 %v2793
        %3298 = vmatpush1.bf16.msra.mxu0 %v2792
        %3299 = vmatprep.subr.bf16.mxu0 %v2797
        %3300 = vmatpush1.bf16.msra.mxu0 %v2796
        %3301 = vmatprep.subr.bf16.mxu0 %v2801
        %3302 = vmatpush1.bf16.msra.mxu0 %v2800
        %3303 = vmatprep.subr.bf16.mxu0 %v2805
        %3304 = vmatpush1.bf16.msra.mxu0 %v2804
        %3305 = vmatprep.subr.bf16.mxu0 %v2809
        %3306 = vmatpush1.bf16.msra.mxu0 %v2808
        %3307 = vmatprep.subr.bf16.mxu0 %v2813
        %3308 = vmatpush1.bf16.msra.mxu0 %v2812
        %3309 = vmatprep.subr.bf16.mxu0 %v2817
        %3310 = vmatpush1.bf16.msra.mxu0 %v2816
        %3311 = vmatprep.subr.bf16.mxu0 %v2821
        %3312 = vmatpush1.bf16.msra.mxu0 %v2820
        %3313 = vmatprep.subr.bf16.mxu0 %v2825
        %3314 = vmatpush1.bf16.msra.mxu0 %v2824
        %3315 = vmatprep.subr.bf16.mxu0 %v2829
        %3316 = vmatpush1.bf16.msra.mxu0 %v2828
        %3317 = vmatprep.subr.bf16.mxu0 %v2833
        %3318 = vmatpush1.bf16.msra.mxu0 %v2832
        %3319 = vmatprep.subr.bf16.mxu0 %v2837
        %3320 = vmatpush1.bf16.msra.mxu0 %v2836
        %3321 = vmatprep.subr.bf16.mxu0 %v2841
        %3322 = vmatpush1.bf16.msra.mxu0 %v2840
        %3323 = vmatprep.subr.bf16.mxu0 %v2845
        %3324 = vmatpush1.bf16.msra.mxu0 %v2844
        %3325 = vmatprep.subr.bf16.mxu0 %v2849
        %3326 = vmatpush1.bf16.msra.mxu0 %v2848
        %3327 = vmatprep.subr.bf16.mxu0 %v2853
        %3328 = vmatpush1.bf16.msra.mxu0 %v2852
        %3329 = vmatprep.mubr.bf16.mxu0 %v558
        %3330 = vmatmul.mubr.bf16.gmra.mrb[0].mxu0 %v557
        %v3331 = vpop.f32.mrb[0].mxu0
        %v3332 = vadd.f32 %v2208, %v3331
        %v3333 = vpop.f32.mrb[0].mxu0
        %v3334 = vadd.f32 %v2210, %v3333
        %v3335 = vpop.f32.mrb[0].mxu0
        %v3336 = vpop.f32.mrb[0].mxu0
        %3337 = vdwg.mxu0
        %3338 = vmatprep.subr.bf16.mxu0 %v2857
        %3339 = vmatpush1.bf16.msra.mxu0 %v2856
        %3340 = vmatprep.subr.bf16.mxu0 %v2861
        %3341 = vmatpush1.bf16.msra.mxu0 %v2860
        %3342 = vmatprep.subr.bf16.mxu0 %v2865
        %3343 = vmatpush1.bf16.msra.mxu0 %v2864
        %3344 = vmatprep.subr.bf16.mxu0 %v2869
        %3345 = vmatpush1.bf16.msra.mxu0 %v2868
        %3346 = vmatprep.subr.bf16.mxu0 %v2873
        %3347 = vmatpush1.bf16.msra.mxu0 %v2872
        %3348 = vmatprep.subr.bf16.mxu0 %v2877
        %3349 = vmatpush1.bf16.msra.mxu0 %v2876
        %3350 = vmatprep.subr.bf16.mxu0 %v2881
        %3351 = vmatpush1.bf16.msra.mxu0 %v2880
        %3352 = vmatprep.subr.bf16.mxu0 %v2885
        %3353 = vmatpush1.bf16.msra.mxu0 %v2884
        %3354 = vmatprep.subr.bf16.mxu0 %v2889
        %3355 = vmatpush1.bf16.msra.mxu0 %v2888
        %3356 = vmatprep.subr.bf16.mxu0 %v2893
        %3357 = vmatpush1.bf16.msra.mxu0 %v2892
        %3358 = vmatprep.subr.bf16.mxu0 %v2897
        %3359 = vmatpush1.bf16.msra.mxu0 %v2896
        %3360 = vmatprep.subr.bf16.mxu0 %v2901
        %3361 = vmatpush1.bf16.msra.mxu0 %v2900
        %3362 = vmatprep.subr.bf16.mxu0 %v2905
        %3363 = vmatpush1.bf16.msra.mxu0 %v2904
        %3364 = vmatprep.subr.bf16.mxu0 %v2909
        %3365 = vmatpush1.bf16.msra.mxu0 %v2908
        %3366 = vmatprep.subr.bf16.mxu0 %v2913
        %3367 = vmatpush1.bf16.msra.mxu0 %v2912
        %3368 = vmatprep.subr.bf16.mxu0 %v2917
        %3369 = vmatpush1.bf16.msra.mxu0 %v2916
        %3370 = vmatprep.mubr.bf16.mxu0 %v560
        %3371 = vmatmul.mubr.bf16.gmra.mrb[0].mxu0 %v559
        %v3372 = vpop.f32.mrb[0].mxu0
        %v3373 = vadd.f32 %v3332, %v3372
        %v3374 = vpop.f32.mrb[0].mxu0
        %v3375 = vadd.f32 %v3334, %v3374
        %v3376 = vpop.f32.mrb[0].mxu0
        %v3377 = vpop.f32.mrb[0].mxu0
        %3378 = vdwg.mxu0
        %3379 = vmatprep.subr.bf16.mxu0 %v2921
        %3380 = vmatpush1.bf16.msra.mxu0 %v2920
        %3381 = vmatprep.subr.bf16.mxu0 %v2925
        %3382 = vmatpush1.bf16.msra.mxu0 %v2924
        %3383 = vmatprep.subr.bf16.mxu0 %v2929
        %3384 = vmatpush1.bf16.msra.mxu0 %v2928
        %3385 = vmatprep.subr.bf16.mxu0 %v2933
        %3386 = vmatpush1.bf16.msra.mxu0 %v2932
        %3387 = vmatprep.subr.bf16.mxu0 %v2937
        %3388 = vmatpush1.bf16.msra.mxu0 %v2936
        %3389 = vmatprep.subr.bf16.mxu0 %v2941
        %3390 = vmatpush1.bf16.msra.mxu0 %v2940
        %3391 = vmatprep.subr.bf16.mxu0 %v2945
        %3392 = vmatpush1.bf16.msra.mxu0 %v2944
        %3393 = vmatprep.subr.bf16.mxu0 %v2949
        %3394 = vmatpush1.bf16.msra.mxu0 %v2948
        %3395 = vmatprep.subr.bf16.mxu0 %v2953
        %3396 = vmatpush1.bf16.msra.mxu0 %v2952
        %3397 = vmatprep.subr.bf16.mxu0 %v2957
        %3398 = vmatpush1.bf16.msra.mxu0 %v2956
        %3399 = vmatprep.subr.bf16.mxu0 %v2961
        %3400 = vmatpush1.bf16.msra.mxu0 %v2960
        %3401 = vmatprep.subr.bf16.mxu0 %v2965
        %3402 = vmatpush1.bf16.msra.mxu0 %v2964
        %3403 = vmatprep.subr.bf16.mxu0 %v2969
        %3404 = vmatpush1.bf16.msra.mxu0 %v2968
        %3405 = vmatprep.subr.bf16.mxu0 %v2973
        %3406 = vmatpush1.bf16.msra.mxu0 %v2972
        %3407 = vmatprep.subr.bf16.mxu0 %v2977
        %3408 = vmatpush1.bf16.msra.mxu0 %v2976
        %3409 = vmatprep.subr.bf16.mxu0 %v2981
        %3410 = vmatpush1.bf16.msra.mxu0 %v2980
        %3411 = vmatprep.mubr.bf16.mxu0 %v562
        %3412 = vmatmul.mubr.bf16.gmra.mrb[0].mxu0 %v561
        %v3413 = vpop.f32.mrb[0].mxu0
        %v3414 = vadd.f32 %v3373, %v3413
        %v3415 = vpop.f32.mrb[0].mxu0
        %v3416 = vadd.f32 %v3375, %v3415
        %v3417 = vpop.f32.mrb[0].mxu0
        %v3418 = vpop.f32.mrb[0].mxu0
        %3419 = vdwg.mxu0
        %v3420 = vld [vmem:[%s2] sm:$0xf]
        %v3422 = vlaneseq
        %v3423 = vshrl.u32 %v3422, 7
        %v3424 = vsub.s32 0, %v3423
        %v3425 = vrot.slane %v3420, %v3424
        %v3426 = vlaneseq
        %v3427 = vshrl.u32 %v3426, 7
        %v3428 = vsub.s32 1, %v3427
        %v3429 = vrot.slane %v3420, %v3428
        %v3430 = vlaneseq
        %v3431 = vshrl.u32 %v3430, 7
        %v3432 = vsub.s32 2, %v3431
        %v3433 = vrot.slane %v3420, %v3432
        %v3434 = vlaneseq
        %v3435 = vshrl.u32 %v3434, 7
        %v3436 = vsub.s32 3, %v3435
        %v3437 = vrot.slane %v3420, %v3436
        %v3442 = vadd.f32 %v3291, %v3425
        %v3443 = vadd.f32 %v3293, %v3429
        %v3444 = vadd.f32 %v3414, %v3433
        %v3445 = vadd.f32 %v3416, %v3437
        %v3446 = vxor.u32 %v3442, 2147483648
        %v3447 = vxor.u32 %v3443, 2147483648
        %v3448 = vxor.u32 %v3444, 2147483648
        %v3449 = vxor.u32 %v3445, 2147483648
        %v3450 = vmul.f32 %v3446, 1.442695
        %v3451 = vpow.pop %v3450
        %v3452 = vmul.f32 %v3447, 1.442695
        %v3453 = vpow.pop %v3452
        %v3454 = vmul.f32 %v3448, 1.442695
        %v3455 = vpow.pop %v3454
        %v3456 = vmul.f32 %v3449, 1.442695
        %v3457 = vpow.pop %v3456
        %v3458 = vadd.f32 %v3451, 1.0
        %v3459 = vadd.f32 %v3453, 1.0
        %v3460 = vadd.f32 %v3455, 1.0
        %v3461 = vadd.f32 %v3457, 1.0
        %v3462 = vrcp.pop %v3458
        %v3463 = vmul.f32 1.0, %v3462
        %v3464 = vrcp.pop %v3459
        %v3465 = vmul.f32 1.0, %v3464
        %v3466 = vrcp.pop %v3460
        %v3467 = vmul.f32 1.0, %v3466
        %v3468 = vrcp.pop %v3461
        %v3469 = vmul.f32 1.0, %v3468
        %v3470 = vmul.f32 %v3442, %v3463
        %v3471 = vmul.f32 %v3443, %v3465
        %v3472 = vmul.f32 %v3444, %v3467
        %v3473 = vmul.f32 %v3445, %v3469
        %3474 = vst [vmem:[#allocation2] sm:$0x1f] 0.0
        %3475 = vst [vmem:[#allocation2 + $0x8] sm:$0x1f] 0.0
        %3476 = vst [vmem:[#allocation2 + $0x10] sm:$0x1f] 0.0
        %3477 = vst [vmem:[#allocation2 + $0x18] sm:$0x1f] 0.0
        %v3482 = vrot.slane %v3470, 7
        %v3483 = vrot.slane %v3471, 7
        %v3484 = vrot.slane %v3472, 7
        %v3485 = vrot.slane %v3473, 7
        %3490 = vst [vmem:[#allocation2] sm:$0x1e] %v3482
        %3491 = vst [vmem:[#allocation2 + $0x8] sm:$0x1e] %v3483
        %3492 = vst [vmem:[#allocation2 + $0x10] sm:$0x1e] %v3484
        %3493 = vst [vmem:[#allocation2 + $0x18] sm:$0x1e] %v3485
        %v3494 = vld [vmem:[#allocation2] sm:$0xf]
        %v3495 = vld [vmem:[#allocation2 + $0x8] sm:$0xf]
        %v3496 = vld [vmem:[#allocation2 + $0x10] sm:$0xf]
        %v3497 = vld [vmem:[#allocation2 + $0x18] sm:$0xf]
        %v3498 = vpack.c.bf16 %v3494, %v3494
        %v3499 = vpack.c.bf16 %v3495, %v3495
        %v3500 = vpack.c.bf16 %v3496, %v3496
        %v3501 = vpack.c.bf16 %v3497, %v3497
        %v3502 = vld [vmem:[%s3] sm:$0xff]
        %v3503 = vld [vmem:[%s3 + $0x8] sm:$0xff]
        %v3504 = vld [vmem:[%s3 + $0x10] sm:$0xff]
        %v3505 = vld [vmem:[%s3 + $0x18] sm:$0xff]
        %v3506 = vld [vmem:[%s3 + $0x20] sm:$0xff]
        %v3507 = vld [vmem:[%s3 + $0x28] sm:$0xff]
        %v3508 = vld [vmem:[%s3 + $0x30] sm:$0xff]
        %v3509 = vld [vmem:[%s3 + $0x38] sm:$0xff]
        %v3510 = vld [vmem:[%s3 + $0x40] sm:$0xff]
        %v3511 = vld [vmem:[%s3 + $0x48] sm:$0xff]
        %v3512 = vld [vmem:[%s3 + $0x50] sm:$0xff]
        %v3513 = vld [vmem:[%s3 + $0x58] sm:$0xff]
        %v3514 = vld [vmem:[%s3 + $0x60] sm:$0xff]
        %v3515 = vld [vmem:[%s3 + $0x68] sm:$0xff]
        %v3516 = vld [vmem:[%s3 + $0x70] sm:$0xff]
        %v3517 = vld [vmem:[%s3 + $0x78] sm:$0xff]
        %v3518 = vld [vmem:[%s3 + $0x80] sm:$0xff]
        %v3519 = vld [vmem:[%s3 + $0x88] sm:$0xff]
        %v3520 = vld [vmem:[%s3 + $0x90] sm:$0xff]
        %v3521 = vld [vmem:[%s3 + $0x98] sm:$0xff]
        %v3522 = vld [vmem:[%s3 + $0xa0] sm:$0xff]
        %v3523 = vld [vmem:[%s3 + $0xa8] sm:$0xff]
        %v3524 = vld [vmem:[%s3 + $0xb0] sm:$0xff]
        %v3525 = vld [vmem:[%s3 + $0xb8] sm:$0xff]
        %v3526 = vld [vmem:[%s3 + $0xc0] sm:$0xff]
        %v3527 = vld [vmem:[%s3 + $0xc8] sm:$0xff]
        %v3528 = vld [vmem:[%s3 + $0xd0] sm:$0xff]
        %v3529 = vld [vmem:[%s3 + $0xd8] sm:$0xff]
        %v3530 = vld [vmem:[%s3 + $0xe0] sm:$0xff]
        %v3531 = vld [vmem:[%s3 + $0xe8] sm:$0xff]
        %v3532 = vld [vmem:[%s3 + $0xf0] sm:$0xff]
        %v3533 = vld [vmem:[%s3 + $0xf8] sm:$0xff]
        %v3534 = vld [vmem:[%s3 + $0x100] sm:$0xff]
        %v3535 = vld [vmem:[%s3 + $0x108] sm:$0xff]
        %v3536 = vld [vmem:[%s3 + $0x110] sm:$0xff]
        %v3537 = vld [vmem:[%s3 + $0x118] sm:$0xff]
        %v3538 = vld [vmem:[%s3 + $0x120] sm:$0xff]
        %v3539 = vld [vmem:[%s3 + $0x128] sm:$0xff]
        %v3540 = vld [vmem:[%s3 + $0x130] sm:$0xff]
        %v3541 = vld [vmem:[%s3 + $0x138] sm:$0xff]
        %v3542 = vld [vmem:[%s3 + $0x140] sm:$0xff]
        %v3543 = vld [vmem:[%s3 + $0x148] sm:$0xff]
        %v3544 = vld [vmem:[%s3 + $0x150] sm:$0xff]
        %v3545 = vld [vmem:[%s3 + $0x158] sm:$0xff]
        %v3546 = vld [vmem:[%s3 + $0x160] sm:$0xff]
        %v3547 = vld [vmem:[%s3 + $0x168] sm:$0xff]
        %v3548 = vld [vmem:[%s3 + $0x170] sm:$0xff]
        %v3549 = vld [vmem:[%s3 + $0x178] sm:$0xff]
        %v3550 = vld [vmem:[%s3 + $0x180] sm:$0xff]
        %v3551 = vld [vmem:[%s3 + $0x188] sm:$0xff]
        %v3552 = vld [vmem:[%s3 + $0x190] sm:$0xff]
        %v3553 = vld [vmem:[%s3 + $0x198] sm:$0xff]
        %v3554 = vld [vmem:[%s3 + $0x1a0] sm:$0xff]
        %v3555 = vld [vmem:[%s3 + $0x1a8] sm:$0xff]
        %v3556 = vld [vmem:[%s3 + $0x1b0] sm:$0xff]
        %v3557 = vld [vmem:[%s3 + $0x1b8] sm:$0xff]
        %v3558 = vld [vmem:[%s3 + $0x1c0] sm:$0xff]
        %v3559 = vld [vmem:[%s3 + $0x1c8] sm:$0xff]
        %v3560 = vld [vmem:[%s3 + $0x1d0] sm:$0xff]
        %v3561 = vld [vmem:[%s3 + $0x1d8] sm:$0xff]
        %v3562 = vld [vmem:[%s3 + $0x1e0] sm:$0xff]
        %v3563 = vld [vmem:[%s3 + $0x1e8] sm:$0xff]
        %v3564 = vld [vmem:[%s3 + $0x1f0] sm:$0xff]
        %v3565 = vld [vmem:[%s3 + $0x1f8] sm:$0xff]
        %v3566 = vld [vmem:[#allocation2] sm:$0x1e]
        %v3567 = vld [vmem:[#allocation2 + $0x8] sm:$0x1e]
        %v3568 = vld [vmem:[#allocation2 + $0x10] sm:$0x1e]
        %v3569 = vld [vmem:[#allocation2 + $0x18] sm:$0x1e]
        %v3570 = vpack.c.bf16 %v3566, %v3566
        %v3571 = vpack.c.bf16 %v3567, %v3567
        %v3572 = vpack.c.bf16 %v3568, %v3568
        %v3573 = vpack.c.bf16 %v3569, %v3569
        %s3574 = scalar_lea.vmem %s3, 512
        %v3575 = vld [vmem:[%s3574] sm:$0xff]
        %v3576 = vld [vmem:[%s3574 + $0x8] sm:$0xff]
        %v3577 = vld [vmem:[%s3574 + $0x10] sm:$0xff]
        %v3578 = vld [vmem:[%s3574 + $0x18] sm:$0xff]
        %v3579 = vld [vmem:[%s3574 + $0x20] sm:$0xff]
        %v3580 = vld [vmem:[%s3574 + $0x28] sm:$0xff]
        %v3581 = vld [vmem:[%s3574 + $0x30] sm:$0xff]
        %v3582 = vld [vmem:[%s3574 + $0x38] sm:$0xff]
        %v3583 = vld [vmem:[%s3574 + $0x40] sm:$0xff]
        %v3584 = vld [vmem:[%s3574 + $0x48] sm:$0xff]
        %v3585 = vld [vmem:[%s3574 + $0x50] sm:$0xff]
        %v3586 = vld [vmem:[%s3574 + $0x58] sm:$0xff]
        %v3587 = vld [vmem:[%s3574 + $0x60] sm:$0xff]
        %v3588 = vld [vmem:[%s3574 + $0x68] sm:$0xff]
        %v3589 = vld [vmem:[%s3574 + $0x70] sm:$0xff]
        %v3590 = vld [vmem:[%s3574 + $0x78] sm:$0xff]
        %v3591 = vld [vmem:[%s3574 + $0x80] sm:$0xff]
        %v3592 = vld [vmem:[%s3574 + $0x88] sm:$0xff]
        %v3593 = vld [vmem:[%s3574 + $0x90] sm:$0xff]
        %v3594 = vld [vmem:[%s3574 + $0x98] sm:$0xff]
        %v3595 = vld [vmem:[%s3574 + $0xa0] sm:$0xff]
        %v3596 = vld [vmem:[%s3574 + $0xa8] sm:$0xff]
        %v3597 = vld [vmem:[%s3574 + $0xb0] sm:$0xff]
        %v3598 = vld [vmem:[%s3574 + $0xb8] sm:$0xff]
        %v3599 = vld [vmem:[%s3574 + $0xc0] sm:$0xff]
        %v3600 = vld [vmem:[%s3574 + $0xc8] sm:$0xff]
        %v3601 = vld [vmem:[%s3574 + $0xd0] sm:$0xff]
        %v3602 = vld [vmem:[%s3574 + $0xd8] sm:$0xff]
        %v3603 = vld [vmem:[%s3574 + $0xe0] sm:$0xff]
        %v3604 = vld [vmem:[%s3574 + $0xe8] sm:$0xff]
        %v3605 = vld [vmem:[%s3574 + $0xf0] sm:$0xff]
        %v3606 = vld [vmem:[%s3574 + $0xf8] sm:$0xff]
        %v3607 = vld [vmem:[%s3574 + $0x100] sm:$0xff]
        %v3608 = vld [vmem:[%s3574 + $0x108] sm:$0xff]
        %v3609 = vld [vmem:[%s3574 + $0x110] sm:$0xff]
        %v3610 = vld [vmem:[%s3574 + $0x118] sm:$0xff]
        %v3611 = vld [vmem:[%s3574 + $0x120] sm:$0xff]
        %v3612 = vld [vmem:[%s3574 + $0x128] sm:$0xff]
        %v3613 = vld [vmem:[%s3574 + $0x130] sm:$0xff]
        %v3614 = vld [vmem:[%s3574 + $0x138] sm:$0xff]
        %v3615 = vld [vmem:[%s3574 + $0x140] sm:$0xff]
        %v3616 = vld [vmem:[%s3574 + $0x148] sm:$0xff]
        %v3617 = vld [vmem:[%s3574 + $0x150] sm:$0xff]
        %v3618 = vld [vmem:[%s3574 + $0x158] sm:$0xff]
        %v3619 = vld [vmem:[%s3574 + $0x160] sm:$0xff]
        %v3620 = vld [vmem:[%s3574 + $0x168] sm:$0xff]
        %v3621 = vld [vmem:[%s3574 + $0x170] sm:$0xff]
        %v3622 = vld [vmem:[%s3574 + $0x178] sm:$0xff]
        %v3623 = vld [vmem:[%s3574 + $0x180] sm:$0xff]
        %v3624 = vld [vmem:[%s3574 + $0x188] sm:$0xff]
        %v3625 = vld [vmem:[%s3574 + $0x190] sm:$0xff]
        %v3626 = vld [vmem:[%s3574 + $0x198] sm:$0xff]
        %v3627 = vld [vmem:[%s3574 + $0x1a0] sm:$0xff]
        %v3628 = vld [vmem:[%s3574 + $0x1a8] sm:$0xff]
        %v3629 = vld [vmem:[%s3574 + $0x1b0] sm:$0xff]
        %v3630 = vld [vmem:[%s3574 + $0x1b8] sm:$0xff]
        %v3631 = vld [vmem:[%s3574 + $0x1c0] sm:$0xff]
        %v3632 = vld [vmem:[%s3574 + $0x1c8] sm:$0xff]
        %v3633 = vld [vmem:[%s3574 + $0x1d0] sm:$0xff]
        %v3634 = vld [vmem:[%s3574 + $0x1d8] sm:$0xff]
        %v3635 = vld [vmem:[%s3574 + $0x1e0] sm:$0xff]
        %v3636 = vld [vmem:[%s3574 + $0x1e8] sm:$0xff]
        %v3637 = vld [vmem:[%s3574 + $0x1f0] sm:$0xff]
        %v3638 = vld [vmem:[%s3574 + $0x1f8] sm:$0xff]
        %v3640 = vshrl.u32 %v3570, 16
        %v3642 = vshll.u32 %v3570, 16
        %v3644 = vrot.slane %v3642, 1
        %v3645 = vor.u32 %v3640, %v3644
        %v3647 = vshrl.u32 %v3571, 16
        %v3649 = vshll.u32 %v3571, 16
        %v3651 = vrot.slane %v3649, 1
        %v3652 = vor.u32 %v3647, %v3651
        %v3654 = vshrl.u32 %v3572, 16
        %v3656 = vshll.u32 %v3572, 16
        %v3658 = vrot.slane %v3656, 1
        %v3659 = vor.u32 %v3654, %v3658
        %v3661 = vshrl.u32 %v3573, 16
        %v3663 = vshll.u32 %v3573, 16
        %v3665 = vrot.slane %v3663, 1
        %v3666 = vor.u32 %v3661, %v3665
        %v3735 = vunpack.c.l.b16 %v3575
        %v3736 = vunpack.c.h.b16 %v3575
        %v3737 = vunpack.c.l.b16 %v3576
        %v3738 = vunpack.c.h.b16 %v3576
        %v3739 = vunpack.c.l.b16 %v3577
        %v3740 = vunpack.c.h.b16 %v3577
        %v3741 = vunpack.c.l.b16 %v3578
        %v3742 = vunpack.c.h.b16 %v3578
        %v3743 = vunpack.c.l.b16 %v3579
        %v3744 = vunpack.c.h.b16 %v3579
        %v3745 = vunpack.c.l.b16 %v3580
        %v3746 = vunpack.c.h.b16 %v3580
        %v3747 = vunpack.c.l.b16 %v3581
        %v3748 = vunpack.c.h.b16 %v3581
        %v3749 = vunpack.c.l.b16 %v3582
        %v3750 = vunpack.c.h.b16 %v3582
        %v3751 = vunpack.c.l.b16 %v3583
        %v3752 = vunpack.c.h.b16 %v3583
        %v3753 = vunpack.c.l.b16 %v3584
        %v3754 = vunpack.c.h.b16 %v3584
        %v3755 = vunpack.c.l.b16 %v3585
        %v3756 = vunpack.c.h.b16 %v3585
        %v3757 = vunpack.c.l.b16 %v3586
        %v3758 = vunpack.c.h.b16 %v3586
        %v3759 = vunpack.c.l.b16 %v3587
        %v3760 = vunpack.c.h.b16 %v3587
        %v3761 = vunpack.c.l.b16 %v3588
        %v3762 = vunpack.c.h.b16 %v3588
        %v3763 = vunpack.c.l.b16 %v3589
        %v3764 = vunpack.c.h.b16 %v3589
        %v3765 = vunpack.c.l.b16 %v3590
        %v3766 = vunpack.c.h.b16 %v3590
        %v3767 = vunpack.c.l.b16 %v3591
        %v3768 = vunpack.c.h.b16 %v3591
        %v3769 = vunpack.c.l.b16 %v3592
        %v3770 = vunpack.c.h.b16 %v3592
        %v3771 = vunpack.c.l.b16 %v3593
        %v3772 = vunpack.c.h.b16 %v3593
        %v3773 = vunpack.c.l.b16 %v3594
        %v3774 = vunpack.c.h.b16 %v3594
        %v3775 = vunpack.c.l.b16 %v3595
        %v3776 = vunpack.c.h.b16 %v3595
        %v3777 = vunpack.c.l.b16 %v3596
        %v3778 = vunpack.c.h.b16 %v3596
        %v3779 = vunpack.c.l.b16 %v3597
        %v3780 = vunpack.c.h.b16 %v3597
        %v3781 = vunpack.c.l.b16 %v3598
        %v3782 = vunpack.c.h.b16 %v3598
        %v3783 = vunpack.c.l.b16 %v3599
        %v3784 = vunpack.c.h.b16 %v3599
        %v3785 = vunpack.c.l.b16 %v3600
        %v3786 = vunpack.c.h.b16 %v3600
        %v3787 = vunpack.c.l.b16 %v3601
        %v3788 = vunpack.c.h.b16 %v3601
        %v3789 = vunpack.c.l.b16 %v3602
        %v3790 = vunpack.c.h.b16 %v3602
        %v3791 = vunpack.c.l.b16 %v3603
        %v3792 = vunpack.c.h.b16 %v3603
        %v3793 = vunpack.c.l.b16 %v3604
        %v3794 = vunpack.c.h.b16 %v3604
        %v3795 = vunpack.c.l.b16 %v3605
        %v3796 = vunpack.c.h.b16 %v3605
        %v3797 = vunpack.c.l.b16 %v3606
        %v3798 = vunpack.c.h.b16 %v3606
        %v3799 = vunpack.c.l.b16 %v3607
        %v3800 = vunpack.c.h.b16 %v3607
        %v3801 = vunpack.c.l.b16 %v3608
        %v3802 = vunpack.c.h.b16 %v3608
        %v3803 = vunpack.c.l.b16 %v3609
        %v3804 = vunpack.c.h.b16 %v3609
        %v3805 = vunpack.c.l.b16 %v3610
        %v3806 = vunpack.c.h.b16 %v3610
        %v3807 = vunpack.c.l.b16 %v3611
        %v3808 = vunpack.c.h.b16 %v3611
        %v3809 = vunpack.c.l.b16 %v3612
        %v3810 = vunpack.c.h.b16 %v3612
        %v3811 = vunpack.c.l.b16 %v3613
        %v3812 = vunpack.c.h.b16 %v3613
        %v3813 = vunpack.c.l.b16 %v3614
        %v3814 = vunpack.c.h.b16 %v3614
        %v3815 = vunpack.c.l.b16 %v3615
        %v3816 = vunpack.c.h.b16 %v3615
        %v3817 = vunpack.c.l.b16 %v3616
        %v3818 = vunpack.c.h.b16 %v3616
        %v3819 = vunpack.c.l.b16 %v3617
        %v3820 = vunpack.c.h.b16 %v3617
        %v3821 = vunpack.c.l.b16 %v3618
        %v3822 = vunpack.c.h.b16 %v3618
        %v3823 = vunpack.c.l.b16 %v3619
        %v3824 = vunpack.c.h.b16 %v3619
        %v3825 = vunpack.c.l.b16 %v3620
        %v3826 = vunpack.c.h.b16 %v3620
        %v3827 = vunpack.c.l.b16 %v3621
        %v3828 = vunpack.c.h.b16 %v3621
        %v3829 = vunpack.c.l.b16 %v3622
        %v3830 = vunpack.c.h.b16 %v3622
        %v3831 = vunpack.c.l.b16 %v3623
        %v3832 = vunpack.c.h.b16 %v3623
        %v3833 = vunpack.c.l.b16 %v3624
        %v3834 = vunpack.c.h.b16 %v3624
        %v3835 = vunpack.c.l.b16 %v3625
        %v3836 = vunpack.c.h.b16 %v3625
        %v3837 = vunpack.c.l.b16 %v3626
        %v3838 = vunpack.c.h.b16 %v3626
        %v3839 = vunpack.c.l.b16 %v3627
        %v3840 = vunpack.c.h.b16 %v3627
        %v3841 = vunpack.c.l.b16 %v3628
        %v3842 = vunpack.c.h.b16 %v3628
        %v3843 = vunpack.c.l.b16 %v3629
        %v3844 = vunpack.c.h.b16 %v3629
        %v3845 = vunpack.c.l.b16 %v3630
        %v3846 = vunpack.c.h.b16 %v3630
        %v3847 = vunpack.c.l.b16 %v3631
        %v3848 = vunpack.c.h.b16 %v3631
        %v3849 = vunpack.c.l.b16 %v3632
        %v3850 = vunpack.c.h.b16 %v3632
        %v3851 = vunpack.c.l.b16 %v3633
        %v3852 = vunpack.c.h.b16 %v3633
        %v3853 = vunpack.c.l.b16 %v3634
        %v3854 = vunpack.c.h.b16 %v3634
        %v3855 = vunpack.c.l.b16 %v3635
        %v3856 = vunpack.c.h.b16 %v3635
        %v3857 = vunpack.c.l.b16 %v3636
        %v3858 = vunpack.c.h.b16 %v3636
        %v3859 = vunpack.c.l.b16 %v3637
        %v3860 = vunpack.c.h.b16 %v3637
        %v3861 = vunpack.c.l.b16 %v3638
        %v3862 = vunpack.c.h.b16 %v3638
        %v3863 = vpack.c.b16 %v3737, %v3735
        %v3864 = vpack.c.b16 %v3738, %v3736
        %v3865 = vpack.c.b16 %v3741, %v3739
        %v3866 = vpack.c.b16 %v3742, %v3740
        %v3867 = vpack.c.b16 %v3745, %v3743
        %v3868 = vpack.c.b16 %v3746, %v3744
        %v3869 = vpack.c.b16 %v3749, %v3747
        %v3870 = vpack.c.b16 %v3750, %v3748
        %v3871 = vpack.c.b16 %v3753, %v3751
        %v3872 = vpack.c.b16 %v3754, %v3752
        %v3873 = vpack.c.b16 %v3757, %v3755
        %v3874 = vpack.c.b16 %v3758, %v3756
        %v3875 = vpack.c.b16 %v3761, %v3759
        %v3876 = vpack.c.b16 %v3762, %v3760
        %v3877 = vpack.c.b16 %v3765, %v3763
        %v3878 = vpack.c.b16 %v3766, %v3764
        %v3879 = vpack.c.b16 %v3769, %v3767
        %v3880 = vpack.c.b16 %v3770, %v3768
        %v3881 = vpack.c.b16 %v3773, %v3771
        %v3882 = vpack.c.b16 %v3774, %v3772
        %v3883 = vpack.c.b16 %v3777, %v3775
        %v3884 = vpack.c.b16 %v3778, %v3776
        %v3885 = vpack.c.b16 %v3781, %v3779
        %v3886 = vpack.c.b16 %v3782, %v3780
        %v3887 = vpack.c.b16 %v3785, %v3783
        %v3888 = vpack.c.b16 %v3786, %v3784
        %v3889 = vpack.c.b16 %v3789, %v3787
        %v3890 = vpack.c.b16 %v3790, %v3788
        %v3891 = vpack.c.b16 %v3793, %v3791
        %v3892 = vpack.c.b16 %v3794, %v3792
        %v3893 = vpack.c.b16 %v3797, %v3795
        %v3894 = vpack.c.b16 %v3798, %v3796
        %v3895 = vpack.c.b16 %v3801, %v3799
        %v3896 = vpack.c.b16 %v3802, %v3800
        %v3897 = vpack.c.b16 %v3805, %v3803
        %v3898 = vpack.c.b16 %v3806, %v3804
        %v3899 = vpack.c.b16 %v3809, %v3807
        %v3900 = vpack.c.b16 %v3810, %v3808
        %v3901 = vpack.c.b16 %v3813, %v3811
        %v3902 = vpack.c.b16 %v3814, %v3812
        %v3903 = vpack.c.b16 %v3817, %v3815
        %v3904 = vpack.c.b16 %v3818, %v3816
        %v3905 = vpack.c.b16 %v3821, %v3819
        %v3906 = vpack.c.b16 %v3822, %v3820
        %v3907 = vpack.c.b16 %v3825, %v3823
        %v3908 = vpack.c.b16 %v3826, %v3824
        %v3909 = vpack.c.b16 %v3829, %v3827
        %v3910 = vpack.c.b16 %v3830, %v3828
        %v3911 = vpack.c.b16 %v3833, %v3831
        %v3912 = vpack.c.b16 %v3834, %v3832
        %v3913 = vpack.c.b16 %v3837, %v3835
        %v3914 = vpack.c.b16 %v3838, %v3836
        %v3915 = vpack.c.b16 %v3841, %v3839
        %v3916 = vpack.c.b16 %v3842, %v3840
        %v3917 = vpack.c.b16 %v3845, %v3843
        %v3918 = vpack.c.b16 %v3846, %v3844
        %v3919 = vpack.c.b16 %v3849, %v3847
        %v3920 = vpack.c.b16 %v3850, %v3848
        %v3921 = vpack.c.b16 %v3853, %v3851
        %v3922 = vpack.c.b16 %v3854, %v3852
        %v3923 = vpack.c.b16 %v3857, %v3855
        %v3924 = vpack.c.b16 %v3858, %v3856
        %v3925 = vpack.c.b16 %v3861, %v3859
        %v3926 = vpack.c.b16 %v3862, %v3860
        %3991 = vmatprep.subr.bf16.mxu0 %v3864
        %3992 = vmatpush1.bf16.msra.mxu0 %v3863
        %3993 = vmatprep.subr.bf16.mxu0 %v3866
        %3994 = vmatpush1.bf16.msra.mxu0 %v3865
        %3995 = vmatprep.subr.bf16.mxu0 %v3868
        %3996 = vmatpush1.bf16.msra.mxu0 %v3867
        %3997 = vmatprep.subr.bf16.mxu0 %v3870
        %3998 = vmatpush1.bf16.msra.mxu0 %v3869
        %3999 = vmatprep.subr.bf16.mxu0 %v3872
        %4000 = vmatpush1.bf16.msra.mxu0 %v3871
        %4001 = vmatprep.subr.bf16.mxu0 %v3874
        %4002 = vmatpush1.bf16.msra.mxu0 %v3873
        %4003 = vmatprep.subr.bf16.mxu0 %v3876
        %4004 = vmatpush1.bf16.msra.mxu0 %v3875
        %4005 = vmatprep.subr.bf16.mxu0 %v3878
        %4006 = vmatpush1.bf16.msra.mxu0 %v3877
        %4007 = vmatprep.subr.bf16.mxu0 %v3880
        %4008 = vmatpush1.bf16.msra.mxu0 %v3879
        %4009 = vmatprep.subr.bf16.mxu0 %v3882
        %4010 = vmatpush1.bf16.msra.mxu0 %v3881
        %4011 = vmatprep.subr.bf16.mxu0 %v3884
        %4012 = vmatpush1.bf16.msra.mxu0 %v3883
        %4013 = vmatprep.subr.bf16.mxu0 %v3886
        %4014 = vmatpush1.bf16.msra.mxu0 %v3885
        %4015 = vmatprep.subr.bf16.mxu0 %v3888
        %4016 = vmatpush1.bf16.msra.mxu0 %v3887
        %4017 = vmatprep.subr.bf16.mxu0 %v3890
        %4018 = vmatpush1.bf16.msra.mxu0 %v3889
        %4019 = vmatprep.subr.bf16.mxu0 %v3892
        %4020 = vmatpush1.bf16.msra.mxu0 %v3891
        %4021 = vmatprep.subr.bf16.mxu0 %v3894
        %4022 = vmatpush1.bf16.msra.mxu0 %v3893
        %4023 = vmatprep.mubr.bf16.mxu0 %v3652
        %4024 = vmatmul.mubr.bf16.gmra.mrb[0].mxu0 %v3645
        %v4025 = vpop.f32.mrb[0].mxu0
        %v4026 = vadd.f32 0.0, %v4025
        %v4027 = vpop.f32.mrb[0].mxu0
        %v4028 = vadd.f32 0.0, %v4027
        %v4029 = vpop.f32.mrb[0].mxu0
        %v4030 = vpop.f32.mrb[0].mxu0
        %4031 = vdwg.mxu0
        %4032 = vmatprep.subr.bf16.mxu0 %v3896
        %4033 = vmatpush1.bf16.msra.mxu0 %v3895
        %4034 = vmatprep.subr.bf16.mxu0 %v3898
        %4035 = vmatpush1.bf16.msra.mxu0 %v3897
        %4036 = vmatprep.subr.bf16.mxu0 %v3900
        %4037 = vmatpush1.bf16.msra.mxu0 %v3899
        %4038 = vmatprep.subr.bf16.mxu0 %v3902
        %4039 = vmatpush1.bf16.msra.mxu0 %v3901
        %4040 = vmatprep.subr.bf16.mxu0 %v3904
        %4041 = vmatpush1.bf16.msra.mxu0 %v3903
        %4042 = vmatprep.subr.bf16.mxu0 %v3906
        %4043 = vmatpush1.bf16.msra.mxu0 %v3905
        %4044 = vmatprep.subr.bf16.mxu0 %v3908
        %4045 = vmatpush1.bf16.msra.mxu0 %v3907
        %4046 = vmatprep.subr.bf16.mxu0 %v3910
        %4047 = vmatpush1.bf16.msra.mxu0 %v3909
        %4048 = vmatprep.subr.bf16.mxu0 %v3912
        %4049 = vmatpush1.bf16.msra.mxu0 %v3911
        %4050 = vmatprep.subr.bf16.mxu0 %v3914
        %4051 = vmatpush1.bf16.msra.mxu0 %v3913
        %4052 = vmatprep.subr.bf16.mxu0 %v3916
        %4053 = vmatpush1.bf16.msra.mxu0 %v3915
        %4054 = vmatprep.subr.bf16.mxu0 %v3918
        %4055 = vmatpush1.bf16.msra.mxu0 %v3917
        %4056 = vmatprep.subr.bf16.mxu0 %v3920
        %4057 = vmatpush1.bf16.msra.mxu0 %v3919
        %4058 = vmatprep.subr.bf16.mxu0 %v3922
        %4059 = vmatpush1.bf16.msra.mxu0 %v3921
        %4060 = vmatprep.subr.bf16.mxu0 %v3924
        %4061 = vmatpush1.bf16.msra.mxu0 %v3923
        %4062 = vmatprep.subr.bf16.mxu0 %v3926
        %4063 = vmatpush1.bf16.msra.mxu0 %v3925
        %4064 = vmatprep.mubr.bf16.mxu0 %v3666
        %4065 = vmatmul.mubr.bf16.gmra.mrb[0].mxu0 %v3659
        %v4066 = vpop.f32.mrb[0].mxu0
        %v4067 = vadd.f32 %v4026, %v4066
        %v4068 = vpop.f32.mrb[0].mxu0
        %v4069 = vadd.f32 %v4028, %v4068
        %v4070 = vpop.f32.mrb[0].mxu0
        %v4071 = vpop.f32.mrb[0].mxu0
        %4072 = vdwg.mxu0
        %v4137 = vunpack.c.l.b16 %v3502
        %v4138 = vunpack.c.h.b16 %v3502
        %v4139 = vunpack.c.l.b16 %v3503
        %v4140 = vunpack.c.h.b16 %v3503
        %v4141 = vunpack.c.l.b16 %v3504
        %v4142 = vunpack.c.h.b16 %v3504
        %v4143 = vunpack.c.l.b16 %v3505
        %v4144 = vunpack.c.h.b16 %v3505
        %v4145 = vunpack.c.l.b16 %v3506
        %v4146 = vunpack.c.h.b16 %v3506
        %v4147 = vunpack.c.l.b16 %v3507
        %v4148 = vunpack.c.h.b16 %v3507
        %v4149 = vunpack.c.l.b16 %v3508
        %v4150 = vunpack.c.h.b16 %v3508
        %v4151 = vunpack.c.l.b16 %v3509
        %v4152 = vunpack.c.h.b16 %v3509
        %v4153 = vunpack.c.l.b16 %v3510
        %v4154 = vunpack.c.h.b16 %v3510
        %v4155 = vunpack.c.l.b16 %v3511
        %v4156 = vunpack.c.h.b16 %v3511
        %v4157 = vunpack.c.l.b16 %v3512
        %v4158 = vunpack.c.h.b16 %v3512
        %v4159 = vunpack.c.l.b16 %v3513
        %v4160 = vunpack.c.h.b16 %v3513
        %v4161 = vunpack.c.l.b16 %v3514
        %v4162 = vunpack.c.h.b16 %v3514
        %v4163 = vunpack.c.l.b16 %v3515
        %v4164 = vunpack.c.h.b16 %v3515
        %v4165 = vunpack.c.l.b16 %v3516
        %v4166 = vunpack.c.h.b16 %v3516
        %v4167 = vunpack.c.l.b16 %v3517
        %v4168 = vunpack.c.h.b16 %v3517
        %v4169 = vunpack.c.l.b16 %v3518
        %v4170 = vunpack.c.h.b16 %v3518
        %v4171 = vunpack.c.l.b16 %v3519
        %v4172 = vunpack.c.h.b16 %v3519
        %v4173 = vunpack.c.l.b16 %v3520
        %v4174 = vunpack.c.h.b16 %v3520
        %v4175 = vunpack.c.l.b16 %v3521
        %v4176 = vunpack.c.h.b16 %v3521
        %v4177 = vunpack.c.l.b16 %v3522
        %v4178 = vunpack.c.h.b16 %v3522
        %v4179 = vunpack.c.l.b16 %v3523
        %v4180 = vunpack.c.h.b16 %v3523
        %v4181 = vunpack.c.l.b16 %v3524
        %v4182 = vunpack.c.h.b16 %v3524
        %v4183 = vunpack.c.l.b16 %v3525
        %v4184 = vunpack.c.h.b16 %v3525
        %v4185 = vunpack.c.l.b16 %v3526
        %v4186 = vunpack.c.h.b16 %v3526
        %v4187 = vunpack.c.l.b16 %v3527
        %v4188 = vunpack.c.h.b16 %v3527
        %v4189 = vunpack.c.l.b16 %v3528
        %v4190 = vunpack.c.h.b16 %v3528
        %v4191 = vunpack.c.l.b16 %v3529
        %v4192 = vunpack.c.h.b16 %v3529
        %v4193 = vunpack.c.l.b16 %v3530
        %v4194 = vunpack.c.h.b16 %v3530
        %v4195 = vunpack.c.l.b16 %v3531
        %v4196 = vunpack.c.h.b16 %v3531
        %v4197 = vunpack.c.l.b16 %v3532
        %v4198 = vunpack.c.h.b16 %v3532
        %v4199 = vunpack.c.l.b16 %v3533
        %v4200 = vunpack.c.h.b16 %v3533
        %v4201 = vunpack.c.l.b16 %v3534
        %v4202 = vunpack.c.h.b16 %v3534
        %v4203 = vunpack.c.l.b16 %v3535
        %v4204 = vunpack.c.h.b16 %v3535
        %v4205 = vunpack.c.l.b16 %v3536
        %v4206 = vunpack.c.h.b16 %v3536
        %v4207 = vunpack.c.l.b16 %v3537
        %v4208 = vunpack.c.h.b16 %v3537
        %v4209 = vunpack.c.l.b16 %v3538
        %v4210 = vunpack.c.h.b16 %v3538
        %v4211 = vunpack.c.l.b16 %v3539
        %v4212 = vunpack.c.h.b16 %v3539
        %v4213 = vunpack.c.l.b16 %v3540
        %v4214 = vunpack.c.h.b16 %v3540
        %v4215 = vunpack.c.l.b16 %v3541
        %v4216 = vunpack.c.h.b16 %v3541
        %v4217 = vunpack.c.l.b16 %v3542
        %v4218 = vunpack.c.h.b16 %v3542
        %v4219 = vunpack.c.l.b16 %v3543
        %v4220 = vunpack.c.h.b16 %v3543
        %v4221 = vunpack.c.l.b16 %v3544
        %v4222 = vunpack.c.h.b16 %v3544
        %v4223 = vunpack.c.l.b16 %v3545
        %v4224 = vunpack.c.h.b16 %v3545
        %v4225 = vunpack.c.l.b16 %v3546
        %v4226 = vunpack.c.h.b16 %v3546
        %v4227 = vunpack.c.l.b16 %v3547
        %v4228 = vunpack.c.h.b16 %v3547
        %v4229 = vunpack.c.l.b16 %v3548
        %v4230 = vunpack.c.h.b16 %v3548
        %v4231 = vunpack.c.l.b16 %v3549
        %v4232 = vunpack.c.h.b16 %v3549
        %v4233 = vunpack.c.l.b16 %v3550
        %v4234 = vunpack.c.h.b16 %v3550
        %v4235 = vunpack.c.l.b16 %v3551
        %v4236 = vunpack.c.h.b16 %v3551
        %v4237 = vunpack.c.l.b16 %v3552
        %v4238 = vunpack.c.h.b16 %v3552
        %v4239 = vunpack.c.l.b16 %v3553
        %v4240 = vunpack.c.h.b16 %v3553
        %v4241 = vunpack.c.l.b16 %v3554
        %v4242 = vunpack.c.h.b16 %v3554
        %v4243 = vunpack.c.l.b16 %v3555
        %v4244 = vunpack.c.h.b16 %v3555
        %v4245 = vunpack.c.l.b16 %v3556
        %v4246 = vunpack.c.h.b16 %v3556
        %v4247 = vunpack.c.l.b16 %v3557
        %v4248 = vunpack.c.h.b16 %v3557
        %v4249 = vunpack.c.l.b16 %v3558
        %v4250 = vunpack.c.h.b16 %v3558
        %v4251 = vunpack.c.l.b16 %v3559
        %v4252 = vunpack.c.h.b16 %v3559
        %v4253 = vunpack.c.l.b16 %v3560
        %v4254 = vunpack.c.h.b16 %v3560
        %v4255 = vunpack.c.l.b16 %v3561
        %v4256 = vunpack.c.h.b16 %v3561
        %v4257 = vunpack.c.l.b16 %v3562
        %v4258 = vunpack.c.h.b16 %v3562
        %v4259 = vunpack.c.l.b16 %v3563
        %v4260 = vunpack.c.h.b16 %v3563
        %v4261 = vunpack.c.l.b16 %v3564
        %v4262 = vunpack.c.h.b16 %v3564
        %v4263 = vunpack.c.l.b16 %v3565
        %v4264 = vunpack.c.h.b16 %v3565
        %v4265 = vpack.c.b16 %v4139, %v4137
        %v4266 = vpack.c.b16 %v4140, %v4138
        %v4267 = vpack.c.b16 %v4143, %v4141
        %v4268 = vpack.c.b16 %v4144, %v4142
        %v4269 = vpack.c.b16 %v4147, %v4145
        %v4270 = vpack.c.b16 %v4148, %v4146
        %v4271 = vpack.c.b16 %v4151, %v4149
        %v4272 = vpack.c.b16 %v4152, %v4150
        %v4273 = vpack.c.b16 %v4155, %v4153
        %v4274 = vpack.c.b16 %v4156, %v4154
        %v4275 = vpack.c.b16 %v4159, %v4157
        %v4276 = vpack.c.b16 %v4160, %v4158
        %v4277 = vpack.c.b16 %v4163, %v4161
        %v4278 = vpack.c.b16 %v4164, %v4162
        %v4279 = vpack.c.b16 %v4167, %v4165
        %v4280 = vpack.c.b16 %v4168, %v4166
        %v4281 = vpack.c.b16 %v4171, %v4169
        %v4282 = vpack.c.b16 %v4172, %v4170
        %v4283 = vpack.c.b16 %v4175, %v4173
        %v4284 = vpack.c.b16 %v4176, %v4174
        %v4285 = vpack.c.b16 %v4179, %v4177
        %v4286 = vpack.c.b16 %v4180, %v4178
        %v4287 = vpack.c.b16 %v4183, %v4181
        %v4288 = vpack.c.b16 %v4184, %v4182
        %v4289 = vpack.c.b16 %v4187, %v4185
        %v4290 = vpack.c.b16 %v4188, %v4186
        %v4291 = vpack.c.b16 %v4191, %v4189
        %v4292 = vpack.c.b16 %v4192, %v4190
        %v4293 = vpack.c.b16 %v4195, %v4193
        %v4294 = vpack.c.b16 %v4196, %v4194
        %v4295 = vpack.c.b16 %v4199, %v4197
        %v4296 = vpack.c.b16 %v4200, %v4198
        %v4297 = vpack.c.b16 %v4203, %v4201
        %v4298 = vpack.c.b16 %v4204, %v4202
        %v4299 = vpack.c.b16 %v4207, %v4205
        %v4300 = vpack.c.b16 %v4208, %v4206
        %v4301 = vpack.c.b16 %v4211, %v4209
        %v4302 = vpack.c.b16 %v4212, %v4210
        %v4303 = vpack.c.b16 %v4215, %v4213
        %v4304 = vpack.c.b16 %v4216, %v4214
        %v4305 = vpack.c.b16 %v4219, %v4217
        %v4306 = vpack.c.b16 %v4220, %v4218
        %v4307 = vpack.c.b16 %v4223, %v4221
        %v4308 = vpack.c.b16 %v4224, %v4222
        %v4309 = vpack.c.b16 %v4227, %v4225
        %v4310 = vpack.c.b16 %v4228, %v4226
        %v4311 = vpack.c.b16 %v4231, %v4229
        %v4312 = vpack.c.b16 %v4232, %v4230
        %v4313 = vpack.c.b16 %v4235, %v4233
        %v4314 = vpack.c.b16 %v4236, %v4234
        %v4315 = vpack.c.b16 %v4239, %v4237
        %v4316 = vpack.c.b16 %v4240, %v4238
        %v4317 = vpack.c.b16 %v4243, %v4241
        %v4318 = vpack.c.b16 %v4244, %v4242
        %v4319 = vpack.c.b16 %v4247, %v4245
        %v4320 = vpack.c.b16 %v4248, %v4246
        %v4321 = vpack.c.b16 %v4251, %v4249
        %v4322 = vpack.c.b16 %v4252, %v4250
        %v4323 = vpack.c.b16 %v4255, %v4253
        %v4324 = vpack.c.b16 %v4256, %v4254
        %v4325 = vpack.c.b16 %v4259, %v4257
        %v4326 = vpack.c.b16 %v4260, %v4258
        %v4327 = vpack.c.b16 %v4263, %v4261
        %v4328 = vpack.c.b16 %v4264, %v4262
        %4393 = vmatprep.subr.bf16.mxu0 %v4266
        %4394 = vmatpush1.bf16.msra.mxu0 %v4265
        %4395 = vmatprep.subr.bf16.mxu0 %v4268
        %4396 = vmatpush1.bf16.msra.mxu0 %v4267
        %4397 = vmatprep.subr.bf16.mxu0 %v4270
        %4398 = vmatpush1.bf16.msra.mxu0 %v4269
        %4399 = vmatprep.subr.bf16.mxu0 %v4272
        %4400 = vmatpush1.bf16.msra.mxu0 %v4271
        %4401 = vmatprep.subr.bf16.mxu0 %v4274
        %4402 = vmatpush1.bf16.msra.mxu0 %v4273
        %4403 = vmatprep.subr.bf16.mxu0 %v4276
        %4404 = vmatpush1.bf16.msra.mxu0 %v4275
        %4405 = vmatprep.subr.bf16.mxu0 %v4278
        %4406 = vmatpush1.bf16.msra.mxu0 %v4277
        %4407 = vmatprep.subr.bf16.mxu0 %v4280
        %4408 = vmatpush1.bf16.msra.mxu0 %v4279
        %4409 = vmatprep.subr.bf16.mxu0 %v4282
        %4410 = vmatpush1.bf16.msra.mxu0 %v4281
        %4411 = vmatprep.subr.bf16.mxu0 %v4284
        %4412 = vmatpush1.bf16.msra.mxu0 %v4283
        %4413 = vmatprep.subr.bf16.mxu0 %v4286
        %4414 = vmatpush1.bf16.msra.mxu0 %v4285
        %4415 = vmatprep.subr.bf16.mxu0 %v4288
        %4416 = vmatpush1.bf16.msra.mxu0 %v4287
        %4417 = vmatprep.subr.bf16.mxu0 %v4290
        %4418 = vmatpush1.bf16.msra.mxu0 %v4289
        %4419 = vmatprep.subr.bf16.mxu0 %v4292
        %4420 = vmatpush1.bf16.msra.mxu0 %v4291
        %4421 = vmatprep.subr.bf16.mxu0 %v4294
        %4422 = vmatpush1.bf16.msra.mxu0 %v4293
        %4423 = vmatprep.subr.bf16.mxu0 %v4296
        %4424 = vmatpush1.bf16.msra.mxu0 %v4295
        %4425 = vmatprep.mubr.bf16.mxu0 %v3499
        %4426 = vmatmul.mubr.bf16.gmra.mrb[0].mxu0 %v3498
        %v4427 = vpop.f32.mrb[0].mxu0
        %v4428 = vadd.f32 %v4067, %v4427
        %v4429 = vpop.f32.mrb[0].mxu0
        %v4430 = vadd.f32 %v4069, %v4429
        %v4431 = vpop.f32.mrb[0].mxu0
        %v4432 = vpop.f32.mrb[0].mxu0
        %4433 = vdwg.mxu0
        %4434 = vmatprep.subr.bf16.mxu0 %v4298
        %4435 = vmatpush1.bf16.msra.mxu0 %v4297
        %4436 = vmatprep.subr.bf16.mxu0 %v4300
        %4437 = vmatpush1.bf16.msra.mxu0 %v4299
        %4438 = vmatprep.subr.bf16.mxu0 %v4302
        %4439 = vmatpush1.bf16.msra.mxu0 %v4301
        %4440 = vmatprep.subr.bf16.mxu0 %v4304
        %4441 = vmatpush1.bf16.msra.mxu0 %v4303
        %4442 = vmatprep.subr.bf16.mxu0 %v4306
        %4443 = vmatpush1.bf16.msra.mxu0 %v4305
        %4444 = vmatprep.subr.bf16.mxu0 %v4308
        %4445 = vmatpush1.bf16.msra.mxu0 %v4307
        %4446 = vmatprep.subr.bf16.mxu0 %v4310
        %4447 = vmatpush1.bf16.msra.mxu0 %v4309
        %4448 = vmatprep.subr.bf16.mxu0 %v4312
        %4449 = vmatpush1.bf16.msra.mxu0 %v4311
        %4450 = vmatprep.subr.bf16.mxu0 %v4314
        %4451 = vmatpush1.bf16.msra.mxu0 %v4313
        %4452 = vmatprep.subr.bf16.mxu0 %v4316
        %4453 = vmatpush1.bf16.msra.mxu0 %v4315
        %4454 = vmatprep.subr.bf16.mxu0 %v4318
        %4455 = vmatpush1.bf16.msra.mxu0 %v4317
        %4456 = vmatprep.subr.bf16.mxu0 %v4320
        %4457 = vmatpush1.bf16.msra.mxu0 %v4319
        %4458 = vmatprep.subr.bf16.mxu0 %v4322
        %4459 = vmatpush1.bf16.msra.mxu0 %v4321
        %4460 = vmatprep.subr.bf16.mxu0 %v4324
        %4461 = vmatpush1.bf16.msra.mxu0 %v4323
        %4462 = vmatprep.subr.bf16.mxu0 %v4326
        %4463 = vmatpush1.bf16.msra.mxu0 %v4325
        %4464 = vmatprep.subr.bf16.mxu0 %v4328
        %4465 = vmatpush1.bf16.msra.mxu0 %v4327
        %4466 = vmatprep.mubr.bf16.mxu0 %v3501
        %4467 = vmatmul.mubr.bf16.gmra.mrb[0].mxu0 %v3500
        %v4468 = vpop.f32.mrb[0].mxu0
        %v4469 = vadd.f32 %v4428, %v4468
        %v4470 = vpop.f32.mrb[0].mxu0
        %v4471 = vadd.f32 %v4430, %v4470
        %v4472 = vpop.f32.mrb[0].mxu0
        %v4473 = vpop.f32.mrb[0].mxu0
        %4474 = vdwg.mxu0
        %v4475 = vld [vmem:[%s4] sm:$0x3]
        %v4477 = vlaneseq
        %v4478 = vshrl.u32 %v4477, 7
        %v4479 = vsub.s32 0, %v4478
        %v4480 = vrot.slane %v4475, %v4479
        %v4481 = vlaneseq
        %v4482 = vshrl.u32 %v4481, 7
        %v4483 = vsub.s32 1, %v4482
        %v4484 = vrot.slane %v4475, %v4483
        %v4487 = vadd.f32 %v4469, %v4480
        %v4488 = vadd.f32 %v4471, %v4484
        %v4489 = vxor.u32 %v4487, 2147483648
        %v4490 = vxor.u32 %v4488, 2147483648
        %v4491 = vmul.f32 %v4489, 1.442695
        %v4492 = vpow.pop %v4491
        %v4493 = vmul.f32 %v4490, 1.442695
        %v4494 = vpow.pop %v4493
        %v4495 = vadd.f32 %v4492, 1.0
        %v4496 = vadd.f32 %v4494, 1.0
        %v4497 = vrcp.pop %v4495
        %v4498 = vmul.f32 1.0, %v4497
        %v4499 = vrcp.pop %v4496
        %v4500 = vmul.f32 1.0, %v4499
        %v4501 = vmul.f32 %v4487, %v4498
        %v4502 = vmul.f32 %v4488, %v4500
        %v4503 = vpack.c.bf16 %v4501, %v4501
        %v4504 = vpack.c.bf16 %v4502, %v4502
        %v4505 = vld [vmem:[%s5] sm:$0xff]
        %v4506 = vld [vmem:[%s5 + $0x8] sm:$0xff]
        %v4507 = vld [vmem:[%s5 + $0x10] sm:$0xff]
        %v4508 = vld [vmem:[%s5 + $0x18] sm:$0xff]
        %v4509 = vld [vmem:[%s5 + $0x20] sm:$0xff]
        %v4510 = vld [vmem:[%s5 + $0x28] sm:$0xff]
        %v4511 = vld [vmem:[%s5 + $0x30] sm:$0xff]
        %v4512 = vld [vmem:[%s5 + $0x38] sm:$0xff]
        %v4513 = vld [vmem:[%s5 + $0x40] sm:$0xff]
        %v4514 = vld [vmem:[%s5 + $0x48] sm:$0xff]
        %v4515 = vld [vmem:[%s5 + $0x50] sm:$0xff]
        %v4516 = vld [vmem:[%s5 + $0x58] sm:$0xff]
        %v4517 = vld [vmem:[%s5 + $0x60] sm:$0xff]
        %v4518 = vld [vmem:[%s5 + $0x68] sm:$0xff]
        %v4519 = vld [vmem:[%s5 + $0x70] sm:$0xff]
        %v4520 = vld [vmem:[%s5 + $0x78] sm:$0xff]
        %v4521 = vld [vmem:[%s5 + $0x80] sm:$0xff]
        %v4522 = vld [vmem:[%s5 + $0x88] sm:$0xff]
        %v4523 = vld [vmem:[%s5 + $0x90] sm:$0xff]
        %v4524 = vld [vmem:[%s5 + $0x98] sm:$0xff]
        %v4525 = vld [vmem:[%s5 + $0xa0] sm:$0xff]
        %v4526 = vld [vmem:[%s5 + $0xa8] sm:$0xff]
        %v4527 = vld [vmem:[%s5 + $0xb0] sm:$0xff]
        %v4528 = vld [vmem:[%s5 + $0xb8] sm:$0xff]
        %v4529 = vld [vmem:[%s5 + $0xc0] sm:$0xff]
        %v4530 = vld [vmem:[%s5 + $0xc8] sm:$0xff]
        %v4531 = vld [vmem:[%s5 + $0xd0] sm:$0xff]
        %v4532 = vld [vmem:[%s5 + $0xd8] sm:$0xff]
        %v4533 = vld [vmem:[%s5 + $0xe0] sm:$0xff]
        %v4534 = vld [vmem:[%s5 + $0xe8] sm:$0xff]
        %v4535 = vld [vmem:[%s5 + $0xf0] sm:$0xff]
        %v4536 = vld [vmem:[%s5 + $0xf8] sm:$0xff]
        %v4537 = vld [vmem:[%s6] sm:$0x3]
        %v4539 = vlaneseq
        %v4540 = vshrl.u32 %v4539, 7
        %v4541 = vsub.s32 0, %v4540
        %v4542 = vrot.slane %v4537, %v4541
        %v4543 = vlaneseq
        %v4544 = vshrl.u32 %v4543, 7
        %v4545 = vsub.s32 1, %v4544
        %v4546 = vrot.slane %v4537, %v4545
        %v4581 = vunpack.c.l.b16 %v4505
        %v4582 = vunpack.c.h.b16 %v4505
        %v4583 = vunpack.c.l.b16 %v4506
        %v4584 = vunpack.c.h.b16 %v4506
        %v4585 = vunpack.c.l.b16 %v4507
        %v4586 = vunpack.c.h.b16 %v4507
        %v4587 = vunpack.c.l.b16 %v4508
        %v4588 = vunpack.c.h.b16 %v4508
        %v4589 = vunpack.c.l.b16 %v4509
        %v4590 = vunpack.c.h.b16 %v4509
        %v4591 = vunpack.c.l.b16 %v4510
        %v4592 = vunpack.c.h.b16 %v4510
        %v4593 = vunpack.c.l.b16 %v4511
        %v4594 = vunpack.c.h.b16 %v4511
        %v4595 = vunpack.c.l.b16 %v4512
        %v4596 = vunpack.c.h.b16 %v4512
        %v4597 = vunpack.c.l.b16 %v4513
        %v4598 = vunpack.c.h.b16 %v4513
        %v4599 = vunpack.c.l.b16 %v4514
        %v4600 = vunpack.c.h.b16 %v4514
        %v4601 = vunpack.c.l.b16 %v4515
        %v4602 = vunpack.c.h.b16 %v4515
        %v4603 = vunpack.c.l.b16 %v4516
        %v4604 = vunpack.c.h.b16 %v4516
        %v4605 = vunpack.c.l.b16 %v4517
        %v4606 = vunpack.c.h.b16 %v4517
        %v4607 = vunpack.c.l.b16 %v4518
        %v4608 = vunpack.c.h.b16 %v4518
        %v4609 = vunpack.c.l.b16 %v4519
        %v4610 = vunpack.c.h.b16 %v4519
        %v4611 = vunpack.c.l.b16 %v4520
        %v4612 = vunpack.c.h.b16 %v4520
        %v4613 = vunpack.c.l.b16 %v4521
        %v4614 = vunpack.c.h.b16 %v4521
        %v4615 = vunpack.c.l.b16 %v4522
        %v4616 = vunpack.c.h.b16 %v4522
        %v4617 = vunpack.c.l.b16 %v4523
        %v4618 = vunpack.c.h.b16 %v4523
        %v4619 = vunpack.c.l.b16 %v4524
        %v4620 = vunpack.c.h.b16 %v4524
        %v4621 = vunpack.c.l.b16 %v4525
        %v4622 = vunpack.c.h.b16 %v4525
        %v4623 = vunpack.c.l.b16 %v4526
        %v4624 = vunpack.c.h.b16 %v4526
        %v4625 = vunpack.c.l.b16 %v4527
        %v4626 = vunpack.c.h.b16 %v4527
        %v4627 = vunpack.c.l.b16 %v4528
        %v4628 = vunpack.c.h.b16 %v4528
        %v4629 = vunpack.c.l.b16 %v4529
        %v4630 = vunpack.c.h.b16 %v4529
        %v4631 = vunpack.c.l.b16 %v4530
        %v4632 = vunpack.c.h.b16 %v4530
        %v4633 = vunpack.c.l.b16 %v4531
        %v4634 = vunpack.c.h.b16 %v4531
        %v4635 = vunpack.c.l.b16 %v4532
        %v4636 = vunpack.c.h.b16 %v4532
        %v4637 = vunpack.c.l.b16 %v4533
        %v4638 = vunpack.c.h.b16 %v4533
        %v4639 = vunpack.c.l.b16 %v4534
        %v4640 = vunpack.c.h.b16 %v4534
        %v4641 = vunpack.c.l.b16 %v4535
        %v4642 = vunpack.c.h.b16 %v4535
        %v4643 = vunpack.c.l.b16 %v4536
        %v4644 = vunpack.c.h.b16 %v4536
        %v4645 = vpack.c.b16 %v4583, %v4581
        %v4646 = vpack.c.b16 %v4584, %v4582
        %v4647 = vpack.c.b16 %v4587, %v4585
        %v4648 = vpack.c.b16 %v4588, %v4586
        %v4649 = vpack.c.b16 %v4591, %v4589
        %v4650 = vpack.c.b16 %v4592, %v4590
        %v4651 = vpack.c.b16 %v4595, %v4593
        %v4652 = vpack.c.b16 %v4596, %v4594
        %v4653 = vpack.c.b16 %v4599, %v4597
        %v4654 = vpack.c.b16 %v4600, %v4598
        %v4655 = vpack.c.b16 %v4603, %v4601
        %v4656 = vpack.c.b16 %v4604, %v4602
        %v4657 = vpack.c.b16 %v4607, %v4605
        %v4658 = vpack.c.b16 %v4608, %v4606
        %v4659 = vpack.c.b16 %v4611, %v4609
        %v4660 = vpack.c.b16 %v4612, %v4610
        %v4661 = vpack.c.b16 %v4615, %v4613
        %v4662 = vpack.c.b16 %v4616, %v4614
        %v4663 = vpack.c.b16 %v4619, %v4617
        %v4664 = vpack.c.b16 %v4620, %v4618
        %v4665 = vpack.c.b16 %v4623, %v4621
        %v4666 = vpack.c.b16 %v4624, %v4622
        %v4667 = vpack.c.b16 %v4627, %v4625
        %v4668 = vpack.c.b16 %v4628, %v4626
        %v4669 = vpack.c.b16 %v4631, %v4629
        %v4670 = vpack.c.b16 %v4632, %v4630
        %v4671 = vpack.c.b16 %v4635, %v4633
        %v4672 = vpack.c.b16 %v4636, %v4634
        %v4673 = vpack.c.b16 %v4639, %v4637
        %v4674 = vpack.c.b16 %v4640, %v4638
        %v4675 = vpack.c.b16 %v4643, %v4641
        %v4676 = vpack.c.b16 %v4644, %v4642
        %4709 = vmatprep.subr.bf16.mxu0 %v4646
        %4710 = vmatpush1.bf16.msra.mxu0 %v4645
        %4711 = vmatprep.subr.bf16.mxu0 %v4648
        %4712 = vmatpush1.bf16.msra.mxu0 %v4647
        %4713 = vmatprep.subr.bf16.mxu0 %v4650
        %4714 = vmatpush1.bf16.msra.mxu0 %v4649
        %4715 = vmatprep.subr.bf16.mxu0 %v4652
        %4716 = vmatpush1.bf16.msra.mxu0 %v4651
        %4717 = vmatprep.subr.bf16.mxu0 %v4654
        %4718 = vmatpush1.bf16.msra.mxu0 %v4653
        %4719 = vmatprep.subr.bf16.mxu0 %v4656
        %4720 = vmatpush1.bf16.msra.mxu0 %v4655
        %4721 = vmatprep.subr.bf16.mxu0 %v4658
        %4722 = vmatpush1.bf16.msra.mxu0 %v4657
        %4723 = vmatprep.subr.bf16.mxu0 %v4660
        %4724 = vmatpush1.bf16.msra.mxu0 %v4659
        %4725 = vmatprep.subr.bf16.mxu0 %v4662
        %4726 = vmatpush1.bf16.msra.mxu0 %v4661
        %4727 = vmatprep.subr.bf16.mxu0 %v4664
        %4728 = vmatpush1.bf16.msra.mxu0 %v4663
        %4729 = vmatprep.subr.bf16.mxu0 %v4666
        %4730 = vmatpush1.bf16.msra.mxu0 %v4665
        %4731 = vmatprep.subr.bf16.mxu0 %v4668
        %4732 = vmatpush1.bf16.msra.mxu0 %v4667
        %4733 = vmatprep.subr.bf16.mxu0 %v4670
        %4734 = vmatpush1.bf16.msra.mxu0 %v4669
        %4735 = vmatprep.subr.bf16.mxu0 %v4672
        %4736 = vmatpush1.bf16.msra.mxu0 %v4671
        %4737 = vmatprep.subr.bf16.mxu0 %v4674
        %4738 = vmatpush1.bf16.msra.mxu0 %v4673
        %4739 = vmatprep.subr.bf16.mxu0 %v4676
        %4740 = vmatpush1.bf16.msra.mxu0 %v4675
        %4741 = vmatprep.mubr.bf16.mxu0 %v4504
        %4742 = vmatmul.mubr.bf16.gmra.mrb[0].mxu0 %v4503
        %v4743 = vpop.f32.mrb[0].mxu0
        %v4744 = vadd.f32 %v4542, %v4743
        %v4745 = vpop.f32.mrb[0].mxu0
        %v4746 = vadd.f32 %v4546, %v4745
        %v4747 = vpop.f32.mrb[0].mxu0
        %v4748 = vpop.f32.mrb[0].mxu0
        %4749 = vdwg.mxu0
        %v4750 = vxor.u32 %v4744, 2147483648
        %v4751 = vxor.u32 %v4746, 2147483648
        %v4752 = vmul.f32 %v4750, 1.442695
        %v4753 = vpow.pop %v4752
        %v4754 = vmul.f32 %v4751, 1.442695
        %v4755 = vpow.pop %v4754
        %v4756 = vadd.f32 %v4753, 1.0
        %v4757 = vadd.f32 %v4755, 1.0
        %v4758 = vrcp.pop %v4756
        %v4759 = vmul.f32 1.0, %v4758
        %v4760 = vrcp.pop %v4757
        %v4761 = vmul.f32 1.0, %v4760
        %v4762 = vmul.f32 %v4744, %v4759
        %v4763 = vmul.f32 %v4746, %v4761
        %4764 = vst [vmem:[#allocation3] sm:$0x3f] 0.0
        %4765 = vst [vmem:[#allocation3 + $0x8] sm:$0x3f] 0.0
        %v4768 = vrot.slane %v4762, 7
        %v4769 = vrot.slane %v4763, 7
        %4772 = vst [vmem:[#allocation3] sm:$0x1e] %v4768
        %4773 = vst [vmem:[#allocation3 + $0x8] sm:$0x1e] %v4769
        %v4774 = vld [vmem:[#allocation3] sm:$0xf]
        %v4775 = vld [vmem:[#allocation3 + $0x8] sm:$0xf]
        %v4776 = vpack.c.bf16 %v4774, %v4774
        %v4777 = vpack.c.bf16 %v4775, %v4775
        %v4778 = vld [vmem:[#allocation5] sm:$0xff]
        %v4779 = vld [vmem:[#allocation5 + $0x8] sm:$0xff]
        %v4780 = vld [vmem:[#allocation5 + $0x10] sm:$0xff]
        %v4781 = vld [vmem:[#allocation5 + $0x18] sm:$0xff]
        %v4782 = vld [vmem:[#allocation5 + $0x20] sm:$0xff]
        %v4783 = vld [vmem:[#allocation5 + $0x28] sm:$0xff]
        %v4784 = vld [vmem:[#allocation5 + $0x30] sm:$0xff]
        %v4785 = vld [vmem:[#allocation5 + $0x38] sm:$0xff]
        %v4786 = vld [vmem:[#allocation5 + $0x40] sm:$0xff]
        %v4787 = vld [vmem:[#allocation5 + $0x48] sm:$0xff]
        %v4788 = vld [vmem:[#allocation5 + $0x50] sm:$0xff]
        %v4789 = vld [vmem:[#allocation5 + $0x58] sm:$0xff]
        %v4790 = vld [vmem:[#allocation5 + $0x60] sm:$0xff]
        %v4791 = vld [vmem:[#allocation5 + $0x68] sm:$0xff]
        %v4792 = vld [vmem:[#allocation5 + $0x70] sm:$0xff]
        %v4793 = vld [vmem:[#allocation5 + $0x78] sm:$0xff]
        %v4794 = vld [vmem:[#allocation5 + $0x80] sm:$0xff]
        %v4795 = vld [vmem:[#allocation5 + $0x88] sm:$0xff]
        %v4796 = vld [vmem:[#allocation5 + $0x90] sm:$0xff]
        %v4797 = vld [vmem:[#allocation5 + $0x98] sm:$0xff]
        %v4798 = vld [vmem:[#allocation5 + $0xa0] sm:$0xff]
        %v4799 = vld [vmem:[#allocation5 + $0xa8] sm:$0xff]
        %v4800 = vld [vmem:[#allocation5 + $0xb0] sm:$0xff]
        %v4801 = vld [vmem:[#allocation5 + $0xb8] sm:$0xff]
        %v4802 = vld [vmem:[#allocation5 + $0xc0] sm:$0xff]
        %v4803 = vld [vmem:[#allocation5 + $0xc8] sm:$0xff]
        %v4804 = vld [vmem:[#allocation5 + $0xd0] sm:$0xff]
        %v4805 = vld [vmem:[#allocation5 + $0xd8] sm:$0xff]
        %v4806 = vld [vmem:[#allocation5 + $0xe0] sm:$0xff]
        %v4807 = vld [vmem:[#allocation5 + $0xe8] sm:$0xff]
        %v4808 = vld [vmem:[#allocation5 + $0xf0] sm:$0xff]
        %v4809 = vld [vmem:[#allocation5 + $0xf8] sm:$0xff]
        %v4810 = vld [vmem:[#allocation3] sm:$0x1e]
        %v4811 = vld [vmem:[#allocation3 + $0x8] sm:$0x1e]
        %v4812 = vpack.c.bf16 %v4810, %v4810
        %v4813 = vpack.c.bf16 %v4811, %v4811
        %s4814 = scalar_lea.vmem [#allocation5], 256
        %v4815 = vld [vmem:[%s4814] sm:$0xff]
        %v4816 = vld [vmem:[%s4814 + $0x8] sm:$0xff]
        %v4817 = vld [vmem:[%s4814 + $0x10] sm:$0xff]
        %v4818 = vld [vmem:[%s4814 + $0x18] sm:$0xff]
        %v4819 = vld [vmem:[%s4814 + $0x20] sm:$0xff]
        %v4820 = vld [vmem:[%s4814 + $0x28] sm:$0xff]
        %v4821 = vld [vmem:[%s4814 + $0x30] sm:$0xff]
        %v4822 = vld [vmem:[%s4814 + $0x38] sm:$0xff]
        %v4823 = vld [vmem:[%s4814 + $0x40] sm:$0xff]
        %v4824 = vld [vmem:[%s4814 + $0x48] sm:$0xff]
        %v4825 = vld [vmem:[%s4814 + $0x50] sm:$0xff]
        %v4826 = vld [vmem:[%s4814 + $0x58] sm:$0xff]
        %v4827 = vld [vmem:[%s4814 + $0x60] sm:$0xff]
        %v4828 = vld [vmem:[%s4814 + $0x68] sm:$0xff]
        %v4829 = vld [vmem:[%s4814 + $0x70] sm:$0xff]
        %v4830 = vld [vmem:[%s4814 + $0x78] sm:$0xff]
        %v4831 = vld [vmem:[%s4814 + $0x80] sm:$0xff]
        %v4832 = vld [vmem:[%s4814 + $0x88] sm:$0xff]
        %v4833 = vld [vmem:[%s4814 + $0x90] sm:$0xff]
        %v4834 = vld [vmem:[%s4814 + $0x98] sm:$0xff]
        %v4835 = vld [vmem:[%s4814 + $0xa0] sm:$0xff]
        %v4836 = vld [vmem:[%s4814 + $0xa8] sm:$0xff]
        %v4837 = vld [vmem:[%s4814 + $0xb0] sm:$0xff]
        %v4838 = vld [vmem:[%s4814 + $0xb8] sm:$0xff]
        %v4839 = vld [vmem:[%s4814 + $0xc0] sm:$0xff]
        %v4840 = vld [vmem:[%s4814 + $0xc8] sm:$0xff]
        %v4841 = vld [vmem:[%s4814 + $0xd0] sm:$0xff]
        %v4842 = vld [vmem:[%s4814 + $0xd8] sm:$0xff]
        %v4843 = vld [vmem:[%s4814 + $0xe0] sm:$0xff]
        %v4844 = vld [vmem:[%s4814 + $0xe8] sm:$0xff]
        %v4845 = vld [vmem:[%s4814 + $0xf0] sm:$0xff]
        %v4846 = vld [vmem:[%s4814 + $0xf8] sm:$0xff]
        %v4848 = vshrl.u32 %v4812, 16
        %v4850 = vshll.u32 %v4812, 16
        %v4852 = vrot.slane %v4850, 1
        %v4853 = vor.u32 %v4848, %v4852
        %v4855 = vshrl.u32 %v4813, 16
        %v4857 = vshll.u32 %v4813, 16
        %v4859 = vrot.slane %v4857, 1
        %v4860 = vor.u32 %v4855, %v4859
        %v4895 = vunpack.c.l.b16 %v4815
        %v4896 = vunpack.c.h.b16 %v4815
        %v4897 = vunpack.c.l.b16 %v4816
        %v4898 = vunpack.c.h.b16 %v4816
        %v4899 = vunpack.c.l.b16 %v4817
        %v4900 = vunpack.c.h.b16 %v4817
        %v4901 = vunpack.c.l.b16 %v4818
        %v4902 = vunpack.c.h.b16 %v4818
        %v4903 = vunpack.c.l.b16 %v4819
        %v4904 = vunpack.c.h.b16 %v4819
        %v4905 = vunpack.c.l.b16 %v4820
        %v4906 = vunpack.c.h.b16 %v4820
        %v4907 = vunpack.c.l.b16 %v4821
        %v4908 = vunpack.c.h.b16 %v4821
        %v4909 = vunpack.c.l.b16 %v4822
        %v4910 = vunpack.c.h.b16 %v4822
        %v4911 = vunpack.c.l.b16 %v4823
        %v4912 = vunpack.c.h.b16 %v4823
        %v4913 = vunpack.c.l.b16 %v4824
        %v4914 = vunpack.c.h.b16 %v4824
        %v4915 = vunpack.c.l.b16 %v4825
        %v4916 = vunpack.c.h.b16 %v4825
        %v4917 = vunpack.c.l.b16 %v4826
        %v4918 = vunpack.c.h.b16 %v4826
        %v4919 = vunpack.c.l.b16 %v4827
        %v4920 = vunpack.c.h.b16 %v4827
        %v4921 = vunpack.c.l.b16 %v4828
        %v4922 = vunpack.c.h.b16 %v4828
        %v4923 = vunpack.c.l.b16 %v4829
        %v4924 = vunpack.c.h.b16 %v4829
        %v4925 = vunpack.c.l.b16 %v4830
        %v4926 = vunpack.c.h.b16 %v4830
        %v4927 = vunpack.c.l.b16 %v4831
        %v4928 = vunpack.c.h.b16 %v4831
        %v4929 = vunpack.c.l.b16 %v4832
        %v4930 = vunpack.c.h.b16 %v4832
        %v4931 = vunpack.c.l.b16 %v4833
        %v4932 = vunpack.c.h.b16 %v4833
        %v4933 = vunpack.c.l.b16 %v4834
        %v4934 = vunpack.c.h.b16 %v4834
        %v4935 = vunpack.c.l.b16 %v4835
        %v4936 = vunpack.c.h.b16 %v4835
        %v4937 = vunpack.c.l.b16 %v4836
        %v4938 = vunpack.c.h.b16 %v4836
        %v4939 = vunpack.c.l.b16 %v4837
        %v4940 = vunpack.c.h.b16 %v4837
        %v4941 = vunpack.c.l.b16 %v4838
        %v4942 = vunpack.c.h.b16 %v4838
        %v4943 = vunpack.c.l.b16 %v4839
        %v4944 = vunpack.c.h.b16 %v4839
        %v4945 = vunpack.c.l.b16 %v4840
        %v4946 = vunpack.c.h.b16 %v4840
        %v4947 = vunpack.c.l.b16 %v4841
        %v4948 = vunpack.c.h.b16 %v4841
        %v4949 = vunpack.c.l.b16 %v4842
        %v4950 = vunpack.c.h.b16 %v4842
        %v4951 = vunpack.c.l.b16 %v4843
        %v4952 = vunpack.c.h.b16 %v4843
        %v4953 = vunpack.c.l.b16 %v4844
        %v4954 = vunpack.c.h.b16 %v4844
        %v4955 = vunpack.c.l.b16 %v4845
        %v4956 = vunpack.c.h.b16 %v4845
        %v4957 = vunpack.c.l.b16 %v4846
        %v4958 = vunpack.c.h.b16 %v4846
        %v4959 = vpack.c.b16 %v4897, %v4895
        %v4960 = vpack.c.b16 %v4898, %v4896
        %v4961 = vpack.c.b16 %v4901, %v4899
        %v4962 = vpack.c.b16 %v4902, %v4900
        %v4963 = vpack.c.b16 %v4905, %v4903
        %v4964 = vpack.c.b16 %v4906, %v4904
        %v4965 = vpack.c.b16 %v4909, %v4907
        %v4966 = vpack.c.b16 %v4910, %v4908
        %v4967 = vpack.c.b16 %v4913, %v4911
        %v4968 = vpack.c.b16 %v4914, %v4912
        %v4969 = vpack.c.b16 %v4917, %v4915
        %v4970 = vpack.c.b16 %v4918, %v4916
        %v4971 = vpack.c.b16 %v4921, %v4919
        %v4972 = vpack.c.b16 %v4922, %v4920
        %v4973 = vpack.c.b16 %v4925, %v4923
        %v4974 = vpack.c.b16 %v4926, %v4924
        %v4975 = vpack.c.b16 %v4929, %v4927
        %v4976 = vpack.c.b16 %v4930, %v4928
        %v4977 = vpack.c.b16 %v4933, %v4931
        %v4978 = vpack.c.b16 %v4934, %v4932
        %v4979 = vpack.c.b16 %v4937, %v4935
        %v4980 = vpack.c.b16 %v4938, %v4936
        %v4981 = vpack.c.b16 %v4941, %v4939
        %v4982 = vpack.c.b16 %v4942, %v4940
        %v4983 = vpack.c.b16 %v4945, %v4943
        %v4984 = vpack.c.b16 %v4946, %v4944
        %v4985 = vpack.c.b16 %v4949, %v4947
        %v4986 = vpack.c.b16 %v4950, %v4948
        %v4987 = vpack.c.b16 %v4953, %v4951
        %v4988 = vpack.c.b16 %v4954, %v4952
        %v4989 = vpack.c.b16 %v4957, %v4955
        %v4990 = vpack.c.b16 %v4958, %v4956
        %5023 = vmatprep.subr.bf16.mxu0 %v4960
        %5024 = vmatpush1.bf16.msra.mxu0 %v4959
        %5025 = vmatprep.subr.bf16.mxu0 %v4962
        %5026 = vmatpush1.bf16.msra.mxu0 %v4961
        %5027 = vmatprep.subr.bf16.mxu0 %v4964
        %5028 = vmatpush1.bf16.msra.mxu0 %v4963
        %5029 = vmatprep.subr.bf16.mxu0 %v4966
        %5030 = vmatpush1.bf16.msra.mxu0 %v4965
        %5031 = vmatprep.subr.bf16.mxu0 %v4968
        %5032 = vmatpush1.bf16.msra.mxu0 %v4967
        %5033 = vmatprep.subr.bf16.mxu0 %v4970
        %5034 = vmatpush1.bf16.msra.mxu0 %v4969
        %5035 = vmatprep.subr.bf16.mxu0 %v4972
        %5036 = vmatpush1.bf16.msra.mxu0 %v4971
        %5037 = vmatprep.subr.bf16.mxu0 %v4974
        %5038 = vmatpush1.bf16.msra.mxu0 %v4973
        %5039 = vmatprep.subr.bf16.mxu0 %v4976
        %5040 = vmatpush1.bf16.msra.mxu0 %v4975
        %5041 = vmatprep.subr.bf16.mxu0 %v4978
        %5042 = vmatpush1.bf16.msra.mxu0 %v4977
        %5043 = vmatprep.subr.bf16.mxu0 %v4980
        %5044 = vmatpush1.bf16.msra.mxu0 %v4979
        %5045 = vmatprep.subr.bf16.mxu0 %v4982
        %5046 = vmatpush1.bf16.msra.mxu0 %v4981
        %5047 = vmatprep.subr.bf16.mxu0 %v4984
        %5048 = vmatpush1.bf16.msra.mxu0 %v4983
        %5049 = vmatprep.subr.bf16.mxu0 %v4986
        %5050 = vmatpush1.bf16.msra.mxu0 %v4985
        %5051 = vmatprep.subr.bf16.mxu0 %v4988
        %5052 = vmatpush1.bf16.msra.mxu0 %v4987
        %5053 = vmatprep.subr.bf16.mxu0 %v4990
        %5054 = vmatpush1.bf16.msra.mxu0 %v4989
        %5055 = vmatprep.mubr.bf16.mxu0 %v4860
        %5056 = vmatmul.mubr.bf16.gmra.mrb[0].mxu0 %v4853
        %v5057 = vpop.f32.mrb[0].mxu0
        %v5058 = vadd.f32 0.0, %v5057
        %v5059 = vpop.f32.mrb[0].mxu0
        %v5060 = vadd.f32 0.0, %v5059
        %v5061 = vpop.f32.mrb[0].mxu0
        %v5062 = vpop.f32.mrb[0].mxu0
        %5063 = vdwg.mxu0
        %v5096 = vunpack.c.l.b16 %v4778
        %v5097 = vunpack.c.h.b16 %v4778
        %v5098 = vunpack.c.l.b16 %v4779
        %v5099 = vunpack.c.h.b16 %v4779
        %v5100 = vunpack.c.l.b16 %v4780
        %v5101 = vunpack.c.h.b16 %v4780
        %v5102 = vunpack.c.l.b16 %v4781
        %v5103 = vunpack.c.h.b16 %v4781
        %v5104 = vunpack.c.l.b16 %v4782
        %v5105 = vunpack.c.h.b16 %v4782
        %v5106 = vunpack.c.l.b16 %v4783
        %v5107 = vunpack.c.h.b16 %v4783
        %v5108 = vunpack.c.l.b16 %v4784
        %v5109 = vunpack.c.h.b16 %v4784
        %v5110 = vunpack.c.l.b16 %v4785
        %v5111 = vunpack.c.h.b16 %v4785
        %v5112 = vunpack.c.l.b16 %v4786
        %v5113 = vunpack.c.h.b16 %v4786
        %v5114 = vunpack.c.l.b16 %v4787
        %v5115 = vunpack.c.h.b16 %v4787
        %v5116 = vunpack.c.l.b16 %v4788
        %v5117 = vunpack.c.h.b16 %v4788
        %v5118 = vunpack.c.l.b16 %v4789
        %v5119 = vunpack.c.h.b16 %v4789
        %v5120 = vunpack.c.l.b16 %v4790
        %v5121 = vunpack.c.h.b16 %v4790
        %v5122 = vunpack.c.l.b16 %v4791
        %v5123 = vunpack.c.h.b16 %v4791
        %v5124 = vunpack.c.l.b16 %v4792
        %v5125 = vunpack.c.h.b16 %v4792
        %v5126 = vunpack.c.l.b16 %v4793
        %v5127 = vunpack.c.h.b16 %v4793
        %v5128 = vunpack.c.l.b16 %v4794
        %v5129 = vunpack.c.h.b16 %v4794
        %v5130 = vunpack.c.l.b16 %v4795
        %v5131 = vunpack.c.h.b16 %v4795
        %v5132 = vunpack.c.l.b16 %v4796
        %v5133 = vunpack.c.h.b16 %v4796
        %v5134 = vunpack.c.l.b16 %v4797
        %v5135 = vunpack.c.h.b16 %v4797
        %v5136 = vunpack.c.l.b16 %v4798
        %v5137 = vunpack.c.h.b16 %v4798
        %v5138 = vunpack.c.l.b16 %v4799
        %v5139 = vunpack.c.h.b16 %v4799
        %v5140 = vunpack.c.l.b16 %v4800
        %v5141 = vunpack.c.h.b16 %v4800
        %v5142 = vunpack.c.l.b16 %v4801
        %v5143 = vunpack.c.h.b16 %v4801
        %v5144 = vunpack.c.l.b16 %v4802
        %v5145 = vunpack.c.h.b16 %v4802
        %v5146 = vunpack.c.l.b16 %v4803
        %v5147 = vunpack.c.h.b16 %v4803
        %v5148 = vunpack.c.l.b16 %v4804
        %v5149 = vunpack.c.h.b16 %v4804
        %v5150 = vunpack.c.l.b16 %v4805
        %v5151 = vunpack.c.h.b16 %v4805
        %v5152 = vunpack.c.l.b16 %v4806
        %v5153 = vunpack.c.h.b16 %v4806
        %v5154 = vunpack.c.l.b16 %v4807
        %v5155 = vunpack.c.h.b16 %v4807
        %v5156 = vunpack.c.l.b16 %v4808
        %v5157 = vunpack.c.h.b16 %v4808
        %v5158 = vunpack.c.l.b16 %v4809
        %v5159 = vunpack.c.h.b16 %v4809
        %v5160 = vpack.c.b16 %v5098, %v5096
        %v5161 = vpack.c.b16 %v5099, %v5097
        %v5162 = vpack.c.b16 %v5102, %v5100
        %v5163 = vpack.c.b16 %v5103, %v5101
        %v5164 = vpack.c.b16 %v5106, %v5104
        %v5165 = vpack.c.b16 %v5107, %v5105
        %v5166 = vpack.c.b16 %v5110, %v5108
        %v5167 = vpack.c.b16 %v5111, %v5109
        %v5168 = vpack.c.b16 %v5114, %v5112
        %v5169 = vpack.c.b16 %v5115, %v5113
        %v5170 = vpack.c.b16 %v5118, %v5116
        %v5171 = vpack.c.b16 %v5119, %v5117
        %v5172 = vpack.c.b16 %v5122, %v5120
        %v5173 = vpack.c.b16 %v5123, %v5121
        %v5174 = vpack.c.b16 %v5126, %v5124
        %v5175 = vpack.c.b16 %v5127, %v5125
        %v5176 = vpack.c.b16 %v5130, %v5128
        %v5177 = vpack.c.b16 %v5131, %v5129
        %v5178 = vpack.c.b16 %v5134, %v5132
        %v5179 = vpack.c.b16 %v5135, %v5133
        %v5180 = vpack.c.b16 %v5138, %v5136
        %v5181 = vpack.c.b16 %v5139, %v5137
        %v5182 = vpack.c.b16 %v5142, %v5140
        %v5183 = vpack.c.b16 %v5143, %v5141
        %v5184 = vpack.c.b16 %v5146, %v5144
        %v5185 = vpack.c.b16 %v5147, %v5145
        %v5186 = vpack.c.b16 %v5150, %v5148
        %v5187 = vpack.c.b16 %v5151, %v5149
        %v5188 = vpack.c.b16 %v5154, %v5152
        %v5189 = vpack.c.b16 %v5155, %v5153
        %v5190 = vpack.c.b16 %v5158, %v5156
        %v5191 = vpack.c.b16 %v5159, %v5157
        %5224 = vmatprep.subr.bf16.mxu0 %v5161
        %5225 = vmatpush1.bf16.msra.mxu0 %v5160
        %5226 = vmatprep.subr.bf16.mxu0 %v5163
        %5227 = vmatpush1.bf16.msra.mxu0 %v5162
        %5228 = vmatprep.subr.bf16.mxu0 %v5165
        %5229 = vmatpush1.bf16.msra.mxu0 %v5164
        %5230 = vmatprep.subr.bf16.mxu0 %v5167
        %5231 = vmatpush1.bf16.msra.mxu0 %v5166
        %5232 = vmatprep.subr.bf16.mxu0 %v5169
        %5233 = vmatpush1.bf16.msra.mxu0 %v5168
        %5234 = vmatprep.subr.bf16.mxu0 %v5171
        %5235 = vmatpush1.bf16.msra.mxu0 %v5170
        %5236 = vmatprep.subr.bf16.mxu0 %v5173
        %5237 = vmatpush1.bf16.msra.mxu0 %v5172
        %5238 = vmatprep.subr.bf16.mxu0 %v5175
        %5239 = vmatpush1.bf16.msra.mxu0 %v5174
        %5240 = vmatprep.subr.bf16.mxu0 %v5177
        %5241 = vmatpush1.bf16.msra.mxu0 %v5176
        %5242 = vmatprep.subr.bf16.mxu0 %v5179
        %5243 = vmatpush1.bf16.msra.mxu0 %v5178
        %5244 = vmatprep.subr.bf16.mxu0 %v5181
        %5245 = vmatpush1.bf16.msra.mxu0 %v5180
        %5246 = vmatprep.subr.bf16.mxu0 %v5183
        %5247 = vmatpush1.bf16.msra.mxu0 %v5182
        %5248 = vmatprep.subr.bf16.mxu0 %v5185
        %5249 = vmatpush1.bf16.msra.mxu0 %v5184
        %5250 = vmatprep.subr.bf16.mxu0 %v5187
        %5251 = vmatpush1.bf16.msra.mxu0 %v5186
        %5252 = vmatprep.subr.bf16.mxu0 %v5189
        %5253 = vmatpush1.bf16.msra.mxu0 %v5188
        %5254 = vmatprep.subr.bf16.mxu0 %v5191
        %5255 = vmatpush1.bf16.msra.mxu0 %v5190
        %5256 = vmatprep.mubr.bf16.mxu0 %v4777
        %5257 = vmatmul.mubr.bf16.gmra.mrb[0].mxu0 %v4776
        %v5258 = vpop.f32.mrb[0].mxu0
        %v5259 = vadd.f32 %v5058, %v5258
        %v5260 = vpop.f32.mrb[0].mxu0
        %v5261 = vadd.f32 %v5060, %v5260
        %v5262 = vpop.f32.mrb[0].mxu0
        %v5263 = vpop.f32.mrb[0].mxu0
        %5264 = vdwg.mxu0
        %v5265 = vld [vmem:[#allocation3] sm:$0x3c]
        %v5266 = vld [vmem:[#allocation3 + $0x8] sm:$0x3c]
        %v5267 = vpack.c.bf16 %v5265, %v5265
        %v5268 = vpack.c.bf16 %v5266, %v5266
        %s5269 = scalar_lea.vmem [#allocation5], 512
        %v5270 = vld [vmem:[%s5269] sm:$0xff]
        %v5271 = vld [vmem:[%s5269 + $0x8] sm:$0xff]
        %v5272 = vld [vmem:[%s5269 + $0x10] sm:$0xff]
        %v5273 = vld [vmem:[%s5269 + $0x18] sm:$0xff]
        %v5274 = vld [vmem:[%s5269 + $0x20] sm:$0xff]
        %v5275 = vld [vmem:[%s5269 + $0x28] sm:$0xff]
        %v5276 = vld [vmem:[%s5269 + $0x30] sm:$0xff]
        %v5277 = vld [vmem:[%s5269 + $0x38] sm:$0xff]
        %v5278 = vld [vmem:[%s5269 + $0x40] sm:$0xff]
        %v5279 = vld [vmem:[%s5269 + $0x48] sm:$0xff]
        %v5280 = vld [vmem:[%s5269 + $0x50] sm:$0xff]
        %v5281 = vld [vmem:[%s5269 + $0x58] sm:$0xff]
        %v5282 = vld [vmem:[%s5269 + $0x60] sm:$0xff]
        %v5283 = vld [vmem:[%s5269 + $0x68] sm:$0xff]
        %v5284 = vld [vmem:[%s5269 + $0x70] sm:$0xff]
        %v5285 = vld [vmem:[%s5269 + $0x78] sm:$0xff]
        %v5286 = vld [vmem:[%s5269 + $0x80] sm:$0xff]
        %v5287 = vld [vmem:[%s5269 + $0x88] sm:$0xff]
        %v5288 = vld [vmem:[%s5269 + $0x90] sm:$0xff]
        %v5289 = vld [vmem:[%s5269 + $0x98] sm:$0xff]
        %v5290 = vld [vmem:[%s5269 + $0xa0] sm:$0xff]
        %v5291 = vld [vmem:[%s5269 + $0xa8] sm:$0xff]
        %v5292 = vld [vmem:[%s5269 + $0xb0] sm:$0xff]
        %v5293 = vld [vmem:[%s5269 + $0xb8] sm:$0xff]
        %v5294 = vld [vmem:[%s5269 + $0xc0] sm:$0xff]
        %v5295 = vld [vmem:[%s5269 + $0xc8] sm:$0xff]
        %v5296 = vld [vmem:[%s5269 + $0xd0] sm:$0xff]
        %v5297 = vld [vmem:[%s5269 + $0xd8] sm:$0xff]
        %v5298 = vld [vmem:[%s5269 + $0xe0] sm:$0xff]
        %v5299 = vld [vmem:[%s5269 + $0xe8] sm:$0xff]
        %v5300 = vld [vmem:[%s5269 + $0xf0] sm:$0xff]
        %v5301 = vld [vmem:[%s5269 + $0xf8] sm:$0xff]
        %v5304 = vrot.slane %v5267, 1
        %v5305 = vrot.slane %v5268, 1
        %v5340 = vunpack.c.l.b16 %v5270
        %v5341 = vunpack.c.h.b16 %v5270
        %v5342 = vunpack.c.l.b16 %v5271
        %v5343 = vunpack.c.h.b16 %v5271
        %v5344 = vunpack.c.l.b16 %v5272
        %v5345 = vunpack.c.h.b16 %v5272
        %v5346 = vunpack.c.l.b16 %v5273
        %v5347 = vunpack.c.h.b16 %v5273
        %v5348 = vunpack.c.l.b16 %v5274
        %v5349 = vunpack.c.h.b16 %v5274
        %v5350 = vunpack.c.l.b16 %v5275
        %v5351 = vunpack.c.h.b16 %v5275
        %v5352 = vunpack.c.l.b16 %v5276
        %v5353 = vunpack.c.h.b16 %v5276
        %v5354 = vunpack.c.l.b16 %v5277
        %v5355 = vunpack.c.h.b16 %v5277
        %v5356 = vunpack.c.l.b16 %v5278
        %v5357 = vunpack.c.h.b16 %v5278
        %v5358 = vunpack.c.l.b16 %v5279
        %v5359 = vunpack.c.h.b16 %v5279
        %v5360 = vunpack.c.l.b16 %v5280
        %v5361 = vunpack.c.h.b16 %v5280
        %v5362 = vunpack.c.l.b16 %v5281
        %v5363 = vunpack.c.h.b16 %v5281
        %v5364 = vunpack.c.l.b16 %v5282
        %v5365 = vunpack.c.h.b16 %v5282
        %v5366 = vunpack.c.l.b16 %v5283
        %v5367 = vunpack.c.h.b16 %v5283
        %v5368 = vunpack.c.l.b16 %v5284
        %v5369 = vunpack.c.h.b16 %v5284
        %v5370 = vunpack.c.l.b16 %v5285
        %v5371 = vunpack.c.h.b16 %v5285
        %v5372 = vunpack.c.l.b16 %v5286
        %v5373 = vunpack.c.h.b16 %v5286
        %v5374 = vunpack.c.l.b16 %v5287
        %v5375 = vunpack.c.h.b16 %v5287
        %v5376 = vunpack.c.l.b16 %v5288
        %v5377 = vunpack.c.h.b16 %v5288
        %v5378 = vunpack.c.l.b16 %v5289
        %v5379 = vunpack.c.h.b16 %v5289
        %v5380 = vunpack.c.l.b16 %v5290
        %v5381 = vunpack.c.h.b16 %v5290
        %v5382 = vunpack.c.l.b16 %v5291
        %v5383 = vunpack.c.h.b16 %v5291
        %v5384 = vunpack.c.l.b16 %v5292
        %v5385 = vunpack.c.h.b16 %v5292
        %v5386 = vunpack.c.l.b16 %v5293
        %v5387 = vunpack.c.h.b16 %v5293
        %v5388 = vunpack.c.l.b16 %v5294
        %v5389 = vunpack.c.h.b16 %v5294
        %v5390 = vunpack.c.l.b16 %v5295
        %v5391 = vunpack.c.h.b16 %v5295
        %v5392 = vunpack.c.l.b16 %v5296
        %v5393 = vunpack.c.h.b16 %v5296
        %v5394 = vunpack.c.l.b16 %v5297
        %v5395 = vunpack.c.h.b16 %v5297
        %v5396 = vunpack.c.l.b16 %v5298
        %v5397 = vunpack.c.h.b16 %v5298
        %v5398 = vunpack.c.l.b16 %v5299
        %v5399 = vunpack.c.h.b16 %v5299
        %v5400 = vunpack.c.l.b16 %v5300
        %v5401 = vunpack.c.h.b16 %v5300
        %v5402 = vunpack.c.l.b16 %v5301
        %v5403 = vunpack.c.h.b16 %v5301
        %v5404 = vpack.c.b16 %v5342, %v5340
        %v5405 = vpack.c.b16 %v5343, %v5341
        %v5406 = vpack.c.b16 %v5346, %v5344
        %v5407 = vpack.c.b16 %v5347, %v5345
        %v5408 = vpack.c.b16 %v5350, %v5348
        %v5409 = vpack.c.b16 %v5351, %v5349
        %v5410 = vpack.c.b16 %v5354, %v5352
        %v5411 = vpack.c.b16 %v5355, %v5353
        %v5412 = vpack.c.b16 %v5358, %v5356
        %v5413 = vpack.c.b16 %v5359, %v5357
        %v5414 = vpack.c.b16 %v5362, %v5360
        %v5415 = vpack.c.b16 %v5363, %v5361
        %v5416 = vpack.c.b16 %v5366, %v5364
        %v5417 = vpack.c.b16 %v5367, %v5365
        %v5418 = vpack.c.b16 %v5370, %v5368
        %v5419 = vpack.c.b16 %v5371, %v5369
        %v5420 = vpack.c.b16 %v5374, %v5372
        %v5421 = vpack.c.b16 %v5375, %v5373
        %v5422 = vpack.c.b16 %v5378, %v5376
        %v5423 = vpack.c.b16 %v5379, %v5377
        %v5424 = vpack.c.b16 %v5382, %v5380
        %v5425 = vpack.c.b16 %v5383, %v5381
        %v5426 = vpack.c.b16 %v5386, %v5384
        %v5427 = vpack.c.b16 %v5387, %v5385
        %v5428 = vpack.c.b16 %v5390, %v5388
        %v5429 = vpack.c.b16 %v5391, %v5389
        %v5430 = vpack.c.b16 %v5394, %v5392
        %v5431 = vpack.c.b16 %v5395, %v5393
        %v5432 = vpack.c.b16 %v5398, %v5396
        %v5433 = vpack.c.b16 %v5399, %v5397
        %v5434 = vpack.c.b16 %v5402, %v5400
        %v5435 = vpack.c.b16 %v5403, %v5401
        %5468 = vmatprep.subr.bf16.mxu0 %v5405
        %5469 = vmatpush1.bf16.msra.mxu0 %v5404
        %5470 = vmatprep.subr.bf16.mxu0 %v5407
        %5471 = vmatpush1.bf16.msra.mxu0 %v5406
        %5472 = vmatprep.subr.bf16.mxu0 %v5409
        %5473 = vmatpush1.bf16.msra.mxu0 %v5408
        %5474 = vmatprep.subr.bf16.mxu0 %v5411
        %5475 = vmatpush1.bf16.msra.mxu0 %v5410
        %5476 = vmatprep.subr.bf16.mxu0 %v5413
        %5477 = vmatpush1.bf16.msra.mxu0 %v5412
        %5478 = vmatprep.subr.bf16.mxu0 %v5415
        %5479 = vmatpush1.bf16.msra.mxu0 %v5414
        %5480 = vmatprep.subr.bf16.mxu0 %v5417
        %5481 = vmatpush1.bf16.msra.mxu0 %v5416
        %5482 = vmatprep.subr.bf16.mxu0 %v5419
        %5483 = vmatpush1.bf16.msra.mxu0 %v5418
        %5484 = vmatprep.subr.bf16.mxu0 %v5421
        %5485 = vmatpush1.bf16.msra.mxu0 %v5420
        %5486 = vmatprep.subr.bf16.mxu0 %v5423
        %5487 = vmatpush1.bf16.msra.mxu0 %v5422
        %5488 = vmatprep.subr.bf16.mxu0 %v5425
        %5489 = vmatpush1.bf16.msra.mxu0 %v5424
        %5490 = vmatprep.subr.bf16.mxu0 %v5427
        %5491 = vmatpush1.bf16.msra.mxu0 %v5426
        %5492 = vmatprep.subr.bf16.mxu0 %v5429
        %5493 = vmatpush1.bf16.msra.mxu0 %v5428
        %5494 = vmatprep.subr.bf16.mxu0 %v5431
        %5495 = vmatpush1.bf16.msra.mxu0 %v5430
        %5496 = vmatprep.subr.bf16.mxu0 %v5433
        %5497 = vmatpush1.bf16.msra.mxu0 %v5432
        %5498 = vmatprep.subr.bf16.mxu0 %v5435
        %5499 = vmatpush1.bf16.msra.mxu0 %v5434
        %5500 = vmatprep.mubr.bf16.mxu0 %v5305
        %5501 = vmatmul.mubr.bf16.gmra.mrb[0].mxu0 %v5304
        %v5502 = vpop.f32.mrb[0].mxu0
        %v5503 = vadd.f32 0.0, %v5502
        %v5504 = vpop.f32.mrb[0].mxu0
        %v5505 = vadd.f32 0.0, %v5504
        %v5506 = vpop.f32.mrb[0].mxu0
        %v5507 = vpop.f32.mrb[0].mxu0
        %5508 = vdwg.mxu0
        %v5509 = vadd.f32 %v5259, %v5503
        %v5510 = vadd.f32 %v5261, %v5505
        %v5511 = vld [vmem:[%s8] sm:$0x3]
        %v5513 = vlaneseq
        %v5514 = vshrl.u32 %v5513, 7
        %v5515 = vsub.s32 0, %v5514
        %v5516 = vrot.slane %v5511, %v5515
        %v5517 = vlaneseq
        %v5518 = vshrl.u32 %v5517, 7
        %v5519 = vsub.s32 1, %v5518
        %v5520 = vrot.slane %v5511, %v5519
        %v5523 = vadd.f32 %v5509, %v5516
        %v5524 = vadd.f32 %v5510, %v5520
        %v5525 = vxor.u32 %v5523, 2147483648
        %v5526 = vxor.u32 %v5524, 2147483648
        %v5527 = vmul.f32 %v5525, 1.442695
        %v5528 = vpow.pop %v5527
        %v5529 = vmul.f32 %v5526, 1.442695
        %v5530 = vpow.pop %v5529
        %v5531 = vadd.f32 %v5528, 1.0
        %v5532 = vadd.f32 %v5530, 1.0
        %v5533 = vrcp.pop %v5531
        %v5534 = vmul.f32 1.0, %v5533
        %v5535 = vrcp.pop %v5532
        %v5536 = vmul.f32 1.0, %v5535
        %v5537 = vmul.f32 %v5523, %v5534
        %v5538 = vmul.f32 %v5524, %v5536
        %v5539 = vadd.f32 %v4501, %v5537
        %v5540 = vadd.f32 %v4502, %v5538
        %5541 = vst [vmem:[#allocation4] sm:$0x1f] 0.0
        %5542 = vst [vmem:[#allocation4 + $0x8] sm:$0x1f] 0.0
        %v5545 = vrot.slane %v5539, 7
        %v5546 = vrot.slane %v5540, 7
        %5549 = vst [vmem:[#allocation4] sm:$0x1e] %v5545
        %5550 = vst [vmem:[#allocation4 + $0x8] sm:$0x1e] %v5546
        %v5551 = vld [vmem:[#allocation4] sm:$0xf]
        %v5552 = vld [vmem:[#allocation4 + $0x8] sm:$0xf]
        %v5553 = vpack.c.bf16 %v5551, %v5551
        %v5554 = vpack.c.bf16 %v5552, %v5552
        %v5555 = vld [vmem:[#allocation7] sm:$0xf]
        %v5556 = vld [vmem:[#allocation7 + $0x4] sm:$0xf]
        %v5557 = vld [vmem:[#allocation7 + $0x8] sm:$0xf]
        %v5558 = vld [vmem:[#allocation7 + $0xc] sm:$0xf]
        %v5559 = vld [vmem:[#allocation7 + $0x10] sm:$0xf]
        %v5560 = vld [vmem:[#allocation7 + $0x14] sm:$0xf]
        %v5561 = vld [vmem:[#allocation7 + $0x18] sm:$0xf]
        %v5562 = vld [vmem:[#allocation7 + $0x1c] sm:$0xf]
        %v5563 = vld [vmem:[#allocation7 + $0x20] sm:$0xf]
        %v5564 = vld [vmem:[#allocation7 + $0x24] sm:$0xf]
        %v5565 = vld [vmem:[#allocation7 + $0x28] sm:$0xf]
        %v5566 = vld [vmem:[#allocation7 + $0x2c] sm:$0xf]
        %v5567 = vld [vmem:[#allocation7 + $0x30] sm:$0xf]
        %v5568 = vld [vmem:[#allocation7 + $0x34] sm:$0xf]
        %v5569 = vld [vmem:[#allocation7 + $0x38] sm:$0xf]
        %v5570 = vld [vmem:[#allocation7 + $0x3c] sm:$0xf]
        %v5571 = vld [vmem:[#allocation7 + $0x40] sm:$0xf]
        %v5572 = vld [vmem:[#allocation7 + $0x44] sm:$0xf]
        %v5573 = vld [vmem:[#allocation7 + $0x48] sm:$0xf]
        %v5574 = vld [vmem:[#allocation7 + $0x4c] sm:$0xf]
        %v5575 = vld [vmem:[#allocation7 + $0x50] sm:$0xf]
        %v5576 = vld [vmem:[#allocation7 + $0x54] sm:$0xf]
        %v5577 = vld [vmem:[#allocation7 + $0x58] sm:$0xf]
        %v5578 = vld [vmem:[#allocation7 + $0x5c] sm:$0xf]
        %v5579 = vld [vmem:[#allocation7 + $0x60] sm:$0xf]
        %v5580 = vld [vmem:[#allocation7 + $0x64] sm:$0xf]
        %v5581 = vld [vmem:[#allocation7 + $0x68] sm:$0xf]
        %v5582 = vld [vmem:[#allocation7 + $0x6c] sm:$0xf]
        %v5583 = vld [vmem:[#allocation7 + $0x70] sm:$0xf]
        %v5584 = vld [vmem:[#allocation7 + $0x74] sm:$0xf]
        %v5585 = vld [vmem:[#allocation7 + $0x78] sm:$0xf]
        %v5586 = vld [vmem:[#allocation7 + $0x7c] sm:$0xf]
        %v5587 = vld [vmem:[#allocation4] sm:$0x1e]
        %v5588 = vld [vmem:[#allocation4 + $0x8] sm:$0x1e]
        %v5589 = vpack.c.bf16 %v5587, %v5587
        %v5590 = vpack.c.bf16 %v5588, %v5588
        %s5591 = scalar_lea.vmem [#allocation7], 128
        %v5592 = vld [vmem:[%s5591] sm:$0xf]
        %v5593 = vld [vmem:[%s5591 + $0x4] sm:$0xf]
        %v5594 = vld [vmem:[%s5591 + $0x8] sm:$0xf]
        %v5595 = vld [vmem:[%s5591 + $0xc] sm:$0xf]
        %v5596 = vld [vmem:[%s5591 + $0x10] sm:$0xf]
        %v5597 = vld [vmem:[%s5591 + $0x14] sm:$0xf]
        %v5598 = vld [vmem:[%s5591 + $0x18] sm:$0xf]
        %v5599 = vld [vmem:[%s5591 + $0x1c] sm:$0xf]
        %v5600 = vld [vmem:[%s5591 + $0x20] sm:$0xf]
        %v5601 = vld [vmem:[%s5591 + $0x24] sm:$0xf]
        %v5602 = vld [vmem:[%s5591 + $0x28] sm:$0xf]
        %v5603 = vld [vmem:[%s5591 + $0x2c] sm:$0xf]
        %v5604 = vld [vmem:[%s5591 + $0x30] sm:$0xf]
        %v5605 = vld [vmem:[%s5591 + $0x34] sm:$0xf]
        %v5606 = vld [vmem:[%s5591 + $0x38] sm:$0xf]
        %v5607 = vld [vmem:[%s5591 + $0x3c] sm:$0xf]
        %v5608 = vld [vmem:[%s5591 + $0x40] sm:$0xf]
        %v5609 = vld [vmem:[%s5591 + $0x44] sm:$0xf]
        %v5610 = vld [vmem:[%s5591 + $0x48] sm:$0xf]
        %v5611 = vld [vmem:[%s5591 + $0x4c] sm:$0xf]
        %v5612 = vld [vmem:[%s5591 + $0x50] sm:$0xf]
        %v5613 = vld [vmem:[%s5591 + $0x54] sm:$0xf]
        %v5614 = vld [vmem:[%s5591 + $0x58] sm:$0xf]
        %v5615 = vld [vmem:[%s5591 + $0x5c] sm:$0xf]
        %v5616 = vld [vmem:[%s5591 + $0x60] sm:$0xf]
        %v5617 = vld [vmem:[%s5591 + $0x64] sm:$0xf]
        %v5618 = vld [vmem:[%s5591 + $0x68] sm:$0xf]
        %v5619 = vld [vmem:[%s5591 + $0x6c] sm:$0xf]
        %v5620 = vld [vmem:[%s5591 + $0x70] sm:$0xf]
        %v5621 = vld [vmem:[%s5591 + $0x74] sm:$0xf]
        %v5622 = vld [vmem:[%s5591 + $0x78] sm:$0xf]
        %v5623 = vld [vmem:[%s5591 + $0x7c] sm:$0xf]
        %v5625 = vshrl.u32 %v5589, 16
        %v5627 = vshll.u32 %v5589, 16
        %v5629 = vrot.slane %v5627, 1
        %v5630 = vor.u32 %v5625, %v5629
        %v5632 = vshrl.u32 %v5590, 16
        %v5634 = vshll.u32 %v5590, 16
        %v5636 = vrot.slane %v5634, 1
        %v5637 = vor.u32 %v5632, %v5636
        %v5672 = vunpack.c.l.b16 %v5592
        %v5673 = vunpack.c.l.b16 %v5593
        %v5674 = vunpack.c.l.b16 %v5594
        %v5675 = vunpack.c.l.b16 %v5595
        %v5676 = vunpack.c.l.b16 %v5596
        %v5677 = vunpack.c.l.b16 %v5597
        %v5678 = vunpack.c.l.b16 %v5598
        %v5679 = vunpack.c.l.b16 %v5599
        %v5680 = vunpack.c.l.b16 %v5600
        %v5681 = vunpack.c.l.b16 %v5601
        %v5682 = vunpack.c.l.b16 %v5602
        %v5683 = vunpack.c.l.b16 %v5603
        %v5684 = vunpack.c.l.b16 %v5604
        %v5685 = vunpack.c.l.b16 %v5605
        %v5686 = vunpack.c.l.b16 %v5606
        %v5687 = vunpack.c.l.b16 %v5607
        %v5688 = vunpack.c.l.b16 %v5608
        %v5689 = vunpack.c.l.b16 %v5609
        %v5690 = vunpack.c.l.b16 %v5610
        %v5691 = vunpack.c.l.b16 %v5611
        %v5692 = vunpack.c.l.b16 %v5612
        %v5693 = vunpack.c.l.b16 %v5613
        %v5694 = vunpack.c.l.b16 %v5614
        %v5695 = vunpack.c.l.b16 %v5615
        %v5696 = vunpack.c.l.b16 %v5616
        %v5697 = vunpack.c.l.b16 %v5617
        %v5698 = vunpack.c.l.b16 %v5618
        %v5699 = vunpack.c.l.b16 %v5619
        %v5700 = vunpack.c.l.b16 %v5620
        %v5701 = vunpack.c.l.b16 %v5621
        %v5702 = vunpack.c.l.b16 %v5622
        %v5703 = vunpack.c.l.b16 %v5623
        %v5704 = vpack.c.b16 %v5673, %v5672
        %v5705 = vpack.c.b16 %v5675, %v5674
        %v5706 = vpack.c.b16 %v5677, %v5676
        %v5707 = vpack.c.b16 %v5679, %v5678
        %v5708 = vpack.c.b16 %v5681, %v5680
        %v5709 = vpack.c.b16 %v5683, %v5682
        %v5710 = vpack.c.b16 %v5685, %v5684
        %v5711 = vpack.c.b16 %v5687, %v5686
        %v5712 = vpack.c.b16 %v5689, %v5688
        %v5713 = vpack.c.b16 %v5691, %v5690
        %v5714 = vpack.c.b16 %v5693, %v5692
        %v5715 = vpack.c.b16 %v5695, %v5694
        %v5716 = vpack.c.b16 %v5697, %v5696
        %v5717 = vpack.c.b16 %v5699, %v5698
        %v5718 = vpack.c.b16 %v5701, %v5700
        %v5719 = vpack.c.b16 %v5703, %v5702
        %5736 = vmatprep.subr.bf16.mxu0 0
        %5737 = vmatpush1.bf16.msra.mxu0 %v5704
        %5738 = vmatprep.subr.bf16.mxu0 0
        %5739 = vmatpush1.bf16.msra.mxu0 %v5705
        %5740 = vmatprep.subr.bf16.mxu0 0
        %5741 = vmatpush1.bf16.msra.mxu0 %v5706
        %5742 = vmatprep.subr.bf16.mxu0 0
        %5743 = vmatpush1.bf16.msra.mxu0 %v5707
        %5744 = vmatprep.subr.bf16.mxu0 0
        %5745 = vmatpush1.bf16.msra.mxu0 %v5708
        %5746 = vmatprep.subr.bf16.mxu0 0
        %5747 = vmatpush1.bf16.msra.mxu0 %v5709
        %5748 = vmatprep.subr.bf16.mxu0 0
        %5749 = vmatpush1.bf16.msra.mxu0 %v5710
        %5750 = vmatprep.subr.bf16.mxu0 0
        %5751 = vmatpush1.bf16.msra.mxu0 %v5711
        %5752 = vmatprep.subr.bf16.mxu0 0
        %5753 = vmatpush1.bf16.msra.mxu0 %v5712
        %5754 = vmatprep.subr.bf16.mxu0 0
        %5755 = vmatpush1.bf16.msra.mxu0 %v5713
        %5756 = vmatprep.subr.bf16.mxu0 0
        %5757 = vmatpush1.bf16.msra.mxu0 %v5714
        %5758 = vmatprep.subr.bf16.mxu0 0
        %5759 = vmatpush1.bf16.msra.mxu0 %v5715
        %5760 = vmatprep.subr.bf16.mxu0 0
        %5761 = vmatpush1.bf16.msra.mxu0 %v5716
        %5762 = vmatprep.subr.bf16.mxu0 0
        %5763 = vmatpush1.bf16.msra.mxu0 %v5717
        %5764 = vmatprep.subr.bf16.mxu0 0
        %5765 = vmatpush1.bf16.msra.mxu0 %v5718
        %5766 = vmatprep.subr.bf16.mxu0 0
        %5767 = vmatpush1.bf16.msra.mxu0 %v5719
        %5768 = vmatprep.mubr.bf16.mxu0 %v5637
        %5769 = vmatmul.mubr.bf16.gmra.mrb[0].mxu0 %v5630
        %v5770 = vpop.f32.mrb[0].mxu0
        %v5771 = vadd.f32 0.0, %v5770
        %v5772 = vpop.f32.mrb[0].mxu0
        %v5773 = vpop.f32.mrb[0].mxu0
        %v5774 = vpop.f32.mrb[0].mxu0
        %5775 = vdwg.mxu0
        %v5808 = vunpack.c.l.b16 %v5555
        %v5809 = vunpack.c.l.b16 %v5556
        %v5810 = vunpack.c.l.b16 %v5557
        %v5811 = vunpack.c.l.b16 %v5558
        %v5812 = vunpack.c.l.b16 %v5559
        %v5813 = vunpack.c.l.b16 %v5560
        %v5814 = vunpack.c.l.b16 %v5561
        %v5815 = vunpack.c.l.b16 %v5562
        %v5816 = vunpack.c.l.b16 %v5563
        %v5817 = vunpack.c.l.b16 %v5564
        %v5818 = vunpack.c.l.b16 %v5565
        %v5819 = vunpack.c.l.b16 %v5566
        %v5820 = vunpack.c.l.b16 %v5567
        %v5821 = vunpack.c.l.b16 %v5568
        %v5822 = vunpack.c.l.b16 %v5569
        %v5823 = vunpack.c.l.b16 %v5570
        %v5824 = vunpack.c.l.b16 %v5571
        %v5825 = vunpack.c.l.b16 %v5572
        %v5826 = vunpack.c.l.b16 %v5573
        %v5827 = vunpack.c.l.b16 %v5574
        %v5828 = vunpack.c.l.b16 %v5575
        %v5829 = vunpack.c.l.b16 %v5576
        %v5830 = vunpack.c.l.b16 %v5577
        %v5831 = vunpack.c.l.b16 %v5578
        %v5832 = vunpack.c.l.b16 %v5579
        %v5833 = vunpack.c.l.b16 %v5580
        %v5834 = vunpack.c.l.b16 %v5581
        %v5835 = vunpack.c.l.b16 %v5582
        %v5836 = vunpack.c.l.b16 %v5583
        %v5837 = vunpack.c.l.b16 %v5584
        %v5838 = vunpack.c.l.b16 %v5585
        %v5839 = vunpack.c.l.b16 %v5586
        %v5840 = vpack.c.b16 %v5809, %v5808
        %v5841 = vpack.c.b16 %v5811, %v5810
        %v5842 = vpack.c.b16 %v5813, %v5812
        %v5843 = vpack.c.b16 %v5815, %v5814
        %v5844 = vpack.c.b16 %v5817, %v5816
        %v5845 = vpack.c.b16 %v5819, %v5818
        %v5846 = vpack.c.b16 %v5821, %v5820
        %v5847 = vpack.c.b16 %v5823, %v5822
        %v5848 = vpack.c.b16 %v5825, %v5824
        %v5849 = vpack.c.b16 %v5827, %v5826
        %v5850 = vpack.c.b16 %v5829, %v5828
        %v5851 = vpack.c.b16 %v5831, %v5830
        %v5852 = vpack.c.b16 %v5833, %v5832
        %v5853 = vpack.c.b16 %v5835, %v5834
        %v5854 = vpack.c.b16 %v5837, %v5836
        %v5855 = vpack.c.b16 %v5839, %v5838
        %5872 = vmatprep.subr.bf16.mxu0 0
        %5873 = vmatpush1.bf16.msra.mxu0 %v5840
        %5874 = vmatprep.subr.bf16.mxu0 0
        %5875 = vmatpush1.bf16.msra.mxu0 %v5841
        %5876 = vmatprep.subr.bf16.mxu0 0
        %5877 = vmatpush1.bf16.msra.mxu0 %v5842
        %5878 = vmatprep.subr.bf16.mxu0 0
        %5879 = vmatpush1.bf16.msra.mxu0 %v5843
        %5880 = vmatprep.subr.bf16.mxu0 0
        %5881 = vmatpush1.bf16.msra.mxu0 %v5844
        %5882 = vmatprep.subr.bf16.mxu0 0
        %5883 = vmatpush1.bf16.msra.mxu0 %v5845
        %5884 = vmatprep.subr.bf16.mxu0 0
        %5885 = vmatpush1.bf16.msra.mxu0 %v5846
        %5886 = vmatprep.subr.bf16.mxu0 0
        %5887 = vmatpush1.bf16.msra.mxu0 %v5847
        %5888 = vmatprep.subr.bf16.mxu0 0
        %5889 = vmatpush1.bf16.msra.mxu0 %v5848
        %5890 = vmatprep.subr.bf16.mxu0 0
        %5891 = vmatpush1.bf16.msra.mxu0 %v5849
        %5892 = vmatprep.subr.bf16.mxu0 0
        %5893 = vmatpush1.bf16.msra.mxu0 %v5850
        %5894 = vmatprep.subr.bf16.mxu0 0
        %5895 = vmatpush1.bf16.msra.mxu0 %v5851
        %5896 = vmatprep.subr.bf16.mxu0 0
        %5897 = vmatpush1.bf16.msra.mxu0 %v5852
        %5898 = vmatprep.subr.bf16.mxu0 0
        %5899 = vmatpush1.bf16.msra.mxu0 %v5853
        %5900 = vmatprep.subr.bf16.mxu0 0
        %5901 = vmatpush1.bf16.msra.mxu0 %v5854
        %5902 = vmatprep.subr.bf16.mxu0 0
        %5903 = vmatpush1.bf16.msra.mxu0 %v5855
        %5904 = vmatprep.mubr.bf16.mxu0 %v5554
        %5905 = vmatmul.mubr.bf16.gmra.mrb[0].mxu0 %v5553
        %v5906 = vpop.f32.mrb[0].mxu0
        %v5907 = vadd.f32 %v5771, %v5906
        %v5908 = vpop.f32.mrb[0].mxu0
        %v5909 = vpop.f32.mrb[0].mxu0
        %v5910 = vpop.f32.mrb[0].mxu0
        %5911 = vdwg.mxu0
        %v5912 = vld [vmem:[%s10] sm:$0x1]
        %v5914 = vlaneseq
        %v5915 = vshrl.u32 %v5914, 7
        %v5916 = vsub.s32 0, %v5915
        %v5917 = vrot.slane %v5912, %v5916
        %v5919 = vadd.f32 %v5907, %v5917
        %v5920 = vxor.u32 %v5919, 2147483648
        %v5921 = vmul.f32 %v5920, 1.442695
        %v5922 = vpow.pop %v5921
        %v5923 = vadd.f32 %v5922, 1.0
        %v5924 = vrcp.pop %v5923
        %v5925 = vmul.f32 1.0, %v5924
        %v5926 = vmul.f32 %v5919, %v5925
        %v5927 = vpack.c.bf16 %v5926, %v5926
        %v5928 = vld [vmem:[%s11] sm:$0xf]
        %v5929 = vld [vmem:[%s11 + $0x4] sm:$0xf]
        %v5930 = vld [vmem:[%s11 + $0x8] sm:$0xf]
        %v5931 = vld [vmem:[%s11 + $0xc] sm:$0xf]
        %v5932 = vld [vmem:[%s11 + $0x10] sm:$0xf]
        %v5933 = vld [vmem:[%s11 + $0x14] sm:$0xf]
        %v5934 = vld [vmem:[%s11 + $0x18] sm:$0xf]
        %v5935 = vld [vmem:[%s11 + $0x1c] sm:$0xf]
        %v5936 = vld [vmem:[%s11 + $0x20] sm:$0xf]
        %v5937 = vld [vmem:[%s11 + $0x24] sm:$0xf]
        %v5938 = vld [vmem:[%s11 + $0x28] sm:$0xf]
        %v5939 = vld [vmem:[%s11 + $0x2c] sm:$0xf]
        %v5940 = vld [vmem:[%s11 + $0x30] sm:$0xf]
        %v5941 = vld [vmem:[%s11 + $0x34] sm:$0xf]
        %v5942 = vld [vmem:[%s11 + $0x38] sm:$0xf]
        %v5943 = vld [vmem:[%s11 + $0x3c] sm:$0xf]
        %v5944 = vld [vmem:[%s12] sm:$0x1]
        %v5946 = vlaneseq
        %v5947 = vshrl.u32 %v5946, 7
        %v5948 = vsub.s32 0, %v5947
        %v5949 = vrot.slane %v5944, %v5948
        %v5967 = vunpack.c.l.b16 %v5928
        %v5968 = vunpack.c.l.b16 %v5929
        %v5969 = vunpack.c.l.b16 %v5930
        %v5970 = vunpack.c.l.b16 %v5931
        %v5971 = vunpack.c.l.b16 %v5932
        %v5972 = vunpack.c.l.b16 %v5933
        %v5973 = vunpack.c.l.b16 %v5934
        %v5974 = vunpack.c.l.b16 %v5935
        %v5975 = vunpack.c.l.b16 %v5936
        %v5976 = vunpack.c.l.b16 %v5937
        %v5977 = vunpack.c.l.b16 %v5938
        %v5978 = vunpack.c.l.b16 %v5939
        %v5979 = vunpack.c.l.b16 %v5940
        %v5980 = vunpack.c.l.b16 %v5941
        %v5981 = vunpack.c.l.b16 %v5942
        %v5982 = vunpack.c.l.b16 %v5943
        %v5983 = vpack.c.b16 %v5968, %v5967
        %v5984 = vpack.c.b16 %v5970, %v5969
        %v5985 = vpack.c.b16 %v5972, %v5971
        %v5986 = vpack.c.b16 %v5974, %v5973
        %v5987 = vpack.c.b16 %v5976, %v5975
        %v5988 = vpack.c.b16 %v5978, %v5977
        %v5989 = vpack.c.b16 %v5980, %v5979
        %v5990 = vpack.c.b16 %v5982, %v5981
        %5999 = vmatprep.subr.bf16.mxu0 0
        %6000 = vmatpush1.bf16.msra.mxu0 %v5983
        %6001 = vmatprep.subr.bf16.mxu0 0
        %6002 = vmatpush1.bf16.msra.mxu0 %v5984
        %6003 = vmatprep.subr.bf16.mxu0 0
        %6004 = vmatpush1.bf16.msra.mxu0 %v5985
        %6005 = vmatprep.subr.bf16.mxu0 0
        %6006 = vmatpush1.bf16.msra.mxu0 %v5986
        %6007 = vmatprep.subr.bf16.mxu0 0
        %6008 = vmatpush1.bf16.msra.mxu0 %v5987
        %6009 = vmatprep.subr.bf16.mxu0 0
        %6010 = vmatpush1.bf16.msra.mxu0 %v5988
        %6011 = vmatprep.subr.bf16.mxu0 0
        %6012 = vmatpush1.bf16.msra.mxu0 %v5989
        %6013 = vmatprep.subr.bf16.mxu0 0
        %6014 = vmatpush1.bf16.msra.mxu0 %v5990
        %6015 = vmatprep.subr.bf16.mxu0 0
        %6016 = vmatpush1.bf16.msra.mxu0 0
        %6017 = vmatprep.subr.bf16.mxu0 0
        %6018 = vmatpush1.bf16.msra.mxu0 0
        %6019 = vmatprep.subr.bf16.mxu0 0
        %6020 = vmatpush1.bf16.msra.mxu0 0
        %6021 = vmatprep.subr.bf16.mxu0 0
        %6022 = vmatpush1.bf16.msra.mxu0 0
        %6023 = vmatprep.subr.bf16.mxu0 0
        %6024 = vmatpush1.bf16.msra.mxu0 0
        %6025 = vmatprep.subr.bf16.mxu0 0
        %6026 = vmatpush1.bf16.msra.mxu0 0
        %6027 = vmatprep.subr.bf16.mxu0 0
        %6028 = vmatpush1.bf16.msra.mxu0 0
        %6029 = vmatprep.subr.bf16.mxu0 0
        %6030 = vmatpush1.bf16.msra.mxu0 0
        %6031 = vmatprep.mubr.bf16.mxu0 0
        %6032 = vmatmul.mubr.bf16.gmra.mrb[0].mxu0 %v5927
        %v6033 = vpop.f32.mrb[0].mxu0
        %v6034 = vadd.f32 %v5949, %v6033
        %v6035 = vpop.f32.mrb[0].mxu0
        %v6036 = vpop.f32.mrb[0].mxu0
        %v6037 = vpop.f32.mrb[0].mxu0
        %6038 = vdwg.mxu0
        %v6039 = vxor.u32 %v6034, 2147483648
        %v6040 = vmul.f32 %v6039, 1.442695
        %v6041 = vpow.pop %v6040
        %v6042 = vadd.f32 %v6041, 1.0
        %v6043 = vrcp.pop %v6042
        %v6044 = vmul.f32 1.0, %v6043
        %v6045 = vmul.f32 %v6044, %v6044
        %v6046 = vld [vmem:[%s13] sm:$0x1]
        %v6048 = vlaneseq
        %v6049 = vshrl.u32 %v6048, 7
        %v6050 = vsub.s32 0, %v6049
        %v6051 = vrot.slane %v6046, %v6050
        %v6053 = vmul.f32 %v6045, %v6051
        %v6054 = vld [vmem:[%s14] sm:$0x1]
        %v6056 = vlaneseq
        %v6057 = vshrl.u32 %v6056, 7
        %v6058 = vsub.s32 0, %v6057
        %v6059 = vrot.slane %v6054, %v6058
        %v6061 = vmul.f32 %v6044, %v6059
        %v6062 = vadd.f32 %v6053, %v6061
        %v6063 = vld [vmem:[%s15] sm:$0xf]
        %v6064 = vadd.f32 %v6062, %v6063
        %6065 = vst [vmem:[%s549] sm:$0xf] %v6064
        %p6066 = scmp.lt.s32.totalorder %s29, 1
        %s6067 = scalar_select %p6066, %s29, 1
        %s6068 = smul.addr %s6067, 4
        %s6069 = scalar_lea.vmem %s16, %s6068
        // Predicated region
        $region93: #{yolov5_forward.1} parent=83 // pred_check
          %p6070 = pneg %p388
        $region94: #{yolov5_forward.1} parent=83 // pred_check_branch
          %6072 = sbr.rel (%p6070) target = $region96
        $region95: #{yolov5_forward.1} parent=83 // pred_region
          _
        $region96: #{yolov5_forward.1} parent=83 // pred_fallthru
          _
      $region84: #{yolov5_forward.1} parent=5 // pred_fallthru
        _
      %p6073 = scmp.le.s32.totalorder 2, %s24
      // Predicated region
      $region97: #{yolov5_forward.1} parent=5 // pred_check
        %p6074 = pneg %p6073
      $region98: #{yolov5_forward.1} parent=5 // pred_check_branch
        %6076 = sbr.rel (%p6074) target = $region100
      $region99: #{yolov5_forward.1} parent=5 // pred_region
        %s6077 = ssub.s32 %s24, 2
        // Predicated region
        $region101: #{yolov5_forward.1} parent=99 // pred_check
          %p6078 = pneg %p394
        $region102: #{yolov5_forward.1} parent=99 // pred_check_branch
          %6080 = sbr.rel (%p6078) target = $region104
        $region103: #{yolov5_forward.1} parent=99 // pred_region
          %p6081 = scmp.lt.s32.totalorder %s30, 1
          %s6082 = scalar_select %p6081, %s30, 1
          %s6083 = smul.addr %s6082, 4
          %s6084 = scalar_lea.vmem %s16, %s6083
        $region104: #{yolov5_forward.1} parent=99 // pred_fallthru
          _
      $region100: #{yolov5_forward.1} parent=5 // pred_fallthru
        _
    $region6: #{yolov5_forward.1} parent=1 // loop_footer
      %s28 = sadd.s32 1, %s24
    $region7: #{yolov5_forward.1} parent=1 // loop_footer_branch
      %23 = sbr.rel target = $region3
    $region8: #{yolov5_forward.1} parent=1 // loop_exit
      _
    %6085 = vsyncpa [#allocation6], 1
    %s6086 = scalar_lea.sflag [#allocation6], 1
    %6087 = vsyncpa %s6086, 1
    %6088 = vsyncpa [#allocation8], 1

</llo_original>
